<compile_context>
chip_gen: v6e
topology: v6e:2x2x1
jax: 0.10.0
libtpu: 0.0.40
codegen_flags: <defaults>
</compile_context>

<pallas_src>
import functools

import jax
import jax.numpy as jnp
import numpy as np
from jax.experimental import pallas as pl
from jax.experimental.pallas import tpu as pltpu

_EPS = 1e-5
_VMEM_LIMIT = 40 * 1024 * 1024   # comfortably under v7x's 64 MiB physical VMEM


def _round_up(x, m):
    return (x + m - 1) // m * m


def _pick_tile_s(s_pad, cap_lanes):
    """Largest multiple of 128 that divides s_pad and is <= cap_lanes."""
    cap = max(128, min(s_pad, (cap_lanes // 128) * 128))
    t = cap
    while t >= 128:
        if s_pad % t == 0:
            return t
        t -= 128
    return 128           # s_pad is always a multiple of 128 -> never reached


# ----------------------------------------------------------------------------
# Kernel A: no-InstanceNorm block.  Output is tiled along S (writeback of
# tile j overlaps DMA of tile j+1); both grid axes are "parallel".
# ----------------------------------------------------------------------------
def _conv_tile_kernel(p_ref, w_ref, b_ref, o_ref, *, activation):
    # p_ref: (1, K, TS) bf16   w_ref: (Cout, K) bf16   b_ref: (Cout, 1) f32
    # o_ref: (1, Cout, TS)
    acc = jnp.dot(w_ref[...], p_ref[0],
                  preferred_element_type=jnp.float32) + b_ref[...]
    if activation:
        acc = jnp.where(acc >= 0, acc, 0.2 * acc)          # LeakyReLU(0.2)
    o_ref[0] = acc.astype(o_ref.dtype)


# ----------------------------------------------------------------------------
# Kernel B: InstanceNorm block.  (1, Cout, S) output block stays VMEM-resident
# across S tiles; f32 sum / sumsq accumulated online in (Cout,1) scratch;
# finalize applies the affine transform + LeakyReLU in lane chunks.
# ----------------------------------------------------------------------------
def _conv_norm_kernel(p_ref, w_ref, b_ref, o_ref, sum_ref, ssq_ref, *,
                      activation, num_s_tiles, tile_s, s_valid, s_pad,
                      epi_chunk):
    s_idx = pl.program_id(1)
    acc = jnp.dot(w_ref[...], p_ref[0],
                  preferred_element_type=jnp.float32) + b_ref[...]  # (Cout, TS) f32

    # Mask padded columns out of the statistics (only possible on last tile).
    if s_pad != s_valid:
        col = jax.lax.broadcasted_iota(jnp.int32, acc.shape, 1) + s_idx * tile_s
        acc_m = jnp.where(col < s_valid, acc, 0.0)
    else:
        acc_m = acc

    def finalize_from(mean, var, y):
        y = (y - mean) * jax.lax.rsqrt(var + _EPS)
        if activation:
            y = jnp.where(y >= 0, y, 0.2 * y)
        return y

    if num_s_tiles == 1:
        # Whole S resident in the f32 accumulator: normalize it directly.
        mean = jnp.sum(acc_m, axis=1, keepdims=True) / s_valid
        var = jnp.maximum(
            jnp.sum(acc_m * acc_m, axis=1, keepdims=True) / s_valid - mean * mean,
            0.0)
        o_ref[0] = finalize_from(mean, var, acc).astype(o_ref.dtype)
        return

    @pl.when(s_idx == 0)
    def _():
        sum_ref[...] = jnp.zeros_like(sum_ref)
        ssq_ref[...] = jnp.zeros_like(ssq_ref)

    # Online f32 statistics (computed pre-bf16-cast).
    sum_ref[...] += jnp.sum(acc_m, axis=1, keepdims=True)
    ssq_ref[...] += jnp.sum(acc_m * acc_m, axis=1, keepdims=True)

    start = pl.multiple_of(s_idx * tile_s, 128)
    o_ref[0, :, pl.ds(start, tile_s)] = acc.astype(o_ref.dtype)

    @pl.when(s_idx == num_s_tiles - 1)
    def _():
        mean = sum_ref[...] / s_valid
        var = jnp.maximum(ssq_ref[...] / s_valid - mean * mean, 0.0)
        scale = jax.lax.rsqrt(var + _EPS)
        # Elementwise epilogue in lane chunks -> bounded f32 working set.
        for c0 in range(0, s_pad, epi_chunk):
            y = o_ref[0, :, pl.ds(c0, epi_chunk)].astype(jnp.float32)
            y = (y - mean) * scale
            if activation:
                y = jnp.where(y >= 0, y, 0.2 * y)
            o_ref[0, :, pl.ds(c0, epi_chunk)] = y.astype(o_ref.dtype)


# ----------------------------------------------------------------------------
# Kernel C: small-S block (S < 128).  Whole batch folded onto the lane axis:
# patches (K, N*S) -> one lane-dense GEMM; per-sample InstanceNorm via lane
# masks on the f32 accumulator; single grid step.
# ----------------------------------------------------------------------------
def _conv_batched_kernel(p_ref, w_ref, b_ref, o_ref, *,
                         normalize, activation, n, s):
    acc = jnp.dot(w_ref[...], p_ref[...],
                  preferred_element_type=jnp.float32) + b_ref[...]   # (Cout, Lp)
    if normalize:
        col = jax.lax.broadcasted_iota(jnp.int32, acc.shape, 1)
        y = acc
        for i in range(n):                      # static, tiny batch loop
            m = jnp.logical_and(col >= i * s, col < (i + 1) * s)
            xi = jnp.where(m, acc, 0.0)
            mean = jnp.sum(xi, axis=1, keepdims=True) / s
            var = jnp.maximum(
                jnp.sum(xi * xi, axis=1, keepdims=True) / s - mean * mean, 0.0)
            y = jnp.where(m, (acc - mean) * jax.lax.rsqrt(var + _EPS), y)
        acc = y
    if activation:
        acc = jnp.where(acc >= 0, acc, 0.2 * acc)
    o_ref[...] = acc.astype(o_ref.dtype)


# ----------------------------------------------------------------------------
# im2col for 3-D conv, channel-major, K = Cin*k^3 ordered (ci, kd, kh, kw)
# to match torch's weight.reshape(Cout, -1).  Pure data movement in XLA.
# TODO(synk): move this gather in-kernel (see header) to avoid the 8x
#             HBM inflation of the stride-2 k=4 blocks.
# ----------------------------------------------------------------------------
def _im2col_cmajor(x, k, stride, padding):
    n, c, d, h, w = x.shape
    xp = jnp.pad(x, ((0, 0), (0, 0), (padding,) * 2, (padding,) * 2, (padding,) * 2))
    do = (d + 2 * padding - k) // stride + 1
    ho = (h + 2 * padding - k) // stride + 1
    wo = (w + 2 * padding - k) // stride + 1
    slabs = []
    for kd in range(k):
        for kh in range(k):
            for kw in range(k):
                slabs.append(
                    xp[:, :,
                       kd:kd + (do - 1) * stride + 1:stride,
                       kh:kh + (ho - 1) * stride + 1:stride,
                       kw:kw + (wo - 1) * stride + 1:stride])
    p = jnp.stack(slabs, axis=2)                     # (N, C, k^3, Do, Ho, Wo)
    return p.reshape(n, c * k ** 3, do * ho * wo), (do, ho, wo)


# ----------------------------------------------------------------------------
# One discriminator block = Conv3d [+ InstanceNorm3d] [+ LeakyReLU]
# ----------------------------------------------------------------------------
def conv_block_pallas(x, w, b, *, stride, padding, normalize, activation,
                      out_dtype=jnp.bfloat16,
                      vmem_budget_bytes=16 * 1024 * 1024):
    n = x.shape[0]
    cout, cin, k, _, _ = w.shape
    patches, (do, ho, wo) = _im2col_cmajor(x.astype(jnp.bfloat16), k, stride, padding)
    s = do * ho * wo
    kk = cin * k ** 3
    w2 = w.reshape(cout, kk).astype(jnp.bfloat16)    # lane-dense (Cout, K)
    b2 = b.reshape(cout, 1).astype(jnp.float32)
    out_bytes = jnp.dtype(out_dtype).itemsize
    cparams = dict(vmem_limit_bytes=_VMEM_LIMIT)

    # --------- small-S path: fold (N, S) onto the lane axis ----------------
    if s < 128:
        l = n * s
        lp = max(128, _round_up(l, 128))
        pt = patches.transpose(1, 0, 2).reshape(kk, l)          # (K, N*S)
        if lp != l:
            pt = jnp.pad(pt, ((0, 0), (0, lp - l)))
        kernel = functools.partial(_conv_batched_kernel, normalize=normalize,
                                   activation=activation, n=n, s=s)
        out = pl.pallas_call(
            kernel,
            out_shape=jax.ShapeDtypeStruct((cout, lp), out_dtype),
            grid=(1,),
            in_specs=[pl.BlockSpec((kk, lp), lambda i: (0, 0)),
                      pl.BlockSpec((cout, kk), lambda i: (0, 0)),
                      pl.BlockSpec((cout, 1), lambda i: (0, 0))],
            out_specs=pl.BlockSpec((cout, lp), lambda i: (0, 0)),
            compiler_params=pltpu.CompilerParams(
                dimension_semantics=("arbitrary",), **cparams),
        )(pt, w2, b2)
        out = out[:, :l].reshape(cout, n, s).transpose(1, 0, 2)  # (N, Cout, S)
        return out.reshape(n, cout, do, ho, wo)

    # --------- per-sample path (S >= 128) -----------------------------------
    s_pad = _round_up(s, 128)
    if s_pad != s:
        patches = jnp.pad(patches, ((0, 0), (0, 0), (0, s_pad - s)))

    # VMEM budget -> tile_s:  2x double-buffered bf16 input tile
    #                       + f32 accumulator
    #                       + (non-normalized only) double-buffered output tile.
    per_lane = 2 * kk * 2 + cout * 4 + (0 if normalize else 2 * cout * out_bytes)
    resident = cout * s_pad * out_bytes if normalize else 0
    cap_lanes = max(128, (vmem_budget_bytes - resident) // per_lane)
    cap_lanes = min(cap_lanes, 8192)
    tile_s = _pick_tile_s(s_pad, cap_lanes)
    num_s_tiles = s_pad // tile_s

    in_specs = [
        pl.BlockSpec((1, kk, tile_s), lambda i, j: (i, 0, j)),
        pl.BlockSpec((cout, kk), lambda i, j: (0, 0)),
        pl.BlockSpec((cout, 1), lambda i, j: (0, 0)),
    ]

    if not normalize:
        kernel = functools.partial(_conv_tile_kernel, activation=activation)
        out = pl.pallas_call(
            kernel,
            out_shape=jax.ShapeDtypeStruct((n, cout, s_pad), out_dtype),
            grid=(n, num_s_tiles),
            in_specs=in_specs,
            out_specs=pl.BlockSpec((1, cout, tile_s), lambda i, j: (i, 0, j)),
            compiler_params=pltpu.CompilerParams(
                dimension_semantics=("parallel", "parallel"), **cparams),
        )(patches, w2, b2)
    else:
        epi_chunk = next(c for c in (1024, 512, 256, 128) if s_pad % c == 0)
        kernel = functools.partial(
            _conv_norm_kernel, activation=activation,
            num_s_tiles=num_s_tiles, tile_s=tile_s,
            s_valid=s, s_pad=s_pad, epi_chunk=epi_chunk)
        out = pl.pallas_call(
            kernel,
            out_shape=jax.ShapeDtypeStruct((n, cout, s_pad), out_dtype),
            grid=(n, num_s_tiles),
            in_specs=in_specs,
            out_specs=pl.BlockSpec((1, cout, s_pad), lambda i, j: (i, 0, 0)),
            scratch_shapes=[pltpu.VMEM((cout, 1), jnp.float32),
                            pltpu.VMEM((cout, 1), jnp.float32)],
            compiler_params=pltpu.CompilerParams(
                # InstanceNorm stats are per-sample, so only N is parallel here
                # (documented limitation for v7x when N == 1).
                dimension_semantics=("parallel", "arbitrary"), **cparams),
        )(patches, w2, b2)

    if s_pad != s:
        out = out[:, :, :s]
    return out.reshape(n, cout, do, ho, wo)


# ----------------------------------------------------------------------------
# Full Discriminator forward (input / output in PyTorch NCDHW layout)
# ----------------------------------------------------------------------------
def discriminator_forward(img_ncdhw, params, *, vmem_budget_bytes=16 * 1024 * 1024):
    (w1, b1), (w2, b2), (w3, b3), (w4, b4), (w5, b5) = params
    blk = functools.partial(conv_block_pallas, vmem_budget_bytes=vmem_budget_bytes)
    x = img_ncdhw                                    # already channel-major
    x = blk(x, w1, b1, stride=2, padding=1, normalize=False, activation=True)
    x = blk(x, w2, b2, stride=2, padding=1, normalize=True, activation=True)
    x = blk(x, w3, b3, stride=2, padding=1, normalize=True, activation=True)
    x = blk(x, w4, b4, stride=2, padding=1, normalize=True, activation=True)
    x = blk(x, w5, b5, stride=1, padding=1, normalize=False, activation=False,
            out_dtype=jnp.float32)
    return x                                         # NCDHW


# ----------------------------------------------------------------------------
# Deterministic parameter construction (PyTorch default conv init shapes)
# ----------------------------------------------------------------------------
def make_conv_params(key, cin, cout, k):
    kw, kb = jax.random.split(key)
    fan_in = cin * k ** 3
    bound = 1.0 / np.sqrt(fan_in)
    w = jax.random.uniform(kw, (cout, cin, k, k, k), jnp.float32, -bound, bound)
    b = jax.random.uniform(kb, (cout,), jnp.float32, -bound, bound)
    return w, b


# ----------------------------------------------------------------------------
# Pure-JAX f32 reference (for correctness check)
# ----------------------------------------------------------------------------
def _ref_conv(x, w, b, stride, padding):
    y = jax.lax.conv_general_dilated(
        x, w, (stride,) * 3, [(padding, padding)] * 3,
        dimension_numbers=("NCDHW", "OIDHW", "NCDHW"))
    return y + b.reshape(1, -1, 1, 1, 1)


def _ref_inorm(x):
    mean = jnp.mean(x, axis=(2, 3, 4), keepdims=True)
    var = jnp.mean(jnp.square(x - mean), axis=(2, 3, 4), keepdims=True)
    return (x - mean) * jax.lax.rsqrt(var + _EPS)


def _ref_lrelu(x):
    return jnp.where(x >= 0, x, 0.2 * x)


def discriminator_forward_ref(img_ncdhw, params):
    (w1, b1), (w2, b2), (w3, b3), (w4, b4), (w5, b5) = params
    x = img_ncdhw
    x = _ref_lrelu(_ref_conv(x, w1, b1, 2, 1))
    x = _ref_lrelu(_ref_inorm(_ref_conv(x, w2, b2, 2, 1)))
    x = _ref_lrelu(_ref_inorm(_ref_conv(x, w3, b3, 2, 1)))
    x = _ref_lrelu(_ref_inorm(_ref_conv(x, w4, b4, 2, 1)))
    x = _ref_conv(x, w5, b5, 1, 1)
    return x


if __name__ == "__main__":
    # 4 stride-2 blocks -> spatial must be >= 32 so InstanceNorm stays defined.
    N, C, D, H, W = 2, 2, 32, 32, 32
    dim = 4

    key = jax.random.PRNGKey(0)
    k_img, k1, k2, k3, k4, k5 = jax.random.split(key, 6)
    img = jax.random.normal(k_img, (N, C, D, H, W), jnp.float32)   # NCDHW

    params = (
        make_conv_params(k1, C, dim, 4),            # block 1 (no norm)
        make_conv_params(k2, dim, dim * 2, 4),      # block 2
        make_conv_params(k3, dim * 2, dim * 4, 4),  # block 3
        make_conv_params(k4, dim * 4, dim * 8, 4),  # block 4
        make_conv_params(k5, dim * 8, 1, 3),        # final 3x3x3 conv
    )

    fwd = jax.jit(discriminator_forward, static_argnames=("vmem_budget_bytes",))

    # Default (large) tiles: single-S-tile fast paths.
    out = jax.block_until_ready(fwd(img, params))
    # Tiny VMEM budget: exercises tiled non-norm output + online-stat
    # multi-S-tile InstanceNorm path (numerics must match the fast path).
    out_tiled = jax.block_until_ready(fwd(img, params,
                                          vmem_budget_bytes=256 * 1024))

    ref = jax.block_until_ready(discriminator_forward_ref(img, params))
    assert out.shape == (N, 1, D // 16, H // 16, W // 16), out.shape
    assert out_tiled.shape == out.shape, out_tiled.shape
    # bf16 MXU operands with f32 accumulation -> loosened tolerance vs f32 ref.
    np.testing.assert_allclose(np.asarray(out), np.asarray(ref),
                               rtol=3e-2, atol=3e-2)
    np.testing.assert_allclose(np.asarray(out_tiled), np.asarray(ref),
                               rtol=3e-2, atol=3e-2)

    print("KERNEL_OK")
</pallas_src>

<mosaic_0001>
module attributes {stable_mosaic.version = 11 : i64} {
  func.func @_conv_tile_kernel(%arg0: i32, %arg1: i32, %arg2: memref<1x128x4096xbf16, #tpu.memory_space<vmem>>, %arg3: memref<4x128xbf16, #tpu.memory_space<vmem>>, %arg4: memref<4x1xf32, #tpu.memory_space<vmem>>, %arg5: memref<1x4x4096xbf16, #tpu.memory_space<vmem>>) attributes {dimension_semantics = [#tpu.dimension_semantics<parallel>, #tpu.dimension_semantics<parallel>], iteration_bounds = array<i64: 2, 1>, scalar_prefetch = 0 : i64, scratch_operands = 0 : i64, tpu.core_type = #tpu.core_type<tc>, window_params = [{transform_indices = @transform_0, window_bounds = array<i64: 1, 128, 4096>}, {pipeline_mode = #tpu.pipeline_mode<synchronous>, transform_indices = @transform_1, window_bounds = array<i64: 4, 128>}, {pipeline_mode = #tpu.pipeline_mode<synchronous>, transform_indices = @transform_2, window_bounds = array<i64: 4, 1>}, {transform_indices = @transform_3, window_bounds = array<i64: 1, 4, 4096>}]} {
    %c0 = arith.constant 0 : index
    %c0_0 = arith.constant 0 : index
    %0 = vector.load %arg3[%c0, %c0_0] : memref<4x128xbf16, #tpu.memory_space<vmem>>, vector<4x128xbf16>
    %c0_1 = arith.constant 0 : index
    %c0_2 = arith.constant 0 : index
    %c0_3 = arith.constant 0 : index
    %1 = vector.load %arg2[%c0_1, %c0_2, %c0_3] : memref<1x128x4096xbf16, #tpu.memory_space<vmem>>, vector<1x128x4096xbf16>
    %2 = vector.shape_cast %1 : vector<1x128x4096xbf16> to vector<128x4096xbf16>
    %cst = arith.constant dense<0.000000e+00> : vector<4x4096xf32>
    %3 = tpu.matmul %0, %2, %cst {dimension_numbers = #tpu.dot_dimension_numbers<[1], [0], [0], [1], [0, 0, 1, 1], [], []>} : vector<4x128xbf16>, vector<128x4096xbf16>, vector<4x4096xf32> -> vector<4x4096xf32>
    %c0_4 = arith.constant 0 : index
    %c0_5 = arith.constant 0 : index
    %4 = vector.load %arg4[%c0_4, %c0_5] : memref<4x1xf32, #tpu.memory_space<vmem>>, vector<4x1xf32>
    %5 = vector.broadcast %4 : vector<4x1xf32> to vector<4x4096xf32>
    %6 = arith.addf %3, %5 : vector<4x4096xf32>
    %cst_6 = arith.constant 0.000000e+00 : f32
    %7 = vector.broadcast %cst_6 : f32 to vector<4x4096xf32>
    %8 = arith.cmpf oge, %6, %7 : vector<4x4096xf32>
    %cst_7 = arith.constant 2.000000e-01 : f32
    %9 = vector.broadcast %cst_7 : f32 to vector<4x4096xf32>
    %10 = arith.mulf %9, %6 : vector<4x4096xf32>
    %11 = arith.select %8, %6, %10 : vector<4x4096xi1>, vector<4x4096xf32>
    %12 = arith.truncf %11 : vector<4x4096xf32> to vector<4x4096xbf16>
    %c0_8 = arith.constant 0 : index
    %c0_9 = arith.constant 0 : index
    %c0_10 = arith.constant 0 : index
    %13 = vector.load %arg5[%c0_8, %c0_9, %c0_10] : memref<1x4x4096xbf16, #tpu.memory_space<vmem>>, vector<1x4x4096xbf16>
    %14 = vector.shape_cast %13 : vector<1x4x4096xbf16> to vector<4x4096xbf16>
    %15 = vector.shape_cast %12 : vector<4x4096xbf16> to vector<1x4x4096xbf16>
    tpu.vector_store %arg5[%c0_8, %c0_9, %c0_10], %15 {strides = array<i32>} : memref<1x4x4096xbf16, #tpu.memory_space<vmem>>, vector<1x4x4096xbf16>,
    return
  }
  func.func @transform_0(%arg0: i32, %arg1: i32) -> (i32, i32, i32) {
    %c0_i32 = arith.constant 0 : i32
    %c0_i32_0 = arith.constant 0 : i32
    return %arg0, %c0_i32, %arg1 : i32, i32, i32
  }
  func.func @transform_1(%arg0: i32, %arg1: i32) -> (i32, i32) {
    %c0_i32 = arith.constant 0 : i32
    %c0_i32_0 = arith.constant 0 : i32
    %c0_i32_1 = arith.constant 0 : i32
    return %c0_i32, %c0_i32_0 : i32, i32
  }
  func.func @transform_2(%arg0: i32, %arg1: i32) -> (i32, i32) {
    %c0_i32 = arith.constant 0 : i32
    %c0_i32_0 = arith.constant 0 : i32
    %c0_i32_1 = arith.constant 0 : i32
    return %c0_i32, %c0_i32_0 : i32, i32
  }
  func.func @transform_3(%arg0: i32, %arg1: i32) -> (i32, i32, i32) {
    %c0_i32 = arith.constant 0 : i32
    %c0_i32_0 = arith.constant 0 : i32
    return %arg0, %c0_i32, %arg1 : i32, i32, i32
  }
}

module attributes {stable_mosaic.version = 11 : i64} {
  func.func @_conv_norm_kernel(%arg0: i32, %arg1: i32, %arg2: memref<1x256x512xbf16, #tpu.memory_space<vmem>>, %arg3: memref<8x256xbf16, #tpu.memory_space<vmem>>, %arg4: memref<8x1xf32, #tpu.memory_space<vmem>>, %arg5: memref<1x8x512xbf16, #tpu.memory_space<vmem>>, %arg6: memref<8x1xf32, #tpu.memory_space<vmem>>, %arg7: memref<8x1xf32, #tpu.memory_space<vmem>>) attributes {dimension_semantics = [#tpu.dimension_semantics<parallel>, #tpu.dimension_semantics<arbitrary>], iteration_bounds = array<i64: 2, 1>, scalar_prefetch = 0 : i64, scratch_operands = 2 : i64, tpu.core_type = #tpu.core_type<tc>, window_params = [{transform_indices = @transform_0, window_bounds = array<i64: 1, 256, 512>}, {pipeline_mode = #tpu.pipeline_mode<synchronous>, transform_indices = @transform_1, window_bounds = array<i64: 8, 256>}, {pipeline_mode = #tpu.pipeline_mode<synchronous>, transform_indices = @transform_2, window_bounds = array<i64: 8, 1>}, {transform_indices = @transform_3, window_bounds = array<i64: 1, 8, 512>}]} {
    %c0 = arith.constant 0 : index
    %c0_0 = arith.constant 0 : index
    %0 = vector.load %arg3[%c0, %c0_0] : memref<8x256xbf16, #tpu.memory_space<vmem>>, vector<8x256xbf16>
    %c0_1 = arith.constant 0 : index
    %c0_2 = arith.constant 0 : index
    %c0_3 = arith.constant 0 : index
    %1 = vector.load %arg2[%c0_1, %c0_2, %c0_3] : memref<1x256x512xbf16, #tpu.memory_space<vmem>>, vector<1x256x512xbf16>
    %2 = vector.shape_cast %1 : vector<1x256x512xbf16> to vector<256x512xbf16>
    %cst = arith.constant dense<0.000000e+00> : vector<8x512xf32>
    %3 = tpu.matmul %0, %2, %cst {dimension_numbers = #tpu.dot_dimension_numbers<[1], [0], [0], [1], [0, 0, 1, 1], [], []>} : vector<8x256xbf16>, vector<256x512xbf16>, vector<8x512xf32> -> vector<8x512xf32>
    %c0_4 = arith.constant 0 : index
    %c0_5 = arith.constant 0 : index
    %4 = vector.load %arg4[%c0_4, %c0_5] : memref<8x1xf32, #tpu.memory_space<vmem>>, vector<8x1xf32>
    %5 = vector.broadcast %4 : vector<8x1xf32> to vector<8x512xf32>
    %6 = arith.addf %3, %5 : vector<8x512xf32>
    %cst_6 = arith.constant dense<0.000000e+00> : vector<8xf32>
    %7 = vector.multi_reduction <add>, %6, %cst_6 [1] : vector<8x512xf32> to vector<8xf32>
    %8 = vector.shape_cast %7 : vector<8xf32> to vector<8x1xf32>
    %cst_7 = arith.constant 5.120000e+02 : f32
    %9 = vector.broadcast %cst_7 : f32 to vector<8x1xf32>
    %10 = arith.divf %8, %9 : vector<8x1xf32>
    %11 = arith.mulf %6, %6 : vector<8x512xf32>
    %cst_8 = arith.constant dense<0.000000e+00> : vector<8xf32>
    %12 = vector.multi_reduction <add>, %11, %cst_8 [1] : vector<8x512xf32> to vector<8xf32>
    %13 = vector.shape_cast %12 : vector<8xf32> to vector<8x1xf32>
    %cst_9 = arith.constant 5.120000e+02 : f32
    %14 = vector.broadcast %cst_9 : f32 to vector<8x1xf32>
    %15 = arith.divf %13, %14 : vector<8x1xf32>
    %16 = arith.mulf %10, %10 : vector<8x1xf32>
    %17 = arith.subf %15, %16 : vector<8x1xf32>
    %cst_10 = arith.constant 0.000000e+00 : f32
    %18 = vector.broadcast %cst_10 : f32 to vector<8x1xf32>
    %19 = arith.maximumf %17, %18 : vector<8x1xf32>
    %20 = vector.broadcast %10 : vector<8x1xf32> to vector<8x512xf32>
    %21 = arith.subf %6, %20 : vector<8x512xf32>
    %cst_11 = arith.constant 9.99999974E-6 : f32
    %22 = vector.broadcast %cst_11 : f32 to vector<8x1xf32>
    %23 = arith.addf %19, %22 : vector<8x1xf32>
    %24 = math.rsqrt %23 : vector<8x1xf32>
    %25 = vector.broadcast %24 : vector<8x1xf32> to vector<8x512xf32>
    %26 = arith.mulf %21, %25 : vector<8x512xf32>
    %cst_12 = arith.constant 0.000000e+00 : f32
    %27 = vector.broadcast %cst_12 : f32 to vector<8x512xf32>
    %28 = arith.cmpf oge, %26, %27 : vector<8x512xf32>
    %cst_13 = arith.constant 2.000000e-01 : f32
    %29 = vector.broadcast %cst_13 : f32 to vector<8x512xf32>
    %30 = arith.mulf %29, %26 : vector<8x512xf32>
    %31 = arith.select %28, %26, %30 : vector<8x512xi1>, vector<8x512xf32>
    %32 = arith.truncf %31 : vector<8x512xf32> to vector<8x512xbf16>
    %c0_14 = arith.constant 0 : index
    %c0_15 = arith.constant 0 : index
    %c0_16 = arith.constant 0 : index
    %33 = vector.load %arg5[%c0_14, %c0_15, %c0_16] : memref<1x8x512xbf16, #tpu.memory_space<vmem>>, vector<1x8x512xbf16>
    %34 = vector.shape_cast %33 : vector<1x8x512xbf16> to vector<8x512xbf16>
    %35 = vector.shape_cast %32 : vector<8x512xbf16> to vector<1x8x512xbf16>
    tpu.vector_store %arg5[%c0_14, %c0_15, %c0_16], %35 {strides = array<i32>} : memref<1x8x512xbf16, #tpu.memory_space<vmem>>, vector<1x8x512xbf16>,
    return
  }
  func.func @transform_0(%arg0: i32, %arg1: i32) -> (i32, i32, i32) {
    %c0_i32 = arith.constant 0 : i32
    %c0_i32_0 = arith.constant 0 : i32
    return %arg0, %c0_i32, %arg1 : i32, i32, i32
  }
  func.func @transform_1(%arg0: i32, %arg1: i32) -> (i32, i32) {
    %c0_i32 = arith.constant 0 : i32
    %c0_i32_0 = arith.constant 0 : i32
    %c0_i32_1 = arith.constant 0 : i32
    return %c0_i32, %c0_i32_0 : i32, i32
  }
  func.func @transform_2(%arg0: i32, %arg1: i32) -> (i32, i32) {
    %c0_i32 = arith.constant 0 : i32
    %c0_i32_0 = arith.constant 0 : i32
    %c0_i32_1 = arith.constant 0 : i32
    return %c0_i32, %c0_i32_0 : i32, i32
  }
  func.func @transform_3(%arg0: i32, %arg1: i32) -> (i32, i32, i32) {
    %c0_i32 = arith.constant 0 : i32
    %c0_i32_0 = arith.constant 0 : i32
    %c0_i32_1 = arith.constant 0 : i32
    return %arg0, %c0_i32, %c0_i32_0 : i32, i32, i32
  }
}

module attributes {stable_mosaic.version = 11 : i64} {
  func.func @_conv_batched_kernel(%arg0: i32, %arg1: memref<512x128xbf16, #tpu.memory_space<vmem>>, %arg2: memref<16x512xbf16, #tpu.memory_space<vmem>>, %arg3: memref<16x1xf32, #tpu.memory_space<vmem>>, %arg4: memref<16x128xbf16, #tpu.memory_space<vmem>>) attributes {dimension_semantics = [#tpu.dimension_semantics<arbitrary>], iteration_bounds = array<i64: 1>, scalar_prefetch = 0 : i64, scratch_operands = 0 : i64, tpu.core_type = #tpu.core_type<tc>, window_params = [{pipeline_mode = #tpu.pipeline_mode<synchronous>, transform_indices = @transform_0, window_bounds = array<i64: 512, 128>}, {pipeline_mode = #tpu.pipeline_mode<synchronous>, transform_indices = @transform_1, window_bounds = array<i64: 16, 512>}, {pipeline_mode = #tpu.pipeline_mode<synchronous>, transform_indices = @transform_2, window_bounds = array<i64: 16, 1>}, {pipeline_mode = #tpu.pipeline_mode<synchronous>, transform_indices = @transform_3, window_bounds = array<i64: 16, 128>}]} {
    %c0 = arith.constant 0 : index
    %c0_0 = arith.constant 0 : index
    %0 = vector.load %arg2[%c0, %c0_0] : memref<16x512xbf16, #tpu.memory_space<vmem>>, vector<16x512xbf16>
    %c0_1 = arith.constant 0 : index
    %c0_2 = arith.constant 0 : index
    %1 = vector.load %arg1[%c0_1, %c0_2] : memref<512x128xbf16, #tpu.memory_space<vmem>>, vector<512x128xbf16>
    %cst = arith.constant dense<0.000000e+00> : vector<16x128xf32>
    %2 = tpu.matmul %0, %1, %cst {dimension_numbers = #tpu.dot_dimension_numbers<[1], [0], [0], [1], [0, 0, 1, 1], [], []>} : vector<16x512xbf16>, vector<512x128xbf16>, vector<16x128xf32> -> vector<16x128xf32>
    %c0_3 = arith.constant 0 : index
    %c0_4 = arith.constant 0 : index
    %3 = vector.load %arg3[%c0_3, %c0_4] : memref<16x1xf32, #tpu.memory_space<vmem>>, vector<16x1xf32>
    %4 = vector.broadcast %3 : vector<16x1xf32> to vector<16x128xf32>
    %5 = arith.addf %2, %4 : vector<16x128xf32>
    %6 = tpu.iota {dimensions = array<i32: 1>} : vector<16x128xi32>
    %c0_i32 = arith.constant 0 : i32
    %7 = vector.broadcast %c0_i32 : i32 to vector<16x128xi32>
    %8 = arith.cmpi sge, %6, %7 : vector<16x128xi32>
    %c64_i32 = arith.constant 64 : i32
    %9 = vector.broadcast %c64_i32 : i32 to vector<16x128xi32>
    %10 = arith.cmpi slt, %6, %9 : vector<16x128xi32>
    %11 = arith.andi %8, %10 : vector<16x128xi1>
    %cst_5 = arith.constant 0.000000e+00 : f32
    %12 = vector.broadcast %cst_5 : f32 to vector<16x128xf32>
    %13 = arith.select %11, %5, %12 : vector<16x128xi1>, vector<16x128xf32>
    %cst_6 = arith.constant dense<0.000000e+00> : vector<16xf32>
    %14 = vector.multi_reduction <add>, %13, %cst_6 [1] : vector<16x128xf32> to vector<16xf32>
    %15 = vector.shape_cast %14 : vector<16xf32> to vector<16x1xf32>
    %cst_7 = arith.constant 6.400000e+01 : f32
    %16 = vector.broadcast %cst_7 : f32 to vector<16x1xf32>
    %17 = arith.divf %15, %16 : vector<16x1xf32>
    %18 = arith.mulf %13, %13 : vector<16x128xf32>
    %cst_8 = arith.constant dense<0.000000e+00> : vector<16xf32>
    %19 = vector.multi_reduction <add>, %18, %cst_8 [1] : vector<16x128xf32> to vector<16xf32>
    %20 = vector.shape_cast %19 : vector<16xf32> to vector<16x1xf32>
    %cst_9 = arith.constant 6.400000e+01 : f32
    %21 = vector.broadcast %cst_9 : f32 to vector<16x1xf32>
    %22 = arith.divf %20, %21 : vector<16x1xf32>
    %23 = arith.mulf %17, %17 : vector<16x1xf32>
    %24 = arith.subf %22, %23 : vector<16x1xf32>
    %cst_10 = arith.constant 0.000000e+00 : f32
    %25 = vector.broadcast %cst_10 : f32 to vector<16x1xf32>
    %26 = arith.maximumf %24, %25 : vector<16x1xf32>
    %27 = vector.broadcast %17 : vector<16x1xf32> to vector<16x128xf32>
    %28 = arith.subf %5, %27 : vector<16x128xf32>
    %cst_11 = arith.constant 9.99999974E-6 : f32
    %29 = vector.broadcast %cst_11 : f32 to vector<16x1xf32>
    %30 = arith.addf %26, %29 : vector<16x1xf32>
    %31 = math.rsqrt %30 : vector<16x1xf32>
    %32 = vector.broadcast %31 : vector<16x1xf32> to vector<16x128xf32>
    %33 = arith.mulf %28, %32 : vector<16x128xf32>
    %34 = arith.select %11, %33, %5 : vector<16x128xi1>, vector<16x128xf32>
    %c64_i32_12 = arith.constant 64 : i32
    %35 = vector.broadcast %c64_i32_12 : i32 to vector<16x128xi32>
    %36 = arith.cmpi sge, %6, %35 : vector<16x128xi32>
    %c128_i32 = arith.constant 128 : i32
    %37 = vector.broadcast %c128_i32 : i32 to vector<16x128xi32>
    %38 = arith.cmpi slt, %6, %37 : vector<16x128xi32>
    %39 = arith.andi %36, %38 : vector<16x128xi1>
    %cst_13 = arith.constant 0.000000e+00 : f32
    %40 = vector.broadcast %cst_13 : f32 to vector<16x128xf32>
    %41 = arith.select %39, %5, %40 : vector<16x128xi1>, vector<16x128xf32>
    %cst_14 = arith.constant dense<0.000000e+00> : vector<16xf32>
    %42 = vector.multi_reduction <add>, %41, %cst_14 [1] : vector<16x128xf32> to vector<16xf32>
    %43 = vector.shape_cast %42 : vector<16xf32> to vector<16x1xf32>
    %cst_15 = arith.constant 6.400000e+01 : f32
    %44 = vector.broadcast %cst_15 : f32 to vector<16x1xf32>
    %45 = arith.divf %43, %44 : vector<16x1xf32>
    %46 = arith.mulf %41, %41 : vector<16x128xf32>
    %cst_16 = arith.constant dense<0.000000e+00> : vector<16xf32>
    %47 = vector.multi_reduction <add>, %46, %cst_16 [1] : vector<16x128xf32> to vector<16xf32>
    %48 = vector.shape_cast %47 : vector<16xf32> to vector<16x1xf32>
    %cst_17 = arith.constant 6.400000e+01 : f32
    %49 = vector.broadcast %cst_17 : f32 to vector<16x1xf32>
    %50 = arith.divf %48, %49 : vector<16x1xf32>
    %51 = arith.mulf %45, %45 : vector<16x1xf32>
    %52 = arith.subf %50, %51 : vector<16x1xf32>
    %cst_18 = arith.constant 0.000000e+00 : f32
    %53 = vector.broadcast %cst_18 : f32 to vector<16x1xf32>
    %54 = arith.maximumf %52, %53 : vector<16x1xf32>
    %55 = vector.broadcast %45 : vector<16x1xf32> to vector<16x128xf32>
    %56 = arith.subf %5, %55 : vector<16x128xf32>
    %cst_19 = arith.constant 9.99999974E-6 : f32
    %57 = vector.broadcast %cst_19 : f32 to vector<16x1xf32>
    %58 = arith.addf %54, %57 : vector<16x1xf32>
    %59 = math.rsqrt %58 : vector<16x1xf32>
    %60 = vector.broadcast %59 : vector<16x1xf32> to vector<16x128xf32>
    %61 = arith.mulf %56, %60 : vector<16x128xf32>
    %62 = arith.select %39, %61, %34 : vector<16x128xi1>, vector<16x128xf32>
    %cst_20 = arith.constant 0.000000e+00 : f32
    %63 = vector.broadcast %cst_20 : f32 to vector<16x128xf32>
    %64 = arith.cmpf oge, %62, %63 : vector<16x128xf32>
    %cst_21 = arith.constant 2.000000e-01 : f32
    %65 = vector.broadcast %cst_21 : f32 to vector<16x128xf32>
    %66 = arith.mulf %65, %62 : vector<16x128xf32>
    %67 = arith.select %64, %62, %66 : vector<16x128xi1>, vector<16x128xf32>
    %68 = arith.truncf %67 : vector<16x128xf32> to vector<16x128xbf16>
    %c0_22 = arith.constant 0 : index
    %c0_23 = arith.constant 0 : index
    %69 = vector.load %arg4[%c0_22, %c0_23] : memref<16x128xbf16, #tpu.memory_space<vmem>>, vector<16x128xbf16>
    tpu.vector_store %arg4[%c0_22, %c0_23], %68 {strides = array<i32>} : memref<16x128xbf16, #tpu.memory_space<vmem>>, vector<16x128xbf16>,
    return
  }
  func.func @transform_0(%arg0: i32) -> (i32, i32) {
    %c0_i32 = arith.constant 0 : i32
    %c0_i32_0 = arith.constant 0 : i32
    %c0_i32_1 = arith.constant 0 : i32
    return %c0_i32, %c0_i32_0 : i32, i32
  }
  func.func @transform_1(%arg0: i32) -> (i32, i32) {
    %c0_i32 = arith.constant 0 : i32
    %c0_i32_0 = arith.constant 0 : i32
    %c0_i32_1 = arith.constant 0 : i32
    return %c0_i32, %c0_i32_0 : i32, i32
  }
  func.func @transform_2(%arg0: i32) -> (i32, i32) {
    %c0_i32 = arith.constant 0 : i32
    %c0_i32_0 = arith.constant 0 : i32
    %c0_i32_1 = arith.constant 0 : i32
    return %c0_i32, %c0_i32_0 : i32, i32
  }
  func.func @transform_3(%arg0: i32) -> (i32, i32) {
    %c0_i32 = arith.constant 0 : i32
    %c0_i32_0 = arith.constant 0 : i32
    %c0_i32_1 = arith.constant 0 : i32
    return %c0_i32, %c0_i32_0 : i32, i32
  }
}

module attributes {stable_mosaic.version = 11 : i64} {
  func.func @_conv_batched_kernel(%arg0: i32, %arg1: memref<1024x128xbf16, #tpu.memory_space<vmem>>, %arg2: memref<32x1024xbf16, #tpu.memory_space<vmem>>, %arg3: memref<32x1xf32, #tpu.memory_space<vmem>>, %arg4: memref<32x128xbf16, #tpu.memory_space<vmem>>) attributes {dimension_semantics = [#tpu.dimension_semantics<arbitrary>], iteration_bounds = array<i64: 1>, scalar_prefetch = 0 : i64, scratch_operands = 0 : i64, tpu.core_type = #tpu.core_type<tc>, window_params = [{pipeline_mode = #tpu.pipeline_mode<synchronous>, transform_indices = @transform_0, window_bounds = array<i64: 1024, 128>}, {pipeline_mode = #tpu.pipeline_mode<synchronous>, transform_indices = @transform_1, window_bounds = array<i64: 32, 1024>}, {pipeline_mode = #tpu.pipeline_mode<synchronous>, transform_indices = @transform_2, window_bounds = array<i64: 32, 1>}, {pipeline_mode = #tpu.pipeline_mode<synchronous>, transform_indices = @transform_3, window_bounds = array<i64: 32, 128>}]} {
    %c0 = arith.constant 0 : index
    %c0_0 = arith.constant 0 : index
    %0 = vector.load %arg2[%c0, %c0_0] : memref<32x1024xbf16, #tpu.memory_space<vmem>>, vector<32x1024xbf16>
    %c0_1 = arith.constant 0 : index
    %c0_2 = arith.constant 0 : index
    %1 = vector.load %arg1[%c0_1, %c0_2] : memref<1024x128xbf16, #tpu.memory_space<vmem>>, vector<1024x128xbf16>
    %cst = arith.constant dense<0.000000e+00> : vector<32x128xf32>
    %2 = tpu.matmul %0, %1, %cst {dimension_numbers = #tpu.dot_dimension_numbers<[1], [0], [0], [1], [0, 0, 1, 1], [], []>} : vector<32x1024xbf16>, vector<1024x128xbf16>, vector<32x128xf32> -> vector<32x128xf32>
    %c0_3 = arith.constant 0 : index
    %c0_4 = arith.constant 0 : index
    %3 = vector.load %arg3[%c0_3, %c0_4] : memref<32x1xf32, #tpu.memory_space<vmem>>, vector<32x1xf32>
    %4 = vector.broadcast %3 : vector<32x1xf32> to vector<32x128xf32>
    %5 = arith.addf %2, %4 : vector<32x128xf32>
    %6 = tpu.iota {dimensions = array<i32: 1>} : vector<32x128xi32>
    %c0_i32 = arith.constant 0 : i32
    %7 = vector.broadcast %c0_i32 : i32 to vector<32x128xi32>
    %8 = arith.cmpi sge, %6, %7 : vector<32x128xi32>
    %c8_i32 = arith.constant 8 : i32
    %9 = vector.broadcast %c8_i32 : i32 to vector<32x128xi32>
    %10 = arith.cmpi slt, %6, %9 : vector<32x128xi32>
    %11 = arith.andi %8, %10 : vector<32x128xi1>
    %cst_5 = arith.constant 0.000000e+00 : f32
    %12 = vector.broadcast %cst_5 : f32 to vector<32x128xf32>
    %13 = arith.select %11, %5, %12 : vector<32x128xi1>, vector<32x128xf32>
    %cst_6 = arith.constant dense<0.000000e+00> : vector<32xf32>
    %14 = vector.multi_reduction <add>, %13, %cst_6 [1] : vector<32x128xf32> to vector<32xf32>
    %15 = vector.shape_cast %14 : vector<32xf32> to vector<32x1xf32>
    %cst_7 = arith.constant 8.000000e+00 : f32
    %16 = vector.broadcast %cst_7 : f32 to vector<32x1xf32>
    %17 = arith.divf %15, %16 : vector<32x1xf32>
    %18 = arith.mulf %13, %13 : vector<32x128xf32>
    %cst_8 = arith.constant dense<0.000000e+00> : vector<32xf32>
    %19 = vector.multi_reduction <add>, %18, %cst_8 [1] : vector<32x128xf32> to vector<32xf32>
    %20 = vector.shape_cast %19 : vector<32xf32> to vector<32x1xf32>
    %cst_9 = arith.constant 8.000000e+00 : f32
    %21 = vector.broadcast %cst_9 : f32 to vector<32x1xf32>
    %22 = arith.divf %20, %21 : vector<32x1xf32>
    %23 = arith.mulf %17, %17 : vector<32x1xf32>
    %24 = arith.subf %22, %23 : vector<32x1xf32>
    %cst_10 = arith.constant 0.000000e+00 : f32
    %25 = vector.broadcast %cst_10 : f32 to vector<32x1xf32>
    %26 = arith.maximumf %24, %25 : vector<32x1xf32>
    %27 = vector.broadcast %17 : vector<32x1xf32> to vector<32x128xf32>
    %28 = arith.subf %5, %27 : vector<32x128xf32>
    %cst_11 = arith.constant 9.99999974E-6 : f32
    %29 = vector.broadcast %cst_11 : f32 to vector<32x1xf32>
    %30 = arith.addf %26, %29 : vector<32x1xf32>
    %31 = math.rsqrt %30 : vector<32x1xf32>
    %32 = vector.broadcast %31 : vector<32x1xf32> to vector<32x128xf32>
    %33 = arith.mulf %28, %32 : vector<32x128xf32>
    %34 = arith.select %11, %33, %5 : vector<32x128xi1>, vector<32x128xf32>
    %c8_i32_12 = arith.constant 8 : i32
    %35 = vector.broadcast %c8_i32_12 : i32 to vector<32x128xi32>
    %36 = arith.cmpi sge, %6, %35 : vector<32x128xi32>
    %c16_i32 = arith.constant 16 : i32
    %37 = vector.broadcast %c16_i32 : i32 to vector<32x128xi32>
    %38 = arith.cmpi slt, %6, %37 : vector<32x128xi32>
    %39 = arith.andi %36, %38 : vector<32x128xi1>
    %cst_13 = arith.constant 0.000000e+00 : f32
    %40 = vector.broadcast %cst_13 : f32 to vector<32x128xf32>
    %41 = arith.select %39, %5, %40 : vector<32x128xi1>, vector<32x128xf32>
    %cst_14 = arith.constant dense<0.000000e+00> : vector<32xf32>
    %42 = vector.multi_reduction <add>, %41, %cst_14 [1] : vector<32x128xf32> to vector<32xf32>
    %43 = vector.shape_cast %42 : vector<32xf32> to vector<32x1xf32>
    %cst_15 = arith.constant 8.000000e+00 : f32
    %44 = vector.broadcast %cst_15 : f32 to vector<32x1xf32>
    %45 = arith.divf %43, %44 : vector<32x1xf32>
    %46 = arith.mulf %41, %41 : vector<32x128xf32>
    %cst_16 = arith.constant dense<0.000000e+00> : vector<32xf32>
    %47 = vector.multi_reduction <add>, %46, %cst_16 [1] : vector<32x128xf32> to vector<32xf32>
    %48 = vector.shape_cast %47 : vector<32xf32> to vector<32x1xf32>
    %cst_17 = arith.constant 8.000000e+00 : f32
    %49 = vector.broadcast %cst_17 : f32 to vector<32x1xf32>
    %50 = arith.divf %48, %49 : vector<32x1xf32>
    %51 = arith.mulf %45, %45 : vector<32x1xf32>
    %52 = arith.subf %50, %51 : vector<32x1xf32>
    %cst_18 = arith.constant 0.000000e+00 : f32
    %53 = vector.broadcast %cst_18 : f32 to vector<32x1xf32>
    %54 = arith.maximumf %52, %53 : vector<32x1xf32>
    %55 = vector.broadcast %45 : vector<32x1xf32> to vector<32x128xf32>
    %56 = arith.subf %5, %55 : vector<32x128xf32>
    %cst_19 = arith.constant 9.99999974E-6 : f32
    %57 = vector.broadcast %cst_19 : f32 to vector<32x1xf32>
    %58 = arith.addf %54, %57 : vector<32x1xf32>
    %59 = math.rsqrt %58 : vector<32x1xf32>
    %60 = vector.broadcast %59 : vector<32x1xf32> to vector<32x128xf32>
    %61 = arith.mulf %56, %60 : vector<32x128xf32>
    %62 = arith.select %39, %61, %34 : vector<32x128xi1>, vector<32x128xf32>
    %cst_20 = arith.constant 0.000000e+00 : f32
    %63 = vector.broadcast %cst_20 : f32 to vector<32x128xf32>
    %64 = arith.cmpf oge, %62, %63 : vector<32x128xf32>
    %cst_21 = arith.constant 2.000000e-01 : f32
    %65 = vector.broadcast %cst_21 : f32 to vector<32x128xf32>
    %66 = arith.mulf %65, %62 : vector<32x128xf32>
    %67 = arith.select %64, %62, %66 : vector<32x128xi1>, vector<32x128xf32>
    %68 = arith.truncf %67 : vector<32x128xf32> to vector<32x128xbf16>
    %c0_22 = arith.constant 0 : index
    %c0_23 = arith.constant 0 : index
    %69 = vector.load %arg4[%c0_22, %c0_23] : memref<32x128xbf16, #tpu.memory_space<vmem>>, vector<32x128xbf16>
    tpu.vector_store %arg4[%c0_22, %c0_23], %68 {strides = array<i32>} : memref<32x128xbf16, #tpu.memory_space<vmem>>, vector<32x128xbf16>,
    return
  }
  func.func @transform_0(%arg0: i32) -> (i32, i32) {
    %c0_i32 = arith.constant 0 : i32
    %c0_i32_0 = arith.constant 0 : i32
    %c0_i32_1 = arith.constant 0 : i32
    return %c0_i32, %c0_i32_0 : i32, i32
  }
  func.func @transform_1(%arg0: i32) -> (i32, i32) {
    %c0_i32 = arith.constant 0 : i32
    %c0_i32_0 = arith.constant 0 : i32
    %c0_i32_1 = arith.constant 0 : i32
    return %c0_i32, %c0_i32_0 : i32, i32
  }
  func.func @transform_2(%arg0: i32) -> (i32, i32) {
    %c0_i32 = arith.constant 0 : i32
    %c0_i32_0 = arith.constant 0 : i32
    %c0_i32_1 = arith.constant 0 : i32
    return %c0_i32, %c0_i32_0 : i32, i32
  }
  func.func @transform_3(%arg0: i32) -> (i32, i32) {
    %c0_i32 = arith.constant 0 : i32
    %c0_i32_0 = arith.constant 0 : i32
    %c0_i32_1 = arith.constant 0 : i32
    return %c0_i32, %c0_i32_0 : i32, i32
  }
}

module attributes {stable_mosaic.version = 11 : i64} {
  func.func @_conv_batched_kernel(%arg0: i32, %arg1: memref<864x128xbf16, #tpu.memory_space<vmem>>, %arg2: memref<1x864xbf16, #tpu.memory_space<vmem>>, %arg3: memref<1x1xf32, #tpu.memory_space<vmem>>, %arg4: memref<1x128xf32, #tpu.memory_space<vmem>>) attributes {dimension_semantics = [#tpu.dimension_semantics<arbitrary>], iteration_bounds = array<i64: 1>, scalar_prefetch = 0 : i64, scratch_operands = 0 : i64, tpu.core_type = #tpu.core_type<tc>, window_params = [{pipeline_mode = #tpu.pipeline_mode<synchronous>, transform_indices = @transform_0, window_bounds = array<i64: 864, 128>}, {pipeline_mode = #tpu.pipeline_mode<synchronous>, transform_indices = @transform_1, window_bounds = array<i64: 1, 864>}, {pipeline_mode = #tpu.pipeline_mode<synchronous>, transform_indices = @transform_2, window_bounds = array<i64: 1, 1>}, {pipeline_mode = #tpu.pipeline_mode<synchronous>, transform_indices = @transform_3, window_bounds = array<i64: 1, 128>}]} {
    %c0 = arith.constant 0 : index
    %c0_0 = arith.constant 0 : index
    %0 = vector.load %arg2[%c0, %c0_0] : memref<1x864xbf16, #tpu.memory_space<vmem>>, vector<1x864xbf16>
    %c0_1 = arith.constant 0 : index
    %c0_2 = arith.constant 0 : index
    %1 = vector.load %arg1[%c0_1, %c0_2] : memref<864x128xbf16, #tpu.memory_space<vmem>>, vector<864x128xbf16>
    %cst = arith.constant dense<0.000000e+00> : vector<1x128xf32>
    %2 = tpu.matmul %0, %1, %cst {dimension_numbers = #tpu.dot_dimension_numbers<[1], [0], [0], [1], [0, 0, 1, 1], [], []>} : vector<1x864xbf16>, vector<864x128xbf16>, vector<1x128xf32> -> vector<1x128xf32>
    %c0_3 = arith.constant 0 : index
    %c0_4 = arith.constant 0 : index
    %3 = vector.load %arg3[%c0_3, %c0_4] : memref<1x1xf32, #tpu.memory_space<vmem>>, vector<1x1xf32>
    %4 = vector.broadcast %3 : vector<1x1xf32> to vector<1x128xf32>
    %5 = arith.addf %2, %4 : vector<1x128xf32>
    %c0_5 = arith.constant 0 : index
    %c0_6 = arith.constant 0 : index
    %6 = vector.load %arg4[%c0_5, %c0_6] : memref<1x128xf32, #tpu.memory_space<vmem>>, vector<1x128xf32>
    tpu.vector_store %arg4[%c0_5, %c0_6], %5 {strides = array<i32>} : memref<1x128xf32, #tpu.memory_space<vmem>>, vector<1x128xf32>,
    return
  }
  func.func @transform_0(%arg0: i32) -> (i32, i32) {
    %c0_i32 = arith.constant 0 : i32
    %c0_i32_0 = arith.constant 0 : i32
    %c0_i32_1 = arith.constant 0 : i32
    return %c0_i32, %c0_i32_0 : i32, i32
  }
  func.func @transform_1(%arg0: i32) -> (i32, i32) {
    %c0_i32 = arith.constant 0 : i32
    %c0_i32_0 = arith.constant 0 : i32
    %c0_i32_1 = arith.constant 0 : i32
    return %c0_i32, %c0_i32_0 : i32, i32
  }
  func.func @transform_2(%arg0: i32) -> (i32, i32) {
    %c0_i32 = arith.constant 0 : i32
    %c0_i32_0 = arith.constant 0 : i32
    %c0_i32_1 = arith.constant 0 : i32
    return %c0_i32, %c0_i32_0 : i32, i32
  }
  func.func @transform_3(%arg0: i32) -> (i32, i32) {
    %c0_i32 = arith.constant 0 : i32
    %c0_i32_0 = arith.constant 0 : i32
    %c0_i32_1 = arith.constant 0 : i32
    return %c0_i32, %c0_i32_0 : i32, i32
  }
}

</mosaic_0001>

<llo_original>
// kernel: discriminator_forward.5
$region0: #{discriminator_forward.5}
  #allocation0 [shape = 'u32[]', space=smem, size = 0x4, offset = 0x4, fixed_abs, tag = 'smem constant byte address 0x4 - core index']
  #allocation1 [shape = 'u32[144,128]{1,0:T(1,128)}', space=vmem, size = 0x12000, scoped, tag = 'internal scratch']
  %s0 = inlined_call_operand.vmem [shape: bf16[2,128,4096], index: 0, kind: input, shape index: {}]
  %s1 = inlined_call_operand.vmem [shape: bf16[4,128], index: 1, kind: input, shape index: {}]
  %s2 = inlined_call_operand.vmem [shape: f32[4,1], index: 2, kind: input, shape index: {}]
  %s3 = inlined_call_operand.vmem [shape: bf16[2,4,4096], index: 3, kind: output, shape index: {}]
  %s4 = sld [smem:[#allocation0]]
  $region45: #{discriminator_forward.5} parent=0
    _
  %s6 = ssub.s32 1, %s4
  %s7 = scalar_select 0, %s6, %s4
  loop: start=0, step=1, limit=4
  $region2: #{discriminator_forward.5} parent=0 // loop_pre_header
    _
  $region3: #{discriminator_forward.5} parent=0 // loop_header
    %s9 = sphi 0, %s13
    %p10 = scmp.ge.s32.totalorder %s9, 4
    %s16 = sphi 0, %s28
    %s17 = sphi 0, %s24
    %s18 = sphi 0, %s16
    %s19 = sphi 0, %s17
    %s20 = sphi 0, %s18
    %s21 = sphi 0, %s19
    %s33 = sphi 0, %s35
    %s36 = sphi 0, %s33
    %s37 = sphi 0, %s36
    %s53 = sphi 0, %s37
    %s57 = sphi 0, %s57
    %s59 = sphi 0, %s57
    %s60 = sphi 0, %s59
    %s74 = sphi 0, %s60
    %s78 = sphi 0, %s78
    %s80 = sphi 0, %s78
    %s81 = sphi 0, %s80
    %s95 = sphi 0, %s81
    %s103 = sphi 0, %s105
    %s106 = sphi 0, %s103
    %s107 = sphi 0, %s106
    %s123 = sphi 0, %s107
  $region4: #{discriminator_forward.5} parent=0 // loop_header_branch
    %12 = sbr.rel (%p10) target = $region8
  $region5: #{discriminator_forward.5} parent=0 // loop_body
    %s14 = ssub.s32 %s9, 1
    %s15 = ssub.s32 %s9, 2
    %s22 = sadd.s32 1, %s17
    %p23 = scmp.ge.s32.totalorder %s22, 1
    %s24 = scalar_select %p23, 0, %s22
    %s25 = sadd.s32 1, %s16
    %s26 = scalar_select %p23, %s25, %s16
    %p27 = scmp.ge.s32.totalorder %s26, 2
    %s28 = scalar_select %p27, 0, %s26
    %s29 = ssub.s32 %s16, %s28
    %s30 = ssub.s32 %s17, %s24
    %s31 = sor.u32 %s29, %s30
    %p32 = scmp.eq.s32.totalorder %s31, 0
    %s34 = sadd.s32 %s33, 1
    %s35 = scalar_select %p32, %s33, %s34
    %p38 = pneg %p32
    %p39 = scmp.eq.s32.totalorder %s9, 1
    %p40 = por %p38, %p39
    %p41 = scmp.ne.s32.totalorder %s33, %s36
    %p42 = scmp.eq.s32.totalorder %s9, 0
    %p43 = por %p41, %p42
    %p44 = scmp.ne.s32.totalorder %s33, %s36
    %p45 = scmp.eq.s32.totalorder %s14, 1
    %p46 = por %p44, %p45
    %p47 = scmp.ne.s32.totalorder %s36, %s37
    %p48 = scmp.eq.s32.totalorder %s14, 0
    %p49 = por %p47, %p48
    %p50 = scmp.ne.s32.totalorder %s36, %s37
    %p51 = scmp.eq.s32.totalorder %s15, 1
    %p52 = por %p50, %p51
    %p54 = scmp.ne.s32.totalorder %s37, %s53
    %p55 = scmp.eq.s32.totalorder %s15, 0
    %p56 = por %p54, %p55
    %s58 = sadd.s32 %s57, 1
    %p61 = scmp.eq.s32.totalorder %s9, 1
    %p62 = scmp.ne.s32.totalorder %s57, %s59
    %p63 = scmp.eq.s32.totalorder %s9, 0
    %p64 = por %p62, %p63
    %p65 = scmp.ne.s32.totalorder %s57, %s59
    %p66 = scmp.eq.s32.totalorder %s14, 1
    %p67 = por %p65, %p66
    %p68 = scmp.ne.s32.totalorder %s59, %s60
    %p69 = scmp.eq.s32.totalorder %s14, 0
    %p70 = por %p68, %p69
    %p71 = scmp.ne.s32.totalorder %s59, %s60
    %p72 = scmp.eq.s32.totalorder %s15, 1
    %p73 = por %p71, %p72
    %p75 = scmp.ne.s32.totalorder %s60, %s74
    %p76 = scmp.eq.s32.totalorder %s15, 0
    %p77 = por %p75, %p76
    %s79 = sadd.s32 %s78, 1
    %p82 = scmp.eq.s32.totalorder %s9, 1
    %p83 = scmp.ne.s32.totalorder %s78, %s80
    %p84 = scmp.eq.s32.totalorder %s9, 0
    %p85 = por %p83, %p84
    %p86 = scmp.ne.s32.totalorder %s78, %s80
    %p87 = scmp.eq.s32.totalorder %s14, 1
    %p88 = por %p86, %p87
    %p89 = scmp.ne.s32.totalorder %s80, %s81
    %p90 = scmp.eq.s32.totalorder %s14, 0
    %p91 = por %p89, %p90
    %p92 = scmp.ne.s32.totalorder %s80, %s81
    %p93 = scmp.eq.s32.totalorder %s15, 1
    %p94 = por %p92, %p93
    %p96 = scmp.ne.s32.totalorder %s81, %s95
    %p97 = scmp.eq.s32.totalorder %s15, 0
    %p98 = por %p96, %p97
    %s99 = ssub.s32 %s16, %s28
    %s100 = ssub.s32 %s17, %s24
    %s101 = sor.u32 %s99, %s100
    %p102 = scmp.eq.s32.totalorder %s101, 0
    %s104 = sadd.s32 %s103, 1
    %s105 = scalar_select %p102, %s103, %s104
    %p108 = pneg %p102
    %p109 = scmp.eq.s32.totalorder %s9, 1
    %p110 = por %p108, %p109
    %p111 = scmp.ne.s32.totalorder %s103, %s106
    %p112 = scmp.eq.s32.totalorder %s9, 0
    %p113 = por %p111, %p112
    %p114 = scmp.ne.s32.totalorder %s103, %s106
    %p115 = scmp.eq.s32.totalorder %s14, 1
    %p116 = por %p114, %p115
    %p117 = scmp.ne.s32.totalorder %s106, %s107
    %p118 = scmp.eq.s32.totalorder %s14, 0
    %p119 = por %p117, %p118
    %p120 = scmp.ne.s32.totalorder %s106, %s107
    %p121 = scmp.eq.s32.totalorder %s15, 1
    %p122 = por %p120, %p121
    %p124 = scmp.ne.s32.totalorder %s107, %s123
    %p125 = scmp.eq.s32.totalorder %s15, 0
    %p126 = por %p124, %p125
    %p127 = scmp.le.s32.totalorder 1, %s9
    %p128 = scmp.lt.s32.totalorder %s9, 3
    %p129 = pnand %p127, %p128
    %p130 = pneg %p129
    // Predicated region
    $region9: #{discriminator_forward.5} parent=5 // pred_check
      _
    $region10: #{discriminator_forward.5} parent=5 // pred_check_branch
      %132 = sbr.rel (%p129) target = $region12
    $region11: #{discriminator_forward.5} parent=5 // pred_region
      %s133 = ssub.s32 %s9, 1
      // Predicated region
      $region13: #{discriminator_forward.5} parent=11 // pred_check
        %p134 = pneg %p70
      $region14: #{discriminator_forward.5} parent=11 // pred_check_branch
        %136 = sbr.rel (%p134) target = $region16
      $region15: #{discriminator_forward.5} parent=11 // pred_region
        _
      $region16: #{discriminator_forward.5} parent=11 // pred_fallthru
        _
      // Predicated region
      $region17: #{discriminator_forward.5} parent=11 // pred_check
        %p137 = pneg %p91
      $region18: #{discriminator_forward.5} parent=11 // pred_check_branch
        %139 = sbr.rel (%p137) target = $region20
      $region19: #{discriminator_forward.5} parent=11 // pred_region
        _
      $region20: #{discriminator_forward.5} parent=11 // pred_fallthru
        _
    $region12: #{discriminator_forward.5} parent=5 // pred_fallthru
      _
    %p140 = scmp.lt.s32.totalorder %s9, 2
    // Predicated region
    $region21: #{discriminator_forward.5} parent=5 // pred_check
      %p141 = pneg %p140
    $region22: #{discriminator_forward.5} parent=5 // pred_check_branch
      %143 = sbr.rel (%p141) target = $region24
    $region23: #{discriminator_forward.5} parent=5 // pred_region
      // Predicated region
      $region25: #{discriminator_forward.5} parent=23 // pred_check
        %p144 = pneg %p43
      $region26: #{discriminator_forward.5} parent=23 // pred_check_branch
        %146 = sbr.rel (%p144) target = $region28
      $region27: #{discriminator_forward.5} parent=23 // pred_region
        %s147 = smul.u32 32, %s17
        %p148 = scmp.lt.s32.totalorder %s16, 1
        %s149 = scalar_select %p148, %s16, 1
        %p150 = scmp.lt.s32.totalorder %s147, 31
        %s151 = scalar_select %p150, %s147, 31
        %s152 = smul.addr %s149, 512
        %s153 = sadd.s32 %s151, %s152
        %s154 = smul.addr %s153, 4
        %s155 = scalar_lea.vmem %s0, %s154
        %s156 = smul.u32 32, %s17
      $region28: #{discriminator_forward.5} parent=23 // pred_fallthru
        _
    $region24: #{discriminator_forward.5} parent=5 // pred_fallthru
      _
    %p157 = scmp.le.s32.totalorder 1, %s9
    %p158 = scmp.lt.s32.totalorder %s9, 3
    %p159 = pnand %p157, %p158
    %p160 = pneg %p159
    // Predicated region
    $region29: #{discriminator_forward.5} parent=5 // pred_check
      _
    $region30: #{discriminator_forward.5} parent=5 // pred_check_branch
      %162 = sbr.rel (%p159) target = $region32
    $region31: #{discriminator_forward.5} parent=5 // pred_region
      %s163 = ssub.s32 %s9, 1
      %s164 = smul.u32 32, %s19
      %p165 = scmp.lt.s32.totalorder %s18, 1
      %s166 = scalar_select %p165, %s18, 1
      %p167 = scmp.lt.s32.totalorder %s164, 31
      %s168 = scalar_select %p167, %s164, 31
      %s169 = smul.addr %s166, 512
      %s170 = sadd.s32 %s168, %s169
      %s171 = smul.addr %s170, 4
      %s172 = scalar_lea.vmem %s0, %s171
      %p173 = pneg %p49
      %p174 = pneg %p46
      %p175 = pneg %p70
      %p176 = pneg %p67
      %p177 = pneg %p91
      %p178 = pneg %p88
      %p179 = pneg %p119
      %p180 = pneg %p116
      %s181 = smul.u32 32, %s19
      %p182 = scmp.lt.s32.totalorder %s18, 1
      %s183 = scalar_select %p182, %s18, 1
      %p184 = scmp.lt.s32.totalorder %s181, 31
      %s185 = scalar_select %p184, %s181, 31
      %s186 = smul.addr %s183, 32
      %s187 = sadd.s32 %s185, %s186
      %s188 = smul.addr %s187, 2
      %s189 = scalar_lea.vmem %s3, %s188
      %s190 = smul.u32 32, %s19
      %p191 = scmp.lt.s32.totalorder %s18, 1
      %s192 = scalar_select %p191, %s18, 1
      %p193 = scmp.lt.s32.totalorder %s190, 31
      %s194 = scalar_select %p193, %s190, 31
      %s195 = smul.addr %s192, 512
      %s196 = sadd.s32 %s194, %s195
      %s197 = smul.addr %s196, 4
      %s198 = scalar_lea.vmem %s0, %s197
      %s199 = smul.u32 32, %s19
      %s200 = smul.u32 32, %s19
      %p201 = scmp.lt.s32.totalorder %s18, 1
      %s202 = scalar_select %p201, %s18, 1
      %p203 = scmp.lt.s32.totalorder %s200, 31
      %s204 = scalar_select %p203, %s200, 31
      %s205 = smul.addr %s202, 32
      %s206 = sadd.s32 %s204, %s205
      %s207 = smul.addr %s206, 2
      %s208 = scalar_lea.vmem %s3, %s207
      %s209 = smul.u32 32, %s19
      %v211 = vld [vmem:[%s1] sm:$0x3]
      %v212 = vld [vmem:[%s198] sm:$0xff]
      %v213 = vld [vmem:[%s198 + $0x8] sm:$0xff]
      %v214 = vld [vmem:[%s198 + $0x10] sm:$0xff]
      %v215 = vld [vmem:[%s198 + $0x18] sm:$0xff]
      %v216 = vld [vmem:[%s198 + $0x20] sm:$0xff]
      %v217 = vld [vmem:[%s198 + $0x28] sm:$0xff]
      %v218 = vld [vmem:[%s198 + $0x30] sm:$0xff]
      %v219 = vld [vmem:[%s198 + $0x38] sm:$0xff]
      %v220 = vld [vmem:[%s198 + $0x40] sm:$0xff]
      %v221 = vld [vmem:[%s198 + $0x48] sm:$0xff]
      %v222 = vld [vmem:[%s198 + $0x50] sm:$0xff]
      %v223 = vld [vmem:[%s198 + $0x58] sm:$0xff]
      %v224 = vld [vmem:[%s198 + $0x60] sm:$0xff]
      %v225 = vld [vmem:[%s198 + $0x68] sm:$0xff]
      %v226 = vld [vmem:[%s198 + $0x70] sm:$0xff]
      %v227 = vld [vmem:[%s198 + $0x78] sm:$0xff]
      %v228 = vld [vmem:[%s198 + $0x80] sm:$0xff]
      %v229 = vld [vmem:[%s198 + $0x88] sm:$0xff]
      %v230 = vld [vmem:[%s198 + $0x90] sm:$0xff]
      %v231 = vld [vmem:[%s198 + $0x98] sm:$0xff]
      %v232 = vld [vmem:[%s198 + $0xa0] sm:$0xff]
      %v233 = vld [vmem:[%s198 + $0xa8] sm:$0xff]
      %v234 = vld [vmem:[%s198 + $0xb0] sm:$0xff]
      %v235 = vld [vmem:[%s198 + $0xb8] sm:$0xff]
      %v236 = vld [vmem:[%s198 + $0xc0] sm:$0xff]
      %v237 = vld [vmem:[%s198 + $0xc8] sm:$0xff]
      %v238 = vld [vmem:[%s198 + $0xd0] sm:$0xff]
      %v239 = vld [vmem:[%s198 + $0xd8] sm:$0xff]
      %v240 = vld [vmem:[%s198 + $0xe0] sm:$0xff]
      %v241 = vld [vmem:[%s198 + $0xe8] sm:$0xff]
      %v242 = vld [vmem:[%s198 + $0xf0] sm:$0xff]
      %v243 = vld [vmem:[%s198 + $0xf8] sm:$0xff]
      %v244 = vld [vmem:[%s198 + $0x100] sm:$0xff]
      %v245 = vld [vmem:[%s198 + $0x108] sm:$0xff]
      %v246 = vld [vmem:[%s198 + $0x110] sm:$0xff]
      %v247 = vld [vmem:[%s198 + $0x118] sm:$0xff]
      %v248 = vld [vmem:[%s198 + $0x120] sm:$0xff]
      %v249 = vld [vmem:[%s198 + $0x128] sm:$0xff]
      %v250 = vld [vmem:[%s198 + $0x130] sm:$0xff]
      %v251 = vld [vmem:[%s198 + $0x138] sm:$0xff]
      %v252 = vld [vmem:[%s198 + $0x140] sm:$0xff]
      %v253 = vld [vmem:[%s198 + $0x148] sm:$0xff]
      %v254 = vld [vmem:[%s198 + $0x150] sm:$0xff]
      %v255 = vld [vmem:[%s198 + $0x158] sm:$0xff]
      %v256 = vld [vmem:[%s198 + $0x160] sm:$0xff]
      %v257 = vld [vmem:[%s198 + $0x168] sm:$0xff]
      %v258 = vld [vmem:[%s198 + $0x170] sm:$0xff]
      %v259 = vld [vmem:[%s198 + $0x178] sm:$0xff]
      %v260 = vld [vmem:[%s198 + $0x180] sm:$0xff]
      %v261 = vld [vmem:[%s198 + $0x188] sm:$0xff]
      %v262 = vld [vmem:[%s198 + $0x190] sm:$0xff]
      %v263 = vld [vmem:[%s198 + $0x198] sm:$0xff]
      %v264 = vld [vmem:[%s198 + $0x1a0] sm:$0xff]
      %v265 = vld [vmem:[%s198 + $0x1a8] sm:$0xff]
      %v266 = vld [vmem:[%s198 + $0x1b0] sm:$0xff]
      %v267 = vld [vmem:[%s198 + $0x1b8] sm:$0xff]
      %v268 = vld [vmem:[%s198 + $0x1c0] sm:$0xff]
      %v269 = vld [vmem:[%s198 + $0x1c8] sm:$0xff]
      %v270 = vld [vmem:[%s198 + $0x1d0] sm:$0xff]
      %v271 = vld [vmem:[%s198 + $0x1d8] sm:$0xff]
      %v272 = vld [vmem:[%s198 + $0x1e0] sm:$0xff]
      %v273 = vld [vmem:[%s198 + $0x1e8] sm:$0xff]
      %v274 = vld [vmem:[%s198 + $0x1f0] sm:$0xff]
      %v275 = vld [vmem:[%s198 + $0x1f8] sm:$0xff]
      %v276 = vld [vmem:[%s198 + $0x200] sm:$0xff]
      %v277 = vld [vmem:[%s198 + $0x208] sm:$0xff]
      %v278 = vld [vmem:[%s198 + $0x210] sm:$0xff]
      %v279 = vld [vmem:[%s198 + $0x218] sm:$0xff]
      %v280 = vld [vmem:[%s198 + $0x220] sm:$0xff]
      %v281 = vld [vmem:[%s198 + $0x228] sm:$0xff]
      %v282 = vld [vmem:[%s198 + $0x230] sm:$0xff]
      %v283 = vld [vmem:[%s198 + $0x238] sm:$0xff]
      %v284 = vld [vmem:[%s198 + $0x240] sm:$0xff]
      %v285 = vld [vmem:[%s198 + $0x248] sm:$0xff]
      %v286 = vld [vmem:[%s198 + $0x250] sm:$0xff]
      %v287 = vld [vmem:[%s198 + $0x258] sm:$0xff]
      %v288 = vld [vmem:[%s198 + $0x260] sm:$0xff]
      %v289 = vld [vmem:[%s198 + $0x268] sm:$0xff]
      %v290 = vld [vmem:[%s198 + $0x270] sm:$0xff]
      %v291 = vld [vmem:[%s198 + $0x278] sm:$0xff]
      %v292 = vld [vmem:[%s198 + $0x280] sm:$0xff]
      %v293 = vld [vmem:[%s198 + $0x288] sm:$0xff]
      %v294 = vld [vmem:[%s198 + $0x290] sm:$0xff]
      %v295 = vld [vmem:[%s198 + $0x298] sm:$0xff]
      %v296 = vld [vmem:[%s198 + $0x2a0] sm:$0xff]
      %v297 = vld [vmem:[%s198 + $0x2a8] sm:$0xff]
      %v298 = vld [vmem:[%s198 + $0x2b0] sm:$0xff]
      %v299 = vld [vmem:[%s198 + $0x2b8] sm:$0xff]
      %v300 = vld [vmem:[%s198 + $0x2c0] sm:$0xff]
      %v301 = vld [vmem:[%s198 + $0x2c8] sm:$0xff]
      %v302 = vld [vmem:[%s198 + $0x2d0] sm:$0xff]
      %v303 = vld [vmem:[%s198 + $0x2d8] sm:$0xff]
      %v304 = vld [vmem:[%s198 + $0x2e0] sm:$0xff]
      %v305 = vld [vmem:[%s198 + $0x2e8] sm:$0xff]
      %v306 = vld [vmem:[%s198 + $0x2f0] sm:$0xff]
      %v307 = vld [vmem:[%s198 + $0x2f8] sm:$0xff]
      %v308 = vld [vmem:[%s198 + $0x300] sm:$0xff]
      %v309 = vld [vmem:[%s198 + $0x308] sm:$0xff]
      %v310 = vld [vmem:[%s198 + $0x310] sm:$0xff]
      %v311 = vld [vmem:[%s198 + $0x318] sm:$0xff]
      %v312 = vld [vmem:[%s198 + $0x320] sm:$0xff]
      %v313 = vld [vmem:[%s198 + $0x328] sm:$0xff]
      %v314 = vld [vmem:[%s198 + $0x330] sm:$0xff]
      %v315 = vld [vmem:[%s198 + $0x338] sm:$0xff]
      %v316 = vld [vmem:[%s198 + $0x340] sm:$0xff]
      %v317 = vld [vmem:[%s198 + $0x348] sm:$0xff]
      %v318 = vld [vmem:[%s198 + $0x350] sm:$0xff]
      %v319 = vld [vmem:[%s198 + $0x358] sm:$0xff]
      %v320 = vld [vmem:[%s198 + $0x360] sm:$0xff]
      %v321 = vld [vmem:[%s198 + $0x368] sm:$0xff]
      %v322 = vld [vmem:[%s198 + $0x370] sm:$0xff]
      %v323 = vld [vmem:[%s198 + $0x378] sm:$0xff]
      %v324 = vld [vmem:[%s198 + $0x380] sm:$0xff]
      %v325 = vld [vmem:[%s198 + $0x388] sm:$0xff]
      %v326 = vld [vmem:[%s198 + $0x390] sm:$0xff]
      %v327 = vld [vmem:[%s198 + $0x398] sm:$0xff]
      %v328 = vld [vmem:[%s198 + $0x3a0] sm:$0xff]
      %v329 = vld [vmem:[%s198 + $0x3a8] sm:$0xff]
      %v330 = vld [vmem:[%s198 + $0x3b0] sm:$0xff]
      %v331 = vld [vmem:[%s198 + $0x3b8] sm:$0xff]
      %v332 = vld [vmem:[%s198 + $0x3c0] sm:$0xff]
      %v333 = vld [vmem:[%s198 + $0x3c8] sm:$0xff]
      %v334 = vld [vmem:[%s198 + $0x3d0] sm:$0xff]
      %v335 = vld [vmem:[%s198 + $0x3d8] sm:$0xff]
      %v336 = vld [vmem:[%s198 + $0x3e0] sm:$0xff]
      %v337 = vld [vmem:[%s198 + $0x3e8] sm:$0xff]
      %v338 = vld [vmem:[%s198 + $0x3f0] sm:$0xff]
      %v339 = vld [vmem:[%s198 + $0x3f8] sm:$0xff]
      %v340 = vld [vmem:[%s198 + $0x400] sm:$0xff]
      %v341 = vld [vmem:[%s198 + $0x408] sm:$0xff]
      %v342 = vld [vmem:[%s198 + $0x410] sm:$0xff]
      %v343 = vld [vmem:[%s198 + $0x418] sm:$0xff]
      %v344 = vld [vmem:[%s198 + $0x420] sm:$0xff]
      %v345 = vld [vmem:[%s198 + $0x428] sm:$0xff]
      %v346 = vld [vmem:[%s198 + $0x430] sm:$0xff]
      %v347 = vld [vmem:[%s198 + $0x438] sm:$0xff]
      %v348 = vld [vmem:[%s198 + $0x440] sm:$0xff]
      %v349 = vld [vmem:[%s198 + $0x448] sm:$0xff]
      %v350 = vld [vmem:[%s198 + $0x450] sm:$0xff]
      %v351 = vld [vmem:[%s198 + $0x458] sm:$0xff]
      %v352 = vld [vmem:[%s198 + $0x460] sm:$0xff]
      %v353 = vld [vmem:[%s198 + $0x468] sm:$0xff]
      %v354 = vld [vmem:[%s198 + $0x470] sm:$0xff]
      %v355 = vld [vmem:[%s198 + $0x478] sm:$0xff]
      %v356 = vld [vmem:[%s198 + $0x480] sm:$0xff]
      %v357 = vld [vmem:[%s198 + $0x488] sm:$0xff]
      %v358 = vld [vmem:[%s198 + $0x490] sm:$0xff]
      %v359 = vld [vmem:[%s198 + $0x498] sm:$0xff]
      %v360 = vld [vmem:[%s198 + $0x4a0] sm:$0xff]
      %v361 = vld [vmem:[%s198 + $0x4a8] sm:$0xff]
      %v362 = vld [vmem:[%s198 + $0x4b0] sm:$0xff]
      %v363 = vld [vmem:[%s198 + $0x4b8] sm:$0xff]
      %v364 = vld [vmem:[%s198 + $0x4c0] sm:$0xff]
      %v365 = vld [vmem:[%s198 + $0x4c8] sm:$0xff]
      %v366 = vld [vmem:[%s198 + $0x4d0] sm:$0xff]
      %v367 = vld [vmem:[%s198 + $0x4d8] sm:$0xff]
      %v368 = vld [vmem:[%s198 + $0x4e0] sm:$0xff]
      %v369 = vld [vmem:[%s198 + $0x4e8] sm:$0xff]
      %v370 = vld [vmem:[%s198 + $0x4f0] sm:$0xff]
      %v371 = vld [vmem:[%s198 + $0x4f8] sm:$0xff]
      %v372 = vld [vmem:[%s198 + $0x500] sm:$0xff]
      %v373 = vld [vmem:[%s198 + $0x508] sm:$0xff]
      %v374 = vld [vmem:[%s198 + $0x510] sm:$0xff]
      %v375 = vld [vmem:[%s198 + $0x518] sm:$0xff]
      %v376 = vld [vmem:[%s198 + $0x520] sm:$0xff]
      %v377 = vld [vmem:[%s198 + $0x528] sm:$0xff]
      %v378 = vld [vmem:[%s198 + $0x530] sm:$0xff]
      %v379 = vld [vmem:[%s198 + $0x538] sm:$0xff]
      %v380 = vld [vmem:[%s198 + $0x540] sm:$0xff]
      %v381 = vld [vmem:[%s198 + $0x548] sm:$0xff]
      %v382 = vld [vmem:[%s198 + $0x550] sm:$0xff]
      %v383 = vld [vmem:[%s198 + $0x558] sm:$0xff]
      %v384 = vld [vmem:[%s198 + $0x560] sm:$0xff]
      %v385 = vld [vmem:[%s198 + $0x568] sm:$0xff]
      %v386 = vld [vmem:[%s198 + $0x570] sm:$0xff]
      %v387 = vld [vmem:[%s198 + $0x578] sm:$0xff]
      %v388 = vld [vmem:[%s198 + $0x580] sm:$0xff]
      %v389 = vld [vmem:[%s198 + $0x588] sm:$0xff]
      %v390 = vld [vmem:[%s198 + $0x590] sm:$0xff]
      %v391 = vld [vmem:[%s198 + $0x598] sm:$0xff]
      %v392 = vld [vmem:[%s198 + $0x5a0] sm:$0xff]
      %v393 = vld [vmem:[%s198 + $0x5a8] sm:$0xff]
      %v394 = vld [vmem:[%s198 + $0x5b0] sm:$0xff]
      %v395 = vld [vmem:[%s198 + $0x5b8] sm:$0xff]
      %v396 = vld [vmem:[%s198 + $0x5c0] sm:$0xff]
      %v397 = vld [vmem:[%s198 + $0x5c8] sm:$0xff]
      %v398 = vld [vmem:[%s198 + $0x5d0] sm:$0xff]
      %v399 = vld [vmem:[%s198 + $0x5d8] sm:$0xff]
      %v400 = vld [vmem:[%s198 + $0x5e0] sm:$0xff]
      %v401 = vld [vmem:[%s198 + $0x5e8] sm:$0xff]
      %v402 = vld [vmem:[%s198 + $0x5f0] sm:$0xff]
      %v403 = vld [vmem:[%s198 + $0x5f8] sm:$0xff]
      %v404 = vld [vmem:[%s198 + $0x600] sm:$0xff]
      %v405 = vld [vmem:[%s198 + $0x608] sm:$0xff]
      %v406 = vld [vmem:[%s198 + $0x610] sm:$0xff]
      %v407 = vld [vmem:[%s198 + $0x618] sm:$0xff]
      %v408 = vld [vmem:[%s198 + $0x620] sm:$0xff]
      %v409 = vld [vmem:[%s198 + $0x628] sm:$0xff]
      %v410 = vld [vmem:[%s198 + $0x630] sm:$0xff]
      %v411 = vld [vmem:[%s198 + $0x638] sm:$0xff]
      %v412 = vld [vmem:[%s198 + $0x640] sm:$0xff]
      %v413 = vld [vmem:[%s198 + $0x648] sm:$0xff]
      %v414 = vld [vmem:[%s198 + $0x650] sm:$0xff]
      %v415 = vld [vmem:[%s198 + $0x658] sm:$0xff]
      %v416 = vld [vmem:[%s198 + $0x660] sm:$0xff]
      %v417 = vld [vmem:[%s198 + $0x668] sm:$0xff]
      %v418 = vld [vmem:[%s198 + $0x670] sm:$0xff]
      %v419 = vld [vmem:[%s198 + $0x678] sm:$0xff]
      %v420 = vld [vmem:[%s198 + $0x680] sm:$0xff]
      %v421 = vld [vmem:[%s198 + $0x688] sm:$0xff]
      %v422 = vld [vmem:[%s198 + $0x690] sm:$0xff]
      %v423 = vld [vmem:[%s198 + $0x698] sm:$0xff]
      %v424 = vld [vmem:[%s198 + $0x6a0] sm:$0xff]
      %v425 = vld [vmem:[%s198 + $0x6a8] sm:$0xff]
      %v426 = vld [vmem:[%s198 + $0x6b0] sm:$0xff]
      %v427 = vld [vmem:[%s198 + $0x6b8] sm:$0xff]
      %v428 = vld [vmem:[%s198 + $0x6c0] sm:$0xff]
      %v429 = vld [vmem:[%s198 + $0x6c8] sm:$0xff]
      %v430 = vld [vmem:[%s198 + $0x6d0] sm:$0xff]
      %v431 = vld [vmem:[%s198 + $0x6d8] sm:$0xff]
      %v432 = vld [vmem:[%s198 + $0x6e0] sm:$0xff]
      %v433 = vld [vmem:[%s198 + $0x6e8] sm:$0xff]
      %v434 = vld [vmem:[%s198 + $0x6f0] sm:$0xff]
      %v435 = vld [vmem:[%s198 + $0x6f8] sm:$0xff]
      %v436 = vld [vmem:[%s198 + $0x700] sm:$0xff]
      %v437 = vld [vmem:[%s198 + $0x708] sm:$0xff]
      %v438 = vld [vmem:[%s198 + $0x710] sm:$0xff]
      %v439 = vld [vmem:[%s198 + $0x718] sm:$0xff]
      %v440 = vld [vmem:[%s198 + $0x720] sm:$0xff]
      %v441 = vld [vmem:[%s198 + $0x728] sm:$0xff]
      %v442 = vld [vmem:[%s198 + $0x730] sm:$0xff]
      %v443 = vld [vmem:[%s198 + $0x738] sm:$0xff]
      %v444 = vld [vmem:[%s198 + $0x740] sm:$0xff]
      %v445 = vld [vmem:[%s198 + $0x748] sm:$0xff]
      %v446 = vld [vmem:[%s198 + $0x750] sm:$0xff]
      %v447 = vld [vmem:[%s198 + $0x758] sm:$0xff]
      %v448 = vld [vmem:[%s198 + $0x760] sm:$0xff]
      %v449 = vld [vmem:[%s198 + $0x768] sm:$0xff]
      %v450 = vld [vmem:[%s198 + $0x770] sm:$0xff]
      %v451 = vld [vmem:[%s198 + $0x778] sm:$0xff]
      %v452 = vld [vmem:[%s198 + $0x780] sm:$0xff]
      %v453 = vld [vmem:[%s198 + $0x788] sm:$0xff]
      %v454 = vld [vmem:[%s198 + $0x790] sm:$0xff]
      %v455 = vld [vmem:[%s198 + $0x798] sm:$0xff]
      %v456 = vld [vmem:[%s198 + $0x7a0] sm:$0xff]
      %v457 = vld [vmem:[%s198 + $0x7a8] sm:$0xff]
      %v458 = vld [vmem:[%s198 + $0x7b0] sm:$0xff]
      %v459 = vld [vmem:[%s198 + $0x7b8] sm:$0xff]
      %v460 = vld [vmem:[%s198 + $0x7c0] sm:$0xff]
      %v461 = vld [vmem:[%s198 + $0x7c8] sm:$0xff]
      %v462 = vld [vmem:[%s198 + $0x7d0] sm:$0xff]
      %v463 = vld [vmem:[%s198 + $0x7d8] sm:$0xff]
      %v464 = vld [vmem:[%s198 + $0x7e0] sm:$0xff]
      %v465 = vld [vmem:[%s198 + $0x7e8] sm:$0xff]
      %v466 = vld [vmem:[%s198 + $0x7f0] sm:$0xff]
      %v467 = vld [vmem:[%s198 + $0x7f8] sm:$0xff]
      %v468 = vld [vmem:[%s2] sm:$0xf]
      %470 = vset.pattern.permute.xlu0 0
      %471 = vperm.xlu0 %470, %v468
      %v472 = vpop.permute.xlu0 %471
      %v730 = vunpack.c.l.b16 %v212
      %v731 = vunpack.c.h.b16 %v212
      %v732 = vunpack.c.l.b16 %v213
      %v733 = vunpack.c.h.b16 %v213
      %v734 = vunpack.c.l.b16 %v214
      %v735 = vunpack.c.h.b16 %v214
      %v736 = vunpack.c.l.b16 %v215
      %v737 = vunpack.c.h.b16 %v215
      %v738 = vunpack.c.l.b16 %v216
      %v739 = vunpack.c.h.b16 %v216
      %v740 = vunpack.c.l.b16 %v217
      %v741 = vunpack.c.h.b16 %v217
      %v742 = vunpack.c.l.b16 %v218
      %v743 = vunpack.c.h.b16 %v218
      %v744 = vunpack.c.l.b16 %v219
      %v745 = vunpack.c.h.b16 %v219
      %v746 = vunpack.c.l.b16 %v220
      %v747 = vunpack.c.h.b16 %v220
      %v748 = vunpack.c.l.b16 %v221
      %v749 = vunpack.c.h.b16 %v221
      %v750 = vunpack.c.l.b16 %v222
      %v751 = vunpack.c.h.b16 %v222
      %v752 = vunpack.c.l.b16 %v223
      %v753 = vunpack.c.h.b16 %v223
      %v754 = vunpack.c.l.b16 %v224
      %v755 = vunpack.c.h.b16 %v224
      %v756 = vunpack.c.l.b16 %v225
      %v757 = vunpack.c.h.b16 %v225
      %v758 = vunpack.c.l.b16 %v226
      %v759 = vunpack.c.h.b16 %v226
      %v760 = vunpack.c.l.b16 %v227
      %v761 = vunpack.c.h.b16 %v227
      %v762 = vunpack.c.l.b16 %v228
      %v763 = vunpack.c.h.b16 %v228
      %v764 = vunpack.c.l.b16 %v229
      %v765 = vunpack.c.h.b16 %v229
      %v766 = vunpack.c.l.b16 %v230
      %v767 = vunpack.c.h.b16 %v230
      %v768 = vunpack.c.l.b16 %v231
      %v769 = vunpack.c.h.b16 %v231
      %v770 = vunpack.c.l.b16 %v232
      %v771 = vunpack.c.h.b16 %v232
      %v772 = vunpack.c.l.b16 %v233
      %v773 = vunpack.c.h.b16 %v233
      %v774 = vunpack.c.l.b16 %v234
      %v775 = vunpack.c.h.b16 %v234
      %v776 = vunpack.c.l.b16 %v235
      %v777 = vunpack.c.h.b16 %v235
      %v778 = vunpack.c.l.b16 %v236
      %v779 = vunpack.c.h.b16 %v236
      %v780 = vunpack.c.l.b16 %v237
      %v781 = vunpack.c.h.b16 %v237
      %v782 = vunpack.c.l.b16 %v238
      %v783 = vunpack.c.h.b16 %v238
      %v784 = vunpack.c.l.b16 %v239
      %v785 = vunpack.c.h.b16 %v239
      %v786 = vunpack.c.l.b16 %v240
      %v787 = vunpack.c.h.b16 %v240
      %v788 = vunpack.c.l.b16 %v241
      %v789 = vunpack.c.h.b16 %v241
      %v790 = vunpack.c.l.b16 %v242
      %v791 = vunpack.c.h.b16 %v242
      %v792 = vunpack.c.l.b16 %v243
      %v793 = vunpack.c.h.b16 %v243
      %v794 = vunpack.c.l.b16 %v244
      %v795 = vunpack.c.h.b16 %v244
      %v796 = vunpack.c.l.b16 %v245
      %v797 = vunpack.c.h.b16 %v245
      %v798 = vunpack.c.l.b16 %v246
      %v799 = vunpack.c.h.b16 %v246
      %v800 = vunpack.c.l.b16 %v247
      %v801 = vunpack.c.h.b16 %v247
      %v802 = vunpack.c.l.b16 %v248
      %v803 = vunpack.c.h.b16 %v248
      %v804 = vunpack.c.l.b16 %v249
      %v805 = vunpack.c.h.b16 %v249
      %v806 = vunpack.c.l.b16 %v250
      %v807 = vunpack.c.h.b16 %v250
      %v808 = vunpack.c.l.b16 %v251
      %v809 = vunpack.c.h.b16 %v251
      %v810 = vunpack.c.l.b16 %v252
      %v811 = vunpack.c.h.b16 %v252
      %v812 = vunpack.c.l.b16 %v253
      %v813 = vunpack.c.h.b16 %v253
      %v814 = vunpack.c.l.b16 %v254
      %v815 = vunpack.c.h.b16 %v254
      %v816 = vunpack.c.l.b16 %v255
      %v817 = vunpack.c.h.b16 %v255
      %v818 = vunpack.c.l.b16 %v256
      %v819 = vunpack.c.h.b16 %v256
      %v820 = vunpack.c.l.b16 %v257
      %v821 = vunpack.c.h.b16 %v257
      %v822 = vunpack.c.l.b16 %v258
      %v823 = vunpack.c.h.b16 %v258
      %v824 = vunpack.c.l.b16 %v259
      %v825 = vunpack.c.h.b16 %v259
      %v826 = vunpack.c.l.b16 %v260
      %v827 = vunpack.c.h.b16 %v260
      %v828 = vunpack.c.l.b16 %v261
      %v829 = vunpack.c.h.b16 %v261
      %v830 = vunpack.c.l.b16 %v262
      %v831 = vunpack.c.h.b16 %v262
      %v832 = vunpack.c.l.b16 %v263
      %v833 = vunpack.c.h.b16 %v263
      %v834 = vunpack.c.l.b16 %v264
      %v835 = vunpack.c.h.b16 %v264
      %v836 = vunpack.c.l.b16 %v265
      %v837 = vunpack.c.h.b16 %v265
      %v838 = vunpack.c.l.b16 %v266
      %v839 = vunpack.c.h.b16 %v266
      %v840 = vunpack.c.l.b16 %v267
      %v841 = vunpack.c.h.b16 %v267
      %v842 = vunpack.c.l.b16 %v268
      %v843 = vunpack.c.h.b16 %v268
      %v844 = vunpack.c.l.b16 %v269
      %v845 = vunpack.c.h.b16 %v269
      %v846 = vunpack.c.l.b16 %v270
      %v847 = vunpack.c.h.b16 %v270
      %v848 = vunpack.c.l.b16 %v271
      %v849 = vunpack.c.h.b16 %v271
      %v850 = vunpack.c.l.b16 %v272
      %v851 = vunpack.c.h.b16 %v272
      %v852 = vunpack.c.l.b16 %v273
      %v853 = vunpack.c.h.b16 %v273
      %v854 = vunpack.c.l.b16 %v274
      %v855 = vunpack.c.h.b16 %v274
      %v856 = vunpack.c.l.b16 %v275
      %v857 = vunpack.c.h.b16 %v275
      %v858 = vunpack.c.l.b16 %v276
      %v859 = vunpack.c.h.b16 %v276
      %v860 = vunpack.c.l.b16 %v277
      %v861 = vunpack.c.h.b16 %v277
      %v862 = vunpack.c.l.b16 %v278
      %v863 = vunpack.c.h.b16 %v278
      %v864 = vunpack.c.l.b16 %v279
      %v865 = vunpack.c.h.b16 %v279
      %v866 = vunpack.c.l.b16 %v280
      %v867 = vunpack.c.h.b16 %v280
      %v868 = vunpack.c.l.b16 %v281
      %v869 = vunpack.c.h.b16 %v281
      %v870 = vunpack.c.l.b16 %v282
      %v871 = vunpack.c.h.b16 %v282
      %v872 = vunpack.c.l.b16 %v283
      %v873 = vunpack.c.h.b16 %v283
      %v874 = vunpack.c.l.b16 %v284
      %v875 = vunpack.c.h.b16 %v284
      %v876 = vunpack.c.l.b16 %v285
      %v877 = vunpack.c.h.b16 %v285
      %v878 = vunpack.c.l.b16 %v286
      %v879 = vunpack.c.h.b16 %v286
      %v880 = vunpack.c.l.b16 %v287
      %v881 = vunpack.c.h.b16 %v287
      %v882 = vunpack.c.l.b16 %v288
      %v883 = vunpack.c.h.b16 %v288
      %v884 = vunpack.c.l.b16 %v289
      %v885 = vunpack.c.h.b16 %v289
      %v886 = vunpack.c.l.b16 %v290
      %v887 = vunpack.c.h.b16 %v290
      %v888 = vunpack.c.l.b16 %v291
      %v889 = vunpack.c.h.b16 %v291
      %v890 = vunpack.c.l.b16 %v292
      %v891 = vunpack.c.h.b16 %v292
      %v892 = vunpack.c.l.b16 %v293
      %v893 = vunpack.c.h.b16 %v293
      %v894 = vunpack.c.l.b16 %v294
      %v895 = vunpack.c.h.b16 %v294
      %v896 = vunpack.c.l.b16 %v295
      %v897 = vunpack.c.h.b16 %v295
      %v898 = vunpack.c.l.b16 %v296
      %v899 = vunpack.c.h.b16 %v296
      %v900 = vunpack.c.l.b16 %v297
      %v901 = vunpack.c.h.b16 %v297
      %v902 = vunpack.c.l.b16 %v298
      %v903 = vunpack.c.h.b16 %v298
      %v904 = vunpack.c.l.b16 %v299
      %v905 = vunpack.c.h.b16 %v299
      %v906 = vunpack.c.l.b16 %v300
      %v907 = vunpack.c.h.b16 %v300
      %v908 = vunpack.c.l.b16 %v301
      %v909 = vunpack.c.h.b16 %v301
      %v910 = vunpack.c.l.b16 %v302
      %v911 = vunpack.c.h.b16 %v302
      %v912 = vunpack.c.l.b16 %v303
      %v913 = vunpack.c.h.b16 %v303
      %v914 = vunpack.c.l.b16 %v304
      %v915 = vunpack.c.h.b16 %v304
      %v916 = vunpack.c.l.b16 %v305
      %v917 = vunpack.c.h.b16 %v305
      %v918 = vunpack.c.l.b16 %v306
      %v919 = vunpack.c.h.b16 %v306
      %v920 = vunpack.c.l.b16 %v307
      %v921 = vunpack.c.h.b16 %v307
      %v922 = vunpack.c.l.b16 %v308
      %v923 = vunpack.c.h.b16 %v308
      %v924 = vunpack.c.l.b16 %v309
      %v925 = vunpack.c.h.b16 %v309
      %v926 = vunpack.c.l.b16 %v310
      %v927 = vunpack.c.h.b16 %v310
      %v928 = vunpack.c.l.b16 %v311
      %v929 = vunpack.c.h.b16 %v311
      %v930 = vunpack.c.l.b16 %v312
      %v931 = vunpack.c.h.b16 %v312
      %v932 = vunpack.c.l.b16 %v313
      %v933 = vunpack.c.h.b16 %v313
      %v934 = vunpack.c.l.b16 %v314
      %v935 = vunpack.c.h.b16 %v314
      %v936 = vunpack.c.l.b16 %v315
      %v937 = vunpack.c.h.b16 %v315
      %v938 = vunpack.c.l.b16 %v316
      %v939 = vunpack.c.h.b16 %v316
      %v940 = vunpack.c.l.b16 %v317
      %v941 = vunpack.c.h.b16 %v317
      %v942 = vunpack.c.l.b16 %v318
      %v943 = vunpack.c.h.b16 %v318
      %v944 = vunpack.c.l.b16 %v319
      %v945 = vunpack.c.h.b16 %v319
      %v946 = vunpack.c.l.b16 %v320
      %v947 = vunpack.c.h.b16 %v320
      %v948 = vunpack.c.l.b16 %v321
      %v949 = vunpack.c.h.b16 %v321
      %v950 = vunpack.c.l.b16 %v322
      %v951 = vunpack.c.h.b16 %v322
      %v952 = vunpack.c.l.b16 %v323
      %v953 = vunpack.c.h.b16 %v323
      %v954 = vunpack.c.l.b16 %v324
      %v955 = vunpack.c.h.b16 %v324
      %v956 = vunpack.c.l.b16 %v325
      %v957 = vunpack.c.h.b16 %v325
      %v958 = vunpack.c.l.b16 %v326
      %v959 = vunpack.c.h.b16 %v326
      %v960 = vunpack.c.l.b16 %v327
      %v961 = vunpack.c.h.b16 %v327
      %v962 = vunpack.c.l.b16 %v328
      %v963 = vunpack.c.h.b16 %v328
      %v964 = vunpack.c.l.b16 %v329
      %v965 = vunpack.c.h.b16 %v329
      %v966 = vunpack.c.l.b16 %v330
      %v967 = vunpack.c.h.b16 %v330
      %v968 = vunpack.c.l.b16 %v331
      %v969 = vunpack.c.h.b16 %v331
      %v970 = vunpack.c.l.b16 %v332
      %v971 = vunpack.c.h.b16 %v332
      %v972 = vunpack.c.l.b16 %v333
      %v973 = vunpack.c.h.b16 %v333
      %v974 = vunpack.c.l.b16 %v334
      %v975 = vunpack.c.h.b16 %v334
      %v976 = vunpack.c.l.b16 %v335
      %v977 = vunpack.c.h.b16 %v335
      %v978 = vunpack.c.l.b16 %v336
      %v979 = vunpack.c.h.b16 %v336
      %v980 = vunpack.c.l.b16 %v337
      %v981 = vunpack.c.h.b16 %v337
      %v982 = vunpack.c.l.b16 %v338
      %v983 = vunpack.c.h.b16 %v338
      %v984 = vunpack.c.l.b16 %v339
      %v985 = vunpack.c.h.b16 %v339
      %v986 = vunpack.c.l.b16 %v340
      %v987 = vunpack.c.h.b16 %v340
      %v988 = vunpack.c.l.b16 %v341
      %v989 = vunpack.c.h.b16 %v341
      %v990 = vunpack.c.l.b16 %v342
      %v991 = vunpack.c.h.b16 %v342
      %v992 = vunpack.c.l.b16 %v343
      %v993 = vunpack.c.h.b16 %v343
      %v994 = vunpack.c.l.b16 %v344
      %v995 = vunpack.c.h.b16 %v344
      %v996 = vunpack.c.l.b16 %v345
      %v997 = vunpack.c.h.b16 %v345
      %v998 = vunpack.c.l.b16 %v346
      %v999 = vunpack.c.h.b16 %v346
      %v1000 = vunpack.c.l.b16 %v347
      %v1001 = vunpack.c.h.b16 %v347
      %v1002 = vunpack.c.l.b16 %v348
      %v1003 = vunpack.c.h.b16 %v348
      %v1004 = vunpack.c.l.b16 %v349
      %v1005 = vunpack.c.h.b16 %v349
      %v1006 = vunpack.c.l.b16 %v350
      %v1007 = vunpack.c.h.b16 %v350
      %v1008 = vunpack.c.l.b16 %v351
      %v1009 = vunpack.c.h.b16 %v351
      %v1010 = vunpack.c.l.b16 %v352
      %v1011 = vunpack.c.h.b16 %v352
      %v1012 = vunpack.c.l.b16 %v353
      %v1013 = vunpack.c.h.b16 %v353
      %v1014 = vunpack.c.l.b16 %v354
      %v1015 = vunpack.c.h.b16 %v354
      %v1016 = vunpack.c.l.b16 %v355
      %v1017 = vunpack.c.h.b16 %v355
      %v1018 = vunpack.c.l.b16 %v356
      %v1019 = vunpack.c.h.b16 %v356
      %v1020 = vunpack.c.l.b16 %v357
      %v1021 = vunpack.c.h.b16 %v357
      %v1022 = vunpack.c.l.b16 %v358
      %v1023 = vunpack.c.h.b16 %v358
      %v1024 = vunpack.c.l.b16 %v359
      %v1025 = vunpack.c.h.b16 %v359
      %v1026 = vunpack.c.l.b16 %v360
      %v1027 = vunpack.c.h.b16 %v360
      %v1028 = vunpack.c.l.b16 %v361
      %v1029 = vunpack.c.h.b16 %v361
      %v1030 = vunpack.c.l.b16 %v362
      %v1031 = vunpack.c.h.b16 %v362
      %v1032 = vunpack.c.l.b16 %v363
      %v1033 = vunpack.c.h.b16 %v363
      %v1034 = vunpack.c.l.b16 %v364
      %v1035 = vunpack.c.h.b16 %v364
      %v1036 = vunpack.c.l.b16 %v365
      %v1037 = vunpack.c.h.b16 %v365
      %v1038 = vunpack.c.l.b16 %v366
      %v1039 = vunpack.c.h.b16 %v366
      %v1040 = vunpack.c.l.b16 %v367
      %v1041 = vunpack.c.h.b16 %v367
      %v1042 = vunpack.c.l.b16 %v368
      %v1043 = vunpack.c.h.b16 %v368
      %v1044 = vunpack.c.l.b16 %v369
      %v1045 = vunpack.c.h.b16 %v369
      %v1046 = vunpack.c.l.b16 %v370
      %v1047 = vunpack.c.h.b16 %v370
      %v1048 = vunpack.c.l.b16 %v371
      %v1049 = vunpack.c.h.b16 %v371
      %v1050 = vunpack.c.l.b16 %v372
      %v1051 = vunpack.c.h.b16 %v372
      %v1052 = vunpack.c.l.b16 %v373
      %v1053 = vunpack.c.h.b16 %v373
      %v1054 = vunpack.c.l.b16 %v374
      %v1055 = vunpack.c.h.b16 %v374
      %v1056 = vunpack.c.l.b16 %v375
      %v1057 = vunpack.c.h.b16 %v375
      %v1058 = vunpack.c.l.b16 %v376
      %v1059 = vunpack.c.h.b16 %v376
      %v1060 = vunpack.c.l.b16 %v377
      %v1061 = vunpack.c.h.b16 %v377
      %v1062 = vunpack.c.l.b16 %v378
      %v1063 = vunpack.c.h.b16 %v378
      %v1064 = vunpack.c.l.b16 %v379
      %v1065 = vunpack.c.h.b16 %v379
      %v1066 = vunpack.c.l.b16 %v380
      %v1067 = vunpack.c.h.b16 %v380
      %v1068 = vunpack.c.l.b16 %v381
      %v1069 = vunpack.c.h.b16 %v381
      %v1070 = vunpack.c.l.b16 %v382
      %v1071 = vunpack.c.h.b16 %v382
      %v1072 = vunpack.c.l.b16 %v383
      %v1073 = vunpack.c.h.b16 %v383
      %v1074 = vunpack.c.l.b16 %v384
      %v1075 = vunpack.c.h.b16 %v384
      %v1076 = vunpack.c.l.b16 %v385
      %v1077 = vunpack.c.h.b16 %v385
      %v1078 = vunpack.c.l.b16 %v386
      %v1079 = vunpack.c.h.b16 %v386
      %v1080 = vunpack.c.l.b16 %v387
      %v1081 = vunpack.c.h.b16 %v387
      %v1082 = vunpack.c.l.b16 %v388
      %v1083 = vunpack.c.h.b16 %v388
      %v1084 = vunpack.c.l.b16 %v389
      %v1085 = vunpack.c.h.b16 %v389
      %v1086 = vunpack.c.l.b16 %v390
      %v1087 = vunpack.c.h.b16 %v390
      %v1088 = vunpack.c.l.b16 %v391
      %v1089 = vunpack.c.h.b16 %v391
      %v1090 = vunpack.c.l.b16 %v392
      %v1091 = vunpack.c.h.b16 %v392
      %v1092 = vunpack.c.l.b16 %v393
      %v1093 = vunpack.c.h.b16 %v393
      %v1094 = vunpack.c.l.b16 %v394
      %v1095 = vunpack.c.h.b16 %v394
      %v1096 = vunpack.c.l.b16 %v395
      %v1097 = vunpack.c.h.b16 %v395
      %v1098 = vunpack.c.l.b16 %v396
      %v1099 = vunpack.c.h.b16 %v396
      %v1100 = vunpack.c.l.b16 %v397
      %v1101 = vunpack.c.h.b16 %v397
      %v1102 = vunpack.c.l.b16 %v398
      %v1103 = vunpack.c.h.b16 %v398
      %v1104 = vunpack.c.l.b16 %v399
      %v1105 = vunpack.c.h.b16 %v399
      %v1106 = vunpack.c.l.b16 %v400
      %v1107 = vunpack.c.h.b16 %v400
      %v1108 = vunpack.c.l.b16 %v401
      %v1109 = vunpack.c.h.b16 %v401
      %v1110 = vunpack.c.l.b16 %v402
      %v1111 = vunpack.c.h.b16 %v402
      %v1112 = vunpack.c.l.b16 %v403
      %v1113 = vunpack.c.h.b16 %v403
      %v1114 = vunpack.c.l.b16 %v404
      %v1115 = vunpack.c.h.b16 %v404
      %v1116 = vunpack.c.l.b16 %v405
      %v1117 = vunpack.c.h.b16 %v405
      %v1118 = vunpack.c.l.b16 %v406
      %v1119 = vunpack.c.h.b16 %v406
      %v1120 = vunpack.c.l.b16 %v407
      %v1121 = vunpack.c.h.b16 %v407
      %v1122 = vunpack.c.l.b16 %v408
      %v1123 = vunpack.c.h.b16 %v408
      %v1124 = vunpack.c.l.b16 %v409
      %v1125 = vunpack.c.h.b16 %v409
      %v1126 = vunpack.c.l.b16 %v410
      %v1127 = vunpack.c.h.b16 %v410
      %v1128 = vunpack.c.l.b16 %v411
      %v1129 = vunpack.c.h.b16 %v411
      %v1130 = vunpack.c.l.b16 %v412
      %v1131 = vunpack.c.h.b16 %v412
      %v1132 = vunpack.c.l.b16 %v413
      %v1133 = vunpack.c.h.b16 %v413
      %v1134 = vunpack.c.l.b16 %v414
      %v1135 = vunpack.c.h.b16 %v414
      %v1136 = vunpack.c.l.b16 %v415
      %v1137 = vunpack.c.h.b16 %v415
      %v1138 = vunpack.c.l.b16 %v416
      %v1139 = vunpack.c.h.b16 %v416
      %v1140 = vunpack.c.l.b16 %v417
      %v1141 = vunpack.c.h.b16 %v417
      %v1142 = vunpack.c.l.b16 %v418
      %v1143 = vunpack.c.h.b16 %v418
      %v1144 = vunpack.c.l.b16 %v419
      %v1145 = vunpack.c.h.b16 %v419
      %v1146 = vunpack.c.l.b16 %v420
      %v1147 = vunpack.c.h.b16 %v420
      %v1148 = vunpack.c.l.b16 %v421
      %v1149 = vunpack.c.h.b16 %v421
      %v1150 = vunpack.c.l.b16 %v422
      %v1151 = vunpack.c.h.b16 %v422
      %v1152 = vunpack.c.l.b16 %v423
      %v1153 = vunpack.c.h.b16 %v423
      %v1154 = vunpack.c.l.b16 %v424
      %v1155 = vunpack.c.h.b16 %v424
      %v1156 = vunpack.c.l.b16 %v425
      %v1157 = vunpack.c.h.b16 %v425
      %v1158 = vunpack.c.l.b16 %v426
      %v1159 = vunpack.c.h.b16 %v426
      %v1160 = vunpack.c.l.b16 %v427
      %v1161 = vunpack.c.h.b16 %v427
      %v1162 = vunpack.c.l.b16 %v428
      %v1163 = vunpack.c.h.b16 %v428
      %v1164 = vunpack.c.l.b16 %v429
      %v1165 = vunpack.c.h.b16 %v429
      %v1166 = vunpack.c.l.b16 %v430
      %v1167 = vunpack.c.h.b16 %v430
      %v1168 = vunpack.c.l.b16 %v431
      %v1169 = vunpack.c.h.b16 %v431
      %v1170 = vunpack.c.l.b16 %v432
      %v1171 = vunpack.c.h.b16 %v432
      %v1172 = vunpack.c.l.b16 %v433
      %v1173 = vunpack.c.h.b16 %v433
      %v1174 = vunpack.c.l.b16 %v434
      %v1175 = vunpack.c.h.b16 %v434
      %v1176 = vunpack.c.l.b16 %v435
      %v1177 = vunpack.c.h.b16 %v435
      %v1178 = vunpack.c.l.b16 %v436
      %v1179 = vunpack.c.h.b16 %v436
      %v1180 = vunpack.c.l.b16 %v437
      %v1181 = vunpack.c.h.b16 %v437
      %v1182 = vunpack.c.l.b16 %v438
      %v1183 = vunpack.c.h.b16 %v438
      %v1184 = vunpack.c.l.b16 %v439
      %v1185 = vunpack.c.h.b16 %v439
      %v1186 = vunpack.c.l.b16 %v440
      %v1187 = vunpack.c.h.b16 %v440
      %v1188 = vunpack.c.l.b16 %v441
      %v1189 = vunpack.c.h.b16 %v441
      %v1190 = vunpack.c.l.b16 %v442
      %v1191 = vunpack.c.h.b16 %v442
      %v1192 = vunpack.c.l.b16 %v443
      %v1193 = vunpack.c.h.b16 %v443
      %v1194 = vunpack.c.l.b16 %v444
      %v1195 = vunpack.c.h.b16 %v444
      %v1196 = vunpack.c.l.b16 %v445
      %v1197 = vunpack.c.h.b16 %v445
      %v1198 = vunpack.c.l.b16 %v446
      %v1199 = vunpack.c.h.b16 %v446
      %v1200 = vunpack.c.l.b16 %v447
      %v1201 = vunpack.c.h.b16 %v447
      %v1202 = vunpack.c.l.b16 %v448
      %v1203 = vunpack.c.h.b16 %v448
      %v1204 = vunpack.c.l.b16 %v449
      %v1205 = vunpack.c.h.b16 %v449
      %v1206 = vunpack.c.l.b16 %v450
      %v1207 = vunpack.c.h.b16 %v450
      %v1208 = vunpack.c.l.b16 %v451
      %v1209 = vunpack.c.h.b16 %v451
      %v1210 = vunpack.c.l.b16 %v452
      %v1211 = vunpack.c.h.b16 %v452
      %v1212 = vunpack.c.l.b16 %v453
      %v1213 = vunpack.c.h.b16 %v453
      %v1214 = vunpack.c.l.b16 %v454
      %v1215 = vunpack.c.h.b16 %v454
      %v1216 = vunpack.c.l.b16 %v455
      %v1217 = vunpack.c.h.b16 %v455
      %v1218 = vunpack.c.l.b16 %v456
      %v1219 = vunpack.c.h.b16 %v456
      %v1220 = vunpack.c.l.b16 %v457
      %v1221 = vunpack.c.h.b16 %v457
      %v1222 = vunpack.c.l.b16 %v458
      %v1223 = vunpack.c.h.b16 %v458
      %v1224 = vunpack.c.l.b16 %v459
      %v1225 = vunpack.c.h.b16 %v459
      %v1226 = vunpack.c.l.b16 %v460
      %v1227 = vunpack.c.h.b16 %v460
      %v1228 = vunpack.c.l.b16 %v461
      %v1229 = vunpack.c.h.b16 %v461
      %v1230 = vunpack.c.l.b16 %v462
      %v1231 = vunpack.c.h.b16 %v462
      %v1232 = vunpack.c.l.b16 %v463
      %v1233 = vunpack.c.h.b16 %v463
      %v1234 = vunpack.c.l.b16 %v464
      %v1235 = vunpack.c.h.b16 %v464
      %v1236 = vunpack.c.l.b16 %v465
      %v1237 = vunpack.c.h.b16 %v465
      %v1238 = vunpack.c.l.b16 %v466
      %v1239 = vunpack.c.h.b16 %v466
      %v1240 = vunpack.c.l.b16 %v467
      %v1241 = vunpack.c.h.b16 %v467
      %v1242 = vpack.c.b16 %v762, %v730
      %v1243 = vpack.c.b16 %v763, %v731
      %v1244 = vpack.c.b16 %v764, %v732
      %v1245 = vpack.c.b16 %v765, %v733
      %v1246 = vpack.c.b16 %v766, %v734
      %v1247 = vpack.c.b16 %v767, %v735
      %v1248 = vpack.c.b16 %v768, %v736
      %v1249 = vpack.c.b16 %v769, %v737
      %v1250 = vpack.c.b16 %v770, %v738
      %v1251 = vpack.c.b16 %v771, %v739
      %v1252 = vpack.c.b16 %v772, %v740
      %v1253 = vpack.c.b16 %v773, %v741
      %v1254 = vpack.c.b16 %v774, %v742
      %v1255 = vpack.c.b16 %v775, %v743
      %v1256 = vpack.c.b16 %v776, %v744
      %v1257 = vpack.c.b16 %v777, %v745
      %v1258 = vpack.c.b16 %v778, %v746
      %v1259 = vpack.c.b16 %v779, %v747
      %v1260 = vpack.c.b16 %v780, %v748
      %v1261 = vpack.c.b16 %v781, %v749
      %v1262 = vpack.c.b16 %v782, %v750
      %v1263 = vpack.c.b16 %v783, %v751
      %v1264 = vpack.c.b16 %v784, %v752
      %v1265 = vpack.c.b16 %v785, %v753
      %v1266 = vpack.c.b16 %v786, %v754
      %v1267 = vpack.c.b16 %v787, %v755
      %v1268 = vpack.c.b16 %v788, %v756
      %v1269 = vpack.c.b16 %v789, %v757
      %v1270 = vpack.c.b16 %v790, %v758
      %v1271 = vpack.c.b16 %v791, %v759
      %v1272 = vpack.c.b16 %v792, %v760
      %v1273 = vpack.c.b16 %v793, %v761
      %v1274 = vpack.c.b16 %v826, %v794
      %v1275 = vpack.c.b16 %v827, %v795
      %v1276 = vpack.c.b16 %v828, %v796
      %v1277 = vpack.c.b16 %v829, %v797
      %v1278 = vpack.c.b16 %v830, %v798
      %v1279 = vpack.c.b16 %v831, %v799
      %v1280 = vpack.c.b16 %v832, %v800
      %v1281 = vpack.c.b16 %v833, %v801
      %v1282 = vpack.c.b16 %v834, %v802
      %v1283 = vpack.c.b16 %v835, %v803
      %v1284 = vpack.c.b16 %v836, %v804
      %v1285 = vpack.c.b16 %v837, %v805
      %v1286 = vpack.c.b16 %v838, %v806
      %v1287 = vpack.c.b16 %v839, %v807
      %v1288 = vpack.c.b16 %v840, %v808
      %v1289 = vpack.c.b16 %v841, %v809
      %v1290 = vpack.c.b16 %v842, %v810
      %v1291 = vpack.c.b16 %v843, %v811
      %v1292 = vpack.c.b16 %v844, %v812
      %v1293 = vpack.c.b16 %v845, %v813
      %v1294 = vpack.c.b16 %v846, %v814
      %v1295 = vpack.c.b16 %v847, %v815
      %v1296 = vpack.c.b16 %v848, %v816
      %v1297 = vpack.c.b16 %v849, %v817
      %v1298 = vpack.c.b16 %v850, %v818
      %v1299 = vpack.c.b16 %v851, %v819
      %v1300 = vpack.c.b16 %v852, %v820
      %v1301 = vpack.c.b16 %v853, %v821
      %v1302 = vpack.c.b16 %v854, %v822
      %v1303 = vpack.c.b16 %v855, %v823
      %v1304 = vpack.c.b16 %v856, %v824
      %v1305 = vpack.c.b16 %v857, %v825
      %v1306 = vpack.c.b16 %v890, %v858
      %v1307 = vpack.c.b16 %v891, %v859
      %v1308 = vpack.c.b16 %v892, %v860
      %v1309 = vpack.c.b16 %v893, %v861
      %v1310 = vpack.c.b16 %v894, %v862
      %v1311 = vpack.c.b16 %v895, %v863
      %v1312 = vpack.c.b16 %v896, %v864
      %v1313 = vpack.c.b16 %v897, %v865
      %v1314 = vpack.c.b16 %v898, %v866
      %v1315 = vpack.c.b16 %v899, %v867
      %v1316 = vpack.c.b16 %v900, %v868
      %v1317 = vpack.c.b16 %v901, %v869
      %v1318 = vpack.c.b16 %v902, %v870
      %v1319 = vpack.c.b16 %v903, %v871
      %v1320 = vpack.c.b16 %v904, %v872
      %v1321 = vpack.c.b16 %v905, %v873
      %v1322 = vpack.c.b16 %v906, %v874
      %v1323 = vpack.c.b16 %v907, %v875
      %v1324 = vpack.c.b16 %v908, %v876
      %v1325 = vpack.c.b16 %v909, %v877
      %v1326 = vpack.c.b16 %v910, %v878
      %v1327 = vpack.c.b16 %v911, %v879
      %v1328 = vpack.c.b16 %v912, %v880
      %v1329 = vpack.c.b16 %v913, %v881
      %v1330 = vpack.c.b16 %v914, %v882
      %v1331 = vpack.c.b16 %v915, %v883
      %v1332 = vpack.c.b16 %v916, %v884
      %v1333 = vpack.c.b16 %v917, %v885
      %v1334 = vpack.c.b16 %v918, %v886
      %v1335 = vpack.c.b16 %v919, %v887
      %v1336 = vpack.c.b16 %v920, %v888
      %v1337 = vpack.c.b16 %v921, %v889
      %v1338 = vpack.c.b16 %v954, %v922
      %v1339 = vpack.c.b16 %v955, %v923
      %v1340 = vpack.c.b16 %v956, %v924
      %v1341 = vpack.c.b16 %v957, %v925
      %v1342 = vpack.c.b16 %v958, %v926
      %v1343 = vpack.c.b16 %v959, %v927
      %v1344 = vpack.c.b16 %v960, %v928
      %v1345 = vpack.c.b16 %v961, %v929
      %v1346 = vpack.c.b16 %v962, %v930
      %v1347 = vpack.c.b16 %v963, %v931
      %v1348 = vpack.c.b16 %v964, %v932
      %v1349 = vpack.c.b16 %v965, %v933
      %v1350 = vpack.c.b16 %v966, %v934
      %v1351 = vpack.c.b16 %v967, %v935
      %v1352 = vpack.c.b16 %v968, %v936
      %v1353 = vpack.c.b16 %v969, %v937
      %v1354 = vpack.c.b16 %v970, %v938
      %v1355 = vpack.c.b16 %v971, %v939
      %v1356 = vpack.c.b16 %v972, %v940
      %v1357 = vpack.c.b16 %v973, %v941
      %v1358 = vpack.c.b16 %v974, %v942
      %v1359 = vpack.c.b16 %v975, %v943
      %v1360 = vpack.c.b16 %v976, %v944
      %v1361 = vpack.c.b16 %v977, %v945
      %v1362 = vpack.c.b16 %v978, %v946
      %v1363 = vpack.c.b16 %v979, %v947
      %v1364 = vpack.c.b16 %v980, %v948
      %v1365 = vpack.c.b16 %v981, %v949
      %v1366 = vpack.c.b16 %v982, %v950
      %v1367 = vpack.c.b16 %v983, %v951
      %v1368 = vpack.c.b16 %v984, %v952
      %v1369 = vpack.c.b16 %v985, %v953
      %v1370 = vpack.c.b16 %v1018, %v986
      %v1371 = vpack.c.b16 %v1019, %v987
      %v1372 = vpack.c.b16 %v1020, %v988
      %v1373 = vpack.c.b16 %v1021, %v989
      %v1374 = vpack.c.b16 %v1022, %v990
      %v1375 = vpack.c.b16 %v1023, %v991
      %v1376 = vpack.c.b16 %v1024, %v992
      %v1377 = vpack.c.b16 %v1025, %v993
      %v1378 = vpack.c.b16 %v1026, %v994
      %v1379 = vpack.c.b16 %v1027, %v995
      %v1380 = vpack.c.b16 %v1028, %v996
      %v1381 = vpack.c.b16 %v1029, %v997
      %v1382 = vpack.c.b16 %v1030, %v998
      %v1383 = vpack.c.b16 %v1031, %v999
      %v1384 = vpack.c.b16 %v1032, %v1000
      %v1385 = vpack.c.b16 %v1033, %v1001
      %v1386 = vpack.c.b16 %v1034, %v1002
      %v1387 = vpack.c.b16 %v1035, %v1003
      %v1388 = vpack.c.b16 %v1036, %v1004
      %v1389 = vpack.c.b16 %v1037, %v1005
      %v1390 = vpack.c.b16 %v1038, %v1006
      %v1391 = vpack.c.b16 %v1039, %v1007
      %v1392 = vpack.c.b16 %v1040, %v1008
      %v1393 = vpack.c.b16 %v1041, %v1009
      %v1394 = vpack.c.b16 %v1042, %v1010
      %v1395 = vpack.c.b16 %v1043, %v1011
      %v1396 = vpack.c.b16 %v1044, %v1012
      %v1397 = vpack.c.b16 %v1045, %v1013
      %v1398 = vpack.c.b16 %v1046, %v1014
      %v1399 = vpack.c.b16 %v1047, %v1015
      %v1400 = vpack.c.b16 %v1048, %v1016
      %v1401 = vpack.c.b16 %v1049, %v1017
      %v1402 = vpack.c.b16 %v1082, %v1050
      %v1403 = vpack.c.b16 %v1083, %v1051
      %v1404 = vpack.c.b16 %v1084, %v1052
      %v1405 = vpack.c.b16 %v1085, %v1053
      %v1406 = vpack.c.b16 %v1086, %v1054
      %v1407 = vpack.c.b16 %v1087, %v1055
      %v1408 = vpack.c.b16 %v1088, %v1056
      %v1409 = vpack.c.b16 %v1089, %v1057
      %v1410 = vpack.c.b16 %v1090, %v1058
      %v1411 = vpack.c.b16 %v1091, %v1059
      %v1412 = vpack.c.b16 %v1092, %v1060
      %v1413 = vpack.c.b16 %v1093, %v1061
      %v1414 = vpack.c.b16 %v1094, %v1062
      %v1415 = vpack.c.b16 %v1095, %v1063
      %v1416 = vpack.c.b16 %v1096, %v1064
      %v1417 = vpack.c.b16 %v1097, %v1065
      %v1418 = vpack.c.b16 %v1098, %v1066
      %v1419 = vpack.c.b16 %v1099, %v1067
      %v1420 = vpack.c.b16 %v1100, %v1068
      %v1421 = vpack.c.b16 %v1101, %v1069
      %v1422 = vpack.c.b16 %v1102, %v1070
      %v1423 = vpack.c.b16 %v1103, %v1071
      %v1424 = vpack.c.b16 %v1104, %v1072
      %v1425 = vpack.c.b16 %v1105, %v1073
      %v1426 = vpack.c.b16 %v1106, %v1074
      %v1427 = vpack.c.b16 %v1107, %v1075
      %v1428 = vpack.c.b16 %v1108, %v1076
      %v1429 = vpack.c.b16 %v1109, %v1077
      %v1430 = vpack.c.b16 %v1110, %v1078
      %v1431 = vpack.c.b16 %v1111, %v1079
      %v1432 = vpack.c.b16 %v1112, %v1080
      %v1433 = vpack.c.b16 %v1113, %v1081
      %v1434 = vpack.c.b16 %v1146, %v1114
      %v1435 = vpack.c.b16 %v1147, %v1115
      %v1436 = vpack.c.b16 %v1148, %v1116
      %v1437 = vpack.c.b16 %v1149, %v1117
      %v1438 = vpack.c.b16 %v1150, %v1118
      %v1439 = vpack.c.b16 %v1151, %v1119
      %v1440 = vpack.c.b16 %v1152, %v1120
      %v1441 = vpack.c.b16 %v1153, %v1121
      %v1442 = vpack.c.b16 %v1154, %v1122
      %v1443 = vpack.c.b16 %v1155, %v1123
      %v1444 = vpack.c.b16 %v1156, %v1124
      %v1445 = vpack.c.b16 %v1157, %v1125
      %v1446 = vpack.c.b16 %v1158, %v1126
      %v1447 = vpack.c.b16 %v1159, %v1127
      %v1448 = vpack.c.b16 %v1160, %v1128
      %v1449 = vpack.c.b16 %v1161, %v1129
      %v1450 = vpack.c.b16 %v1162, %v1130
      %v1451 = vpack.c.b16 %v1163, %v1131
      %v1452 = vpack.c.b16 %v1164, %v1132
      %v1453 = vpack.c.b16 %v1165, %v1133
      %v1454 = vpack.c.b16 %v1166, %v1134
      %v1455 = vpack.c.b16 %v1167, %v1135
      %v1456 = vpack.c.b16 %v1168, %v1136
      %v1457 = vpack.c.b16 %v1169, %v1137
      %v1458 = vpack.c.b16 %v1170, %v1138
      %v1459 = vpack.c.b16 %v1171, %v1139
      %v1460 = vpack.c.b16 %v1172, %v1140
      %v1461 = vpack.c.b16 %v1173, %v1141
      %v1462 = vpack.c.b16 %v1174, %v1142
      %v1463 = vpack.c.b16 %v1175, %v1143
      %v1464 = vpack.c.b16 %v1176, %v1144
      %v1465 = vpack.c.b16 %v1177, %v1145
      %v1466 = vpack.c.b16 %v1210, %v1178
      %v1467 = vpack.c.b16 %v1211, %v1179
      %v1468 = vpack.c.b16 %v1212, %v1180
      %v1469 = vpack.c.b16 %v1213, %v1181
      %v1470 = vpack.c.b16 %v1214, %v1182
      %v1471 = vpack.c.b16 %v1215, %v1183
      %v1472 = vpack.c.b16 %v1216, %v1184
      %v1473 = vpack.c.b16 %v1217, %v1185
      %v1474 = vpack.c.b16 %v1218, %v1186
      %v1475 = vpack.c.b16 %v1219, %v1187
      %v1476 = vpack.c.b16 %v1220, %v1188
      %v1477 = vpack.c.b16 %v1221, %v1189
      %v1478 = vpack.c.b16 %v1222, %v1190
      %v1479 = vpack.c.b16 %v1223, %v1191
      %v1480 = vpack.c.b16 %v1224, %v1192
      %v1481 = vpack.c.b16 %v1225, %v1193
      %v1482 = vpack.c.b16 %v1226, %v1194
      %v1483 = vpack.c.b16 %v1227, %v1195
      %v1484 = vpack.c.b16 %v1228, %v1196
      %v1485 = vpack.c.b16 %v1229, %v1197
      %v1486 = vpack.c.b16 %v1230, %v1198
      %v1487 = vpack.c.b16 %v1231, %v1199
      %v1488 = vpack.c.b16 %v1232, %v1200
      %v1489 = vpack.c.b16 %v1233, %v1201
      %v1490 = vpack.c.b16 %v1234, %v1202
      %v1491 = vpack.c.b16 %v1235, %v1203
      %v1492 = vpack.c.b16 %v1236, %v1204
      %v1493 = vpack.c.b16 %v1237, %v1205
      %v1494 = vpack.c.b16 %v1238, %v1206
      %v1495 = vpack.c.b16 %v1239, %v1207
      %v1496 = vpack.c.b16 %v1240, %v1208
      %v1497 = vpack.c.b16 %v1241, %v1209
      %1754 = vmatprep.subr.bf16.mxu0 %v1467
      %1755 = vmatpush1.bf16.msra.mxu0 %v1466
      %1756 = vmatprep.subr.bf16.mxu0 %v1435
      %1757 = vmatpush1.bf16.msra.mxu0 %v1434
      %1758 = vmatprep.subr.bf16.mxu0 %v1403
      %1759 = vmatpush1.bf16.msra.mxu0 %v1402
      %1760 = vmatprep.subr.bf16.mxu0 %v1371
      %1761 = vmatpush1.bf16.msra.mxu0 %v1370
      %1762 = vmatprep.subr.bf16.mxu0 %v1339
      %1763 = vmatpush1.bf16.msra.mxu0 %v1338
      %1764 = vmatprep.subr.bf16.mxu0 %v1307
      %1765 = vmatpush1.bf16.msra.mxu0 %v1306
      %1766 = vmatprep.subr.bf16.mxu0 %v1275
      %1767 = vmatpush1.bf16.msra.mxu0 %v1274
      %1768 = vmatprep.subr.bf16.mxu0 %v1243
      %1769 = vmatpush1.bf16.msra.mxu0 %v1242
      %1770 = vmatprep.subr.bf16.mxu0 0
      %1771 = vmatpush2.bf16.msra.mxu0 0
      %1772 = vmatprep.subr.bf16.mxu0 0
      %1773 = vmatpush2.bf16.msra.mxu0 0
      %1774 = vmatprep.subr.bf16.mxu0 0
      %1775 = vmatpush2.bf16.msra.mxu0 0
      %1776 = vmatprep.subr.bf16.mxu0 0
      %1777 = vmatpush2.bf16.msra.mxu0 0
      %1778 = vmatprep.subr.bf16.mxu0 0
      %1779 = vmatpush2.bf16.msra.mxu0 0
      %1780 = vmatprep.subr.bf16.mxu0 0
      %1781 = vmatpush2.bf16.msra.mxu0 0
      %1782 = vmatprep.subr.bf16.mxu0 0
      %1783 = vmatpush2.bf16.msra.mxu0 0
      %1784 = vmatprep.subr.bf16.mxu0 0
      %1785 = vmatpush2.bf16.msra.mxu0 0
      %1786 = vmatprep.mubr.bf16.mxu0 0
      %1787 = vmatmul.mubr.bf16.gmra.mxu0 %v211
      %v1788 = vpop.f32.mrf.mxu0
      %v1789 = vadd.f32 %v472, %v1788
      %v1790 = vpop.f32.mrf.mxu0
      %v1791 = vadd.f32 %v472, %v1790
      %v1792 = vpop.f32.mrf.mxu0
      %v1793 = vpop.f32.mrf.mxu0
      %1794 = vdwg.mxu0
      %1795 = vmatprep.subr.bf16.mxu0 %v1469
      %1796 = vmatpush1.bf16.msra.mxu0 %v1468
      %1797 = vmatprep.subr.bf16.mxu0 %v1437
      %1798 = vmatpush1.bf16.msra.mxu0 %v1436
      %1799 = vmatprep.subr.bf16.mxu0 %v1405
      %1800 = vmatpush1.bf16.msra.mxu0 %v1404
      %1801 = vmatprep.subr.bf16.mxu0 %v1373
      %1802 = vmatpush1.bf16.msra.mxu0 %v1372
      %1803 = vmatprep.subr.bf16.mxu0 %v1341
      %1804 = vmatpush1.bf16.msra.mxu0 %v1340
      %1805 = vmatprep.subr.bf16.mxu0 %v1309
      %1806 = vmatpush1.bf16.msra.mxu0 %v1308
      %1807 = vmatprep.subr.bf16.mxu0 %v1277
      %1808 = vmatpush1.bf16.msra.mxu0 %v1276
      %1809 = vmatprep.subr.bf16.mxu0 %v1245
      %1810 = vmatpush1.bf16.msra.mxu0 %v1244
      %1811 = vmatprep.subr.bf16.mxu0 0
      %1812 = vmatpush2.bf16.msra.mxu0 0
      %1813 = vmatprep.subr.bf16.mxu0 0
      %1814 = vmatpush2.bf16.msra.mxu0 0
      %1815 = vmatprep.subr.bf16.mxu0 0
      %1816 = vmatpush2.bf16.msra.mxu0 0
      %1817 = vmatprep.subr.bf16.mxu0 0
      %1818 = vmatpush2.bf16.msra.mxu0 0
      %1819 = vmatprep.subr.bf16.mxu0 0
      %1820 = vmatpush2.bf16.msra.mxu0 0
      %1821 = vmatprep.subr.bf16.mxu0 0
      %1822 = vmatpush2.bf16.msra.mxu0 0
      %1823 = vmatprep.subr.bf16.mxu0 0
      %1824 = vmatpush2.bf16.msra.mxu0 0
      %1825 = vmatprep.subr.bf16.mxu0 0
      %1826 = vmatpush2.bf16.msra.mxu0 0
      %1827 = vmatprep.mubr.bf16.mxu0 0
      %1828 = vmatmul.mubr.bf16.gmra.mxu0 %v211
      %v1829 = vpop.f32.mrf.mxu0
      %v1830 = vadd.f32 %v472, %v1829
      %v1831 = vpop.f32.mrf.mxu0
      %v1832 = vadd.f32 %v472, %v1831
      %v1833 = vpop.f32.mrf.mxu0
      %v1834 = vpop.f32.mrf.mxu0
      %1835 = vdwg.mxu0
      %1836 = vmatprep.subr.bf16.mxu0 %v1471
      %1837 = vmatpush1.bf16.msra.mxu0 %v1470
      %1838 = vmatprep.subr.bf16.mxu0 %v1439
      %1839 = vmatpush1.bf16.msra.mxu0 %v1438
      %1840 = vmatprep.subr.bf16.mxu0 %v1407
      %1841 = vmatpush1.bf16.msra.mxu0 %v1406
      %1842 = vmatprep.subr.bf16.mxu0 %v1375
      %1843 = vmatpush1.bf16.msra.mxu0 %v1374
      %1844 = vmatprep.subr.bf16.mxu0 %v1343
      %1845 = vmatpush1.bf16.msra.mxu0 %v1342
      %1846 = vmatprep.subr.bf16.mxu0 %v1311
      %1847 = vmatpush1.bf16.msra.mxu0 %v1310
      %1848 = vmatprep.subr.bf16.mxu0 %v1279
      %1849 = vmatpush1.bf16.msra.mxu0 %v1278
      %1850 = vmatprep.subr.bf16.mxu0 %v1247
      %1851 = vmatpush1.bf16.msra.mxu0 %v1246
      %1852 = vmatprep.subr.bf16.mxu0 0
      %1853 = vmatpush2.bf16.msra.mxu0 0
      %1854 = vmatprep.subr.bf16.mxu0 0
      %1855 = vmatpush2.bf16.msra.mxu0 0
      %1856 = vmatprep.subr.bf16.mxu0 0
      %1857 = vmatpush2.bf16.msra.mxu0 0
      %1858 = vmatprep.subr.bf16.mxu0 0
      %1859 = vmatpush2.bf16.msra.mxu0 0
      %1860 = vmatprep.subr.bf16.mxu0 0
      %1861 = vmatpush2.bf16.msra.mxu0 0
      %1862 = vmatprep.subr.bf16.mxu0 0
      %1863 = vmatpush2.bf16.msra.mxu0 0
      %1864 = vmatprep.subr.bf16.mxu0 0
      %1865 = vmatpush2.bf16.msra.mxu0 0
      %1866 = vmatprep.subr.bf16.mxu0 0
      %1867 = vmatpush2.bf16.msra.mxu0 0
      %1868 = vmatprep.mubr.bf16.mxu0 0
      %1869 = vmatmul.mubr.bf16.gmra.mxu0 %v211
      %v1870 = vpop.f32.mrf.mxu0
      %v1871 = vadd.f32 %v472, %v1870
      %v1872 = vpop.f32.mrf.mxu0
      %v1873 = vadd.f32 %v472, %v1872
      %v1874 = vpop.f32.mrf.mxu0
      %v1875 = vpop.f32.mrf.mxu0
      %1876 = vdwg.mxu0
      %1877 = vmatprep.subr.bf16.mxu0 %v1473
      %1878 = vmatpush1.bf16.msra.mxu0 %v1472
      %1879 = vmatprep.subr.bf16.mxu0 %v1441
      %1880 = vmatpush1.bf16.msra.mxu0 %v1440
      %1881 = vmatprep.subr.bf16.mxu0 %v1409
      %1882 = vmatpush1.bf16.msra.mxu0 %v1408
      %1883 = vmatprep.subr.bf16.mxu0 %v1377
      %1884 = vmatpush1.bf16.msra.mxu0 %v1376
      %1885 = vmatprep.subr.bf16.mxu0 %v1345
      %1886 = vmatpush1.bf16.msra.mxu0 %v1344
      %1887 = vmatprep.subr.bf16.mxu0 %v1313
      %1888 = vmatpush1.bf16.msra.mxu0 %v1312
      %1889 = vmatprep.subr.bf16.mxu0 %v1281
      %1890 = vmatpush1.bf16.msra.mxu0 %v1280
      %1891 = vmatprep.subr.bf16.mxu0 %v1249
      %1892 = vmatpush1.bf16.msra.mxu0 %v1248
      %1893 = vmatprep.subr.bf16.mxu0 0
      %1894 = vmatpush2.bf16.msra.mxu0 0
      %1895 = vmatprep.subr.bf16.mxu0 0
      %1896 = vmatpush2.bf16.msra.mxu0 0
      %1897 = vmatprep.subr.bf16.mxu0 0
      %1898 = vmatpush2.bf16.msra.mxu0 0
      %1899 = vmatprep.subr.bf16.mxu0 0
      %1900 = vmatpush2.bf16.msra.mxu0 0
      %1901 = vmatprep.subr.bf16.mxu0 0
      %1902 = vmatpush2.bf16.msra.mxu0 0
      %1903 = vmatprep.subr.bf16.mxu0 0
      %1904 = vmatpush2.bf16.msra.mxu0 0
      %1905 = vmatprep.subr.bf16.mxu0 0
      %1906 = vmatpush2.bf16.msra.mxu0 0
      %1907 = vmatprep.subr.bf16.mxu0 0
      %1908 = vmatpush2.bf16.msra.mxu0 0
      %1909 = vmatprep.mubr.bf16.mxu0 0
      %1910 = vmatmul.mubr.bf16.gmra.mxu0 %v211
      %v1911 = vpop.f32.mrf.mxu0
      %v1912 = vadd.f32 %v472, %v1911
      %v1913 = vpop.f32.mrf.mxu0
      %v1914 = vadd.f32 %v472, %v1913
      %v1915 = vpop.f32.mrf.mxu0
      %v1916 = vpop.f32.mrf.mxu0
      %1917 = vdwg.mxu0
      %1918 = vmatprep.subr.bf16.mxu0 %v1475
      %1919 = vmatpush1.bf16.msra.mxu0 %v1474
      %1920 = vmatprep.subr.bf16.mxu0 %v1443
      %1921 = vmatpush1.bf16.msra.mxu0 %v1442
      %1922 = vmatprep.subr.bf16.mxu0 %v1411
      %1923 = vmatpush1.bf16.msra.mxu0 %v1410
      %1924 = vmatprep.subr.bf16.mxu0 %v1379
      %1925 = vmatpush1.bf16.msra.mxu0 %v1378
      %1926 = vmatprep.subr.bf16.mxu0 %v1347
      %1927 = vmatpush1.bf16.msra.mxu0 %v1346
      %1928 = vmatprep.subr.bf16.mxu0 %v1315
      %1929 = vmatpush1.bf16.msra.mxu0 %v1314
      %1930 = vmatprep.subr.bf16.mxu0 %v1283
      %1931 = vmatpush1.bf16.msra.mxu0 %v1282
      %1932 = vmatprep.subr.bf16.mxu0 %v1251
      %1933 = vmatpush1.bf16.msra.mxu0 %v1250
      %1934 = vmatprep.subr.bf16.mxu0 0
      %1935 = vmatpush2.bf16.msra.mxu0 0
      %1936 = vmatprep.subr.bf16.mxu0 0
      %1937 = vmatpush2.bf16.msra.mxu0 0
      %1938 = vmatprep.subr.bf16.mxu0 0
      %1939 = vmatpush2.bf16.msra.mxu0 0
      %1940 = vmatprep.subr.bf16.mxu0 0
      %1941 = vmatpush2.bf16.msra.mxu0 0
      %1942 = vmatprep.subr.bf16.mxu0 0
      %1943 = vmatpush2.bf16.msra.mxu0 0
      %1944 = vmatprep.subr.bf16.mxu0 0
      %1945 = vmatpush2.bf16.msra.mxu0 0
      %1946 = vmatprep.subr.bf16.mxu0 0
      %1947 = vmatpush2.bf16.msra.mxu0 0
      %1948 = vmatprep.subr.bf16.mxu0 0
      %1949 = vmatpush2.bf16.msra.mxu0 0
      %1950 = vmatprep.mubr.bf16.mxu0 0
      %1951 = vmatmul.mubr.bf16.gmra.mxu0 %v211
      %v1952 = vpop.f32.mrf.mxu0
      %v1953 = vadd.f32 %v472, %v1952
      %v1954 = vpop.f32.mrf.mxu0
      %v1955 = vadd.f32 %v472, %v1954
      %v1956 = vpop.f32.mrf.mxu0
      %v1957 = vpop.f32.mrf.mxu0
      %1958 = vdwg.mxu0
      %1959 = vmatprep.subr.bf16.mxu0 %v1477
      %1960 = vmatpush1.bf16.msra.mxu0 %v1476
      %1961 = vmatprep.subr.bf16.mxu0 %v1445
      %1962 = vmatpush1.bf16.msra.mxu0 %v1444
      %1963 = vmatprep.subr.bf16.mxu0 %v1413
      %1964 = vmatpush1.bf16.msra.mxu0 %v1412
      %1965 = vmatprep.subr.bf16.mxu0 %v1381
      %1966 = vmatpush1.bf16.msra.mxu0 %v1380
      %1967 = vmatprep.subr.bf16.mxu0 %v1349
      %1968 = vmatpush1.bf16.msra.mxu0 %v1348
      %1969 = vmatprep.subr.bf16.mxu0 %v1317
      %1970 = vmatpush1.bf16.msra.mxu0 %v1316
      %1971 = vmatprep.subr.bf16.mxu0 %v1285
      %1972 = vmatpush1.bf16.msra.mxu0 %v1284
      %1973 = vmatprep.subr.bf16.mxu0 %v1253
      %1974 = vmatpush1.bf16.msra.mxu0 %v1252
      %1975 = vmatprep.subr.bf16.mxu0 0
      %1976 = vmatpush2.bf16.msra.mxu0 0
      %1977 = vmatprep.subr.bf16.mxu0 0
      %1978 = vmatpush2.bf16.msra.mxu0 0
      %1979 = vmatprep.subr.bf16.mxu0 0
      %1980 = vmatpush2.bf16.msra.mxu0 0
      %1981 = vmatprep.subr.bf16.mxu0 0
      %1982 = vmatpush2.bf16.msra.mxu0 0
      %1983 = vmatprep.subr.bf16.mxu0 0
      %1984 = vmatpush2.bf16.msra.mxu0 0
      %1985 = vmatprep.subr.bf16.mxu0 0
      %1986 = vmatpush2.bf16.msra.mxu0 0
      %1987 = vmatprep.subr.bf16.mxu0 0
      %1988 = vmatpush2.bf16.msra.mxu0 0
      %1989 = vmatprep.subr.bf16.mxu0 0
      %1990 = vmatpush2.bf16.msra.mxu0 0
      %1991 = vmatprep.mubr.bf16.mxu0 0
      %1992 = vmatmul.mubr.bf16.gmra.mxu0 %v211
      %v1993 = vpop.f32.mrf.mxu0
      %v1994 = vadd.f32 %v472, %v1993
      %v1995 = vpop.f32.mrf.mxu0
      %v1996 = vadd.f32 %v472, %v1995
      %v1997 = vpop.f32.mrf.mxu0
      %v1998 = vpop.f32.mrf.mxu0
      %1999 = vdwg.mxu0
      %2000 = vmatprep.subr.bf16.mxu0 %v1479
      %2001 = vmatpush1.bf16.msra.mxu0 %v1478
      %2002 = vmatprep.subr.bf16.mxu0 %v1447
      %2003 = vmatpush1.bf16.msra.mxu0 %v1446
      %2004 = vmatprep.subr.bf16.mxu0 %v1415
      %2005 = vmatpush1.bf16.msra.mxu0 %v1414
      %2006 = vmatprep.subr.bf16.mxu0 %v1383
      %2007 = vmatpush1.bf16.msra.mxu0 %v1382
      %2008 = vmatprep.subr.bf16.mxu0 %v1351
      %2009 = vmatpush1.bf16.msra.mxu0 %v1350
      %2010 = vmatprep.subr.bf16.mxu0 %v1319
      %2011 = vmatpush1.bf16.msra.mxu0 %v1318
      %2012 = vmatprep.subr.bf16.mxu0 %v1287
      %2013 = vmatpush1.bf16.msra.mxu0 %v1286
      %2014 = vmatprep.subr.bf16.mxu0 %v1255
      %2015 = vmatpush1.bf16.msra.mxu0 %v1254
      %2016 = vmatprep.subr.bf16.mxu0 0
      %2017 = vmatpush2.bf16.msra.mxu0 0
      %2018 = vmatprep.subr.bf16.mxu0 0
      %2019 = vmatpush2.bf16.msra.mxu0 0
      %2020 = vmatprep.subr.bf16.mxu0 0
      %2021 = vmatpush2.bf16.msra.mxu0 0
      %2022 = vmatprep.subr.bf16.mxu0 0
      %2023 = vmatpush2.bf16.msra.mxu0 0
      %2024 = vmatprep.subr.bf16.mxu0 0
      %2025 = vmatpush2.bf16.msra.mxu0 0
      %2026 = vmatprep.subr.bf16.mxu0 0
      %2027 = vmatpush2.bf16.msra.mxu0 0
      %2028 = vmatprep.subr.bf16.mxu0 0
      %2029 = vmatpush2.bf16.msra.mxu0 0
      %2030 = vmatprep.subr.bf16.mxu0 0
      %2031 = vmatpush2.bf16.msra.mxu0 0
      %2032 = vmatprep.mubr.bf16.mxu0 0
      %2033 = vmatmul.mubr.bf16.gmra.mxu0 %v211
      %v2034 = vpop.f32.mrf.mxu0
      %v2035 = vadd.f32 %v472, %v2034
      %v2036 = vpop.f32.mrf.mxu0
      %v2037 = vadd.f32 %v472, %v2036
      %v2038 = vpop.f32.mrf.mxu0
      %v2039 = vpop.f32.mrf.mxu0
      %2040 = vdwg.mxu0
      %2041 = vmatprep.subr.bf16.mxu0 %v1481
      %2042 = vmatpush1.bf16.msra.mxu0 %v1480
      %2043 = vmatprep.subr.bf16.mxu0 %v1449
      %2044 = vmatpush1.bf16.msra.mxu0 %v1448
      %2045 = vmatprep.subr.bf16.mxu0 %v1417
      %2046 = vmatpush1.bf16.msra.mxu0 %v1416
      %2047 = vmatprep.subr.bf16.mxu0 %v1385
      %2048 = vmatpush1.bf16.msra.mxu0 %v1384
      %2049 = vmatprep.subr.bf16.mxu0 %v1353
      %2050 = vmatpush1.bf16.msra.mxu0 %v1352
      %2051 = vmatprep.subr.bf16.mxu0 %v1321
      %2052 = vmatpush1.bf16.msra.mxu0 %v1320
      %2053 = vmatprep.subr.bf16.mxu0 %v1289
      %2054 = vmatpush1.bf16.msra.mxu0 %v1288
      %2055 = vmatprep.subr.bf16.mxu0 %v1257
      %2056 = vmatpush1.bf16.msra.mxu0 %v1256
      %2057 = vmatprep.subr.bf16.mxu0 0
      %2058 = vmatpush2.bf16.msra.mxu0 0
      %2059 = vmatprep.subr.bf16.mxu0 0
      %2060 = vmatpush2.bf16.msra.mxu0 0
      %2061 = vmatprep.subr.bf16.mxu0 0
      %2062 = vmatpush2.bf16.msra.mxu0 0
      %2063 = vmatprep.subr.bf16.mxu0 0
      %2064 = vmatpush2.bf16.msra.mxu0 0
      %2065 = vmatprep.subr.bf16.mxu0 0
      %2066 = vmatpush2.bf16.msra.mxu0 0
      %2067 = vmatprep.subr.bf16.mxu0 0
      %2068 = vmatpush2.bf16.msra.mxu0 0
      %2069 = vmatprep.subr.bf16.mxu0 0
      %2070 = vmatpush2.bf16.msra.mxu0 0
      %2071 = vmatprep.subr.bf16.mxu0 0
      %2072 = vmatpush2.bf16.msra.mxu0 0
      %2073 = vmatprep.mubr.bf16.mxu0 0
      %2074 = vmatmul.mubr.bf16.gmra.mxu0 %v211
      %v2075 = vpop.f32.mrf.mxu0
      %v2076 = vadd.f32 %v472, %v2075
      %v2077 = vpop.f32.mrf.mxu0
      %v2078 = vadd.f32 %v472, %v2077
      %v2079 = vpop.f32.mrf.mxu0
      %v2080 = vpop.f32.mrf.mxu0
      %2081 = vdwg.mxu0
      %2082 = vmatprep.subr.bf16.mxu0 %v1483
      %2083 = vmatpush1.bf16.msra.mxu0 %v1482
      %2084 = vmatprep.subr.bf16.mxu0 %v1451
      %2085 = vmatpush1.bf16.msra.mxu0 %v1450
      %2086 = vmatprep.subr.bf16.mxu0 %v1419
      %2087 = vmatpush1.bf16.msra.mxu0 %v1418
      %2088 = vmatprep.subr.bf16.mxu0 %v1387
      %2089 = vmatpush1.bf16.msra.mxu0 %v1386
      %2090 = vmatprep.subr.bf16.mxu0 %v1355
      %2091 = vmatpush1.bf16.msra.mxu0 %v1354
      %2092 = vmatprep.subr.bf16.mxu0 %v1323
      %2093 = vmatpush1.bf16.msra.mxu0 %v1322
      %2094 = vmatprep.subr.bf16.mxu0 %v1291
      %2095 = vmatpush1.bf16.msra.mxu0 %v1290
      %2096 = vmatprep.subr.bf16.mxu0 %v1259
      %2097 = vmatpush1.bf16.msra.mxu0 %v1258
      %2098 = vmatprep.subr.bf16.mxu0 0
      %2099 = vmatpush2.bf16.msra.mxu0 0
      %2100 = vmatprep.subr.bf16.mxu0 0
      %2101 = vmatpush2.bf16.msra.mxu0 0
      %2102 = vmatprep.subr.bf16.mxu0 0
      %2103 = vmatpush2.bf16.msra.mxu0 0
      %2104 = vmatprep.subr.bf16.mxu0 0
      %2105 = vmatpush2.bf16.msra.mxu0 0
      %2106 = vmatprep.subr.bf16.mxu0 0
      %2107 = vmatpush2.bf16.msra.mxu0 0
      %2108 = vmatprep.subr.bf16.mxu0 0
      %2109 = vmatpush2.bf16.msra.mxu0 0
      %2110 = vmatprep.subr.bf16.mxu0 0
      %2111 = vmatpush2.bf16.msra.mxu0 0
      %2112 = vmatprep.subr.bf16.mxu0 0
      %2113 = vmatpush2.bf16.msra.mxu0 0
      %2114 = vmatprep.mubr.bf16.mxu0 0
      %2115 = vmatmul.mubr.bf16.gmra.mxu0 %v211
      %v2116 = vpop.f32.mrf.mxu0
      %v2117 = vadd.f32 %v472, %v2116
      %v2118 = vpop.f32.mrf.mxu0
      %v2119 = vadd.f32 %v472, %v2118
      %v2120 = vpop.f32.mrf.mxu0
      %v2121 = vpop.f32.mrf.mxu0
      %2122 = vdwg.mxu0
      %2123 = vmatprep.subr.bf16.mxu0 %v1485
      %2124 = vmatpush1.bf16.msra.mxu0 %v1484
      %2125 = vmatprep.subr.bf16.mxu0 %v1453
      %2126 = vmatpush1.bf16.msra.mxu0 %v1452
      %2127 = vmatprep.subr.bf16.mxu0 %v1421
      %2128 = vmatpush1.bf16.msra.mxu0 %v1420
      %2129 = vmatprep.subr.bf16.mxu0 %v1389
      %2130 = vmatpush1.bf16.msra.mxu0 %v1388
      %2131 = vmatprep.subr.bf16.mxu0 %v1357
      %2132 = vmatpush1.bf16.msra.mxu0 %v1356
      %2133 = vmatprep.subr.bf16.mxu0 %v1325
      %2134 = vmatpush1.bf16.msra.mxu0 %v1324
      %2135 = vmatprep.subr.bf16.mxu0 %v1293
      %2136 = vmatpush1.bf16.msra.mxu0 %v1292
      %2137 = vmatprep.subr.bf16.mxu0 %v1261
      %2138 = vmatpush1.bf16.msra.mxu0 %v1260
      %2139 = vmatprep.subr.bf16.mxu0 0
      %2140 = vmatpush2.bf16.msra.mxu0 0
      %2141 = vmatprep.subr.bf16.mxu0 0
      %2142 = vmatpush2.bf16.msra.mxu0 0
      %2143 = vmatprep.subr.bf16.mxu0 0
      %2144 = vmatpush2.bf16.msra.mxu0 0
      %2145 = vmatprep.subr.bf16.mxu0 0
      %2146 = vmatpush2.bf16.msra.mxu0 0
      %2147 = vmatprep.subr.bf16.mxu0 0
      %2148 = vmatpush2.bf16.msra.mxu0 0
      %2149 = vmatprep.subr.bf16.mxu0 0
      %2150 = vmatpush2.bf16.msra.mxu0 0
      %2151 = vmatprep.subr.bf16.mxu0 0
      %2152 = vmatpush2.bf16.msra.mxu0 0
      %2153 = vmatprep.subr.bf16.mxu0 0
      %2154 = vmatpush2.bf16.msra.mxu0 0
      %2155 = vmatprep.mubr.bf16.mxu0 0
      %2156 = vmatmul.mubr.bf16.gmra.mxu0 %v211
      %v2157 = vpop.f32.mrf.mxu0
      %v2158 = vadd.f32 %v472, %v2157
      %v2159 = vpop.f32.mrf.mxu0
      %v2160 = vadd.f32 %v472, %v2159
      %v2161 = vpop.f32.mrf.mxu0
      %v2162 = vpop.f32.mrf.mxu0
      %2163 = vdwg.mxu0
      %2164 = vmatprep.subr.bf16.mxu0 %v1487
      %2165 = vmatpush1.bf16.msra.mxu0 %v1486
      %2166 = vmatprep.subr.bf16.mxu0 %v1455
      %2167 = vmatpush1.bf16.msra.mxu0 %v1454
      %2168 = vmatprep.subr.bf16.mxu0 %v1423
      %2169 = vmatpush1.bf16.msra.mxu0 %v1422
      %2170 = vmatprep.subr.bf16.mxu0 %v1391
      %2171 = vmatpush1.bf16.msra.mxu0 %v1390
      %2172 = vmatprep.subr.bf16.mxu0 %v1359
      %2173 = vmatpush1.bf16.msra.mxu0 %v1358
      %2174 = vmatprep.subr.bf16.mxu0 %v1327
      %2175 = vmatpush1.bf16.msra.mxu0 %v1326
      %2176 = vmatprep.subr.bf16.mxu0 %v1295
      %2177 = vmatpush1.bf16.msra.mxu0 %v1294
      %2178 = vmatprep.subr.bf16.mxu0 %v1263
      %2179 = vmatpush1.bf16.msra.mxu0 %v1262
      %2180 = vmatprep.subr.bf16.mxu0 0
      %2181 = vmatpush2.bf16.msra.mxu0 0
      %2182 = vmatprep.subr.bf16.mxu0 0
      %2183 = vmatpush2.bf16.msra.mxu0 0
      %2184 = vmatprep.subr.bf16.mxu0 0
      %2185 = vmatpush2.bf16.msra.mxu0 0
      %2186 = vmatprep.subr.bf16.mxu0 0
      %2187 = vmatpush2.bf16.msra.mxu0 0
      %2188 = vmatprep.subr.bf16.mxu0 0
      %2189 = vmatpush2.bf16.msra.mxu0 0
      %2190 = vmatprep.subr.bf16.mxu0 0
      %2191 = vmatpush2.bf16.msra.mxu0 0
      %2192 = vmatprep.subr.bf16.mxu0 0
      %2193 = vmatpush2.bf16.msra.mxu0 0
      %2194 = vmatprep.subr.bf16.mxu0 0
      %2195 = vmatpush2.bf16.msra.mxu0 0
      %2196 = vmatprep.mubr.bf16.mxu0 0
      %2197 = vmatmul.mubr.bf16.gmra.mxu0 %v211
      %v2198 = vpop.f32.mrf.mxu0
      %v2199 = vadd.f32 %v472, %v2198
      %v2200 = vpop.f32.mrf.mxu0
      %v2201 = vadd.f32 %v472, %v2200
      %v2202 = vpop.f32.mrf.mxu0
      %v2203 = vpop.f32.mrf.mxu0
      %2204 = vdwg.mxu0
      %2205 = vmatprep.subr.bf16.mxu0 %v1489
      %2206 = vmatpush1.bf16.msra.mxu0 %v1488
      %2207 = vmatprep.subr.bf16.mxu0 %v1457
      %2208 = vmatpush1.bf16.msra.mxu0 %v1456
      %2209 = vmatprep.subr.bf16.mxu0 %v1425
      %2210 = vmatpush1.bf16.msra.mxu0 %v1424
      %2211 = vmatprep.subr.bf16.mxu0 %v1393
      %2212 = vmatpush1.bf16.msra.mxu0 %v1392
      %2213 = vmatprep.subr.bf16.mxu0 %v1361
      %2214 = vmatpush1.bf16.msra.mxu0 %v1360
      %2215 = vmatprep.subr.bf16.mxu0 %v1329
      %2216 = vmatpush1.bf16.msra.mxu0 %v1328
      %2217 = vmatprep.subr.bf16.mxu0 %v1297
      %2218 = vmatpush1.bf16.msra.mxu0 %v1296
      %2219 = vmatprep.subr.bf16.mxu0 %v1265
      %2220 = vmatpush1.bf16.msra.mxu0 %v1264
      %2221 = vmatprep.subr.bf16.mxu0 0
      %2222 = vmatpush2.bf16.msra.mxu0 0
      %2223 = vmatprep.subr.bf16.mxu0 0
      %2224 = vmatpush2.bf16.msra.mxu0 0
      %2225 = vmatprep.subr.bf16.mxu0 0
      %2226 = vmatpush2.bf16.msra.mxu0 0
      %2227 = vmatprep.subr.bf16.mxu0 0
      %2228 = vmatpush2.bf16.msra.mxu0 0
      %2229 = vmatprep.subr.bf16.mxu0 0
      %2230 = vmatpush2.bf16.msra.mxu0 0
      %2231 = vmatprep.subr.bf16.mxu0 0
      %2232 = vmatpush2.bf16.msra.mxu0 0
      %2233 = vmatprep.subr.bf16.mxu0 0
      %2234 = vmatpush2.bf16.msra.mxu0 0
      %2235 = vmatprep.subr.bf16.mxu0 0
      %2236 = vmatpush2.bf16.msra.mxu0 0
      %2237 = vmatprep.mubr.bf16.mxu0 0
      %2238 = vmatmul.mubr.bf16.gmra.mxu0 %v211
      %v2239 = vpop.f32.mrf.mxu0
      %v2240 = vadd.f32 %v472, %v2239
      %v2241 = vpop.f32.mrf.mxu0
      %v2242 = vadd.f32 %v472, %v2241
      %v2243 = vpop.f32.mrf.mxu0
      %v2244 = vpop.f32.mrf.mxu0
      %2245 = vdwg.mxu0
      %2246 = vmatprep.subr.bf16.mxu0 %v1491
      %2247 = vmatpush1.bf16.msra.mxu0 %v1490
      %2248 = vmatprep.subr.bf16.mxu0 %v1459
      %2249 = vmatpush1.bf16.msra.mxu0 %v1458
      %2250 = vmatprep.subr.bf16.mxu0 %v1427
      %2251 = vmatpush1.bf16.msra.mxu0 %v1426
      %2252 = vmatprep.subr.bf16.mxu0 %v1395
      %2253 = vmatpush1.bf16.msra.mxu0 %v1394
      %2254 = vmatprep.subr.bf16.mxu0 %v1363
      %2255 = vmatpush1.bf16.msra.mxu0 %v1362
      %2256 = vmatprep.subr.bf16.mxu0 %v1331
      %2257 = vmatpush1.bf16.msra.mxu0 %v1330
      %2258 = vmatprep.subr.bf16.mxu0 %v1299
      %2259 = vmatpush1.bf16.msra.mxu0 %v1298
      %2260 = vmatprep.subr.bf16.mxu0 %v1267
      %2261 = vmatpush1.bf16.msra.mxu0 %v1266
      %2262 = vmatprep.subr.bf16.mxu0 0
      %2263 = vmatpush2.bf16.msra.mxu0 0
      %2264 = vmatprep.subr.bf16.mxu0 0
      %2265 = vmatpush2.bf16.msra.mxu0 0
      %2266 = vmatprep.subr.bf16.mxu0 0
      %2267 = vmatpush2.bf16.msra.mxu0 0
      %2268 = vmatprep.subr.bf16.mxu0 0
      %2269 = vmatpush2.bf16.msra.mxu0 0
      %2270 = vmatprep.subr.bf16.mxu0 0
      %2271 = vmatpush2.bf16.msra.mxu0 0
      %2272 = vmatprep.subr.bf16.mxu0 0
      %2273 = vmatpush2.bf16.msra.mxu0 0
      %2274 = vmatprep.subr.bf16.mxu0 0
      %2275 = vmatpush2.bf16.msra.mxu0 0
      %2276 = vmatprep.subr.bf16.mxu0 0
      %2277 = vmatpush2.bf16.msra.mxu0 0
      %2278 = vmatprep.mubr.bf16.mxu0 0
      %2279 = vmatmul.mubr.bf16.gmra.mxu0 %v211
      %v2280 = vpop.f32.mrf.mxu0
      %v2281 = vadd.f32 %v472, %v2280
      %v2282 = vpop.f32.mrf.mxu0
      %v2283 = vadd.f32 %v472, %v2282
      %v2284 = vpop.f32.mrf.mxu0
      %v2285 = vpop.f32.mrf.mxu0
      %2286 = vdwg.mxu0
      %2287 = vmatprep.subr.bf16.mxu0 %v1493
      %2288 = vmatpush1.bf16.msra.mxu0 %v1492
      %2289 = vmatprep.subr.bf16.mxu0 %v1461
      %2290 = vmatpush1.bf16.msra.mxu0 %v1460
      %2291 = vmatprep.subr.bf16.mxu0 %v1429
      %2292 = vmatpush1.bf16.msra.mxu0 %v1428
      %2293 = vmatprep.subr.bf16.mxu0 %v1397
      %2294 = vmatpush1.bf16.msra.mxu0 %v1396
      %2295 = vmatprep.subr.bf16.mxu0 %v1365
      %2296 = vmatpush1.bf16.msra.mxu0 %v1364
      %2297 = vmatprep.subr.bf16.mxu0 %v1333
      %2298 = vmatpush1.bf16.msra.mxu0 %v1332
      %2299 = vmatprep.subr.bf16.mxu0 %v1301
      %2300 = vmatpush1.bf16.msra.mxu0 %v1300
      %2301 = vmatprep.subr.bf16.mxu0 %v1269
      %2302 = vmatpush1.bf16.msra.mxu0 %v1268
      %2303 = vmatprep.subr.bf16.mxu0 0
      %2304 = vmatpush2.bf16.msra.mxu0 0
      %2305 = vmatprep.subr.bf16.mxu0 0
      %2306 = vmatpush2.bf16.msra.mxu0 0
      %2307 = vmatprep.subr.bf16.mxu0 0
      %2308 = vmatpush2.bf16.msra.mxu0 0
      %2309 = vmatprep.subr.bf16.mxu0 0
      %2310 = vmatpush2.bf16.msra.mxu0 0
      %2311 = vmatprep.subr.bf16.mxu0 0
      %2312 = vmatpush2.bf16.msra.mxu0 0
      %2313 = vmatprep.subr.bf16.mxu0 0
      %2314 = vmatpush2.bf16.msra.mxu0 0
      %2315 = vmatprep.subr.bf16.mxu0 0
      %2316 = vmatpush2.bf16.msra.mxu0 0
      %2317 = vmatprep.subr.bf16.mxu0 0
      %2318 = vmatpush2.bf16.msra.mxu0 0
      %2319 = vmatprep.mubr.bf16.mxu0 0
      %2320 = vmatmul.mubr.bf16.gmra.mxu0 %v211
      %v2321 = vpop.f32.mrf.mxu0
      %v2322 = vadd.f32 %v472, %v2321
      %v2323 = vpop.f32.mrf.mxu0
      %v2324 = vadd.f32 %v472, %v2323
      %v2325 = vpop.f32.mrf.mxu0
      %v2326 = vpop.f32.mrf.mxu0
      %2327 = vdwg.mxu0
      %2328 = vmatprep.subr.bf16.mxu0 %v1495
      %2329 = vmatpush1.bf16.msra.mxu0 %v1494
      %2330 = vmatprep.subr.bf16.mxu0 %v1463
      %2331 = vmatpush1.bf16.msra.mxu0 %v1462
      %2332 = vmatprep.subr.bf16.mxu0 %v1431
      %2333 = vmatpush1.bf16.msra.mxu0 %v1430
      %2334 = vmatprep.subr.bf16.mxu0 %v1399
      %2335 = vmatpush1.bf16.msra.mxu0 %v1398
      %2336 = vmatprep.subr.bf16.mxu0 %v1367
      %2337 = vmatpush1.bf16.msra.mxu0 %v1366
      %2338 = vmatprep.subr.bf16.mxu0 %v1335
      %2339 = vmatpush1.bf16.msra.mxu0 %v1334
      %2340 = vmatprep.subr.bf16.mxu0 %v1303
      %2341 = vmatpush1.bf16.msra.mxu0 %v1302
      %2342 = vmatprep.subr.bf16.mxu0 %v1271
      %2343 = vmatpush1.bf16.msra.mxu0 %v1270
      %2344 = vmatprep.subr.bf16.mxu0 0
      %2345 = vmatpush2.bf16.msra.mxu0 0
      %2346 = vmatprep.subr.bf16.mxu0 0
      %2347 = vmatpush2.bf16.msra.mxu0 0
      %2348 = vmatprep.subr.bf16.mxu0 0
      %2349 = vmatpush2.bf16.msra.mxu0 0
      %2350 = vmatprep.subr.bf16.mxu0 0
      %2351 = vmatpush2.bf16.msra.mxu0 0
      %2352 = vmatprep.subr.bf16.mxu0 0
      %2353 = vmatpush2.bf16.msra.mxu0 0
      %2354 = vmatprep.subr.bf16.mxu0 0
      %2355 = vmatpush2.bf16.msra.mxu0 0
      %2356 = vmatprep.subr.bf16.mxu0 0
      %2357 = vmatpush2.bf16.msra.mxu0 0
      %2358 = vmatprep.subr.bf16.mxu0 0
      %2359 = vmatpush2.bf16.msra.mxu0 0
      %2360 = vmatprep.mubr.bf16.mxu0 0
      %2361 = vmatmul.mubr.bf16.gmra.mxu0 %v211
      %v2362 = vpop.f32.mrf.mxu0
      %v2363 = vadd.f32 %v472, %v2362
      %v2364 = vpop.f32.mrf.mxu0
      %v2365 = vadd.f32 %v472, %v2364
      %v2366 = vpop.f32.mrf.mxu0
      %v2367 = vpop.f32.mrf.mxu0
      %2368 = vdwg.mxu0
      %2369 = vmatprep.subr.bf16.mxu0 %v1497
      %2370 = vmatpush1.bf16.msra.mxu0 %v1496
      %2371 = vmatprep.subr.bf16.mxu0 %v1465
      %2372 = vmatpush1.bf16.msra.mxu0 %v1464
      %2373 = vmatprep.subr.bf16.mxu0 %v1433
      %2374 = vmatpush1.bf16.msra.mxu0 %v1432
      %2375 = vmatprep.subr.bf16.mxu0 %v1401
      %2376 = vmatpush1.bf16.msra.mxu0 %v1400
      %2377 = vmatprep.subr.bf16.mxu0 %v1369
      %2378 = vmatpush1.bf16.msra.mxu0 %v1368
      %2379 = vmatprep.subr.bf16.mxu0 %v1337
      %2380 = vmatpush1.bf16.msra.mxu0 %v1336
      %2381 = vmatprep.subr.bf16.mxu0 %v1305
      %2382 = vmatpush1.bf16.msra.mxu0 %v1304
      %2383 = vmatprep.subr.bf16.mxu0 %v1273
      %2384 = vmatpush1.bf16.msra.mxu0 %v1272
      %2385 = vmatprep.subr.bf16.mxu0 0
      %2386 = vmatpush2.bf16.msra.mxu0 0
      %2387 = vmatprep.subr.bf16.mxu0 0
      %2388 = vmatpush2.bf16.msra.mxu0 0
      %2389 = vmatprep.subr.bf16.mxu0 0
      %2390 = vmatpush2.bf16.msra.mxu0 0
      %2391 = vmatprep.subr.bf16.mxu0 0
      %2392 = vmatpush2.bf16.msra.mxu0 0
      %2393 = vmatprep.subr.bf16.mxu0 0
      %2394 = vmatpush2.bf16.msra.mxu0 0
      %2395 = vmatprep.subr.bf16.mxu0 0
      %2396 = vmatpush2.bf16.msra.mxu0 0
      %2397 = vmatprep.subr.bf16.mxu0 0
      %2398 = vmatpush2.bf16.msra.mxu0 0
      %2399 = vmatprep.subr.bf16.mxu0 0
      %2400 = vmatpush2.bf16.msra.mxu0 0
      %2401 = vmatprep.mubr.bf16.mxu0 0
      %2402 = vmatmul.mubr.bf16.gmra.mxu0 %v211
      %v2403 = vpop.f32.mrf.mxu0
      %v2404 = vadd.f32 %v472, %v2403
      %v2405 = vpop.f32.mrf.mxu0
      %v2406 = vadd.f32 %v472, %v2405
      %v2407 = vpop.f32.mrf.mxu0
      %v2408 = vpop.f32.mrf.mxu0
      %2409 = vdwg.mxu0
      %vm2410 = vcmp.ge.f32.partialorder %v1789, 0.0
      %vm2411 = vcmp.ge.f32.partialorder %v1791, 0.0
      %vm2412 = vcmp.ge.f32.partialorder %v1830, 0.0
      %vm2413 = vcmp.ge.f32.partialorder %v1832, 0.0
      %vm2414 = vcmp.ge.f32.partialorder %v1871, 0.0
      %vm2415 = vcmp.ge.f32.partialorder %v1873, 0.0
      %vm2416 = vcmp.ge.f32.partialorder %v1912, 0.0
      %vm2417 = vcmp.ge.f32.partialorder %v1914, 0.0
      %vm2418 = vcmp.ge.f32.partialorder %v1953, 0.0
      %vm2419 = vcmp.ge.f32.partialorder %v1955, 0.0
      %vm2420 = vcmp.ge.f32.partialorder %v1994, 0.0
      %vm2421 = vcmp.ge.f32.partialorder %v1996, 0.0
      %vm2422 = vcmp.ge.f32.partialorder %v2035, 0.0
      %vm2423 = vcmp.ge.f32.partialorder %v2037, 0.0
      %vm2424 = vcmp.ge.f32.partialorder %v2076, 0.0
      %vm2425 = vcmp.ge.f32.partialorder %v2078, 0.0
      %vm2426 = vcmp.ge.f32.partialorder %v2117, 0.0
      %vm2427 = vcmp.ge.f32.partialorder %v2119, 0.0
      %vm2428 = vcmp.ge.f32.partialorder %v2158, 0.0
      %vm2429 = vcmp.ge.f32.partialorder %v2160, 0.0
      %vm2430 = vcmp.ge.f32.partialorder %v2199, 0.0
      %vm2431 = vcmp.ge.f32.partialorder %v2201, 0.0
      %vm2432 = vcmp.ge.f32.partialorder %v2240, 0.0
      %vm2433 = vcmp.ge.f32.partialorder %v2242, 0.0
      %vm2434 = vcmp.ge.f32.partialorder %v2281, 0.0
      %vm2435 = vcmp.ge.f32.partialorder %v2283, 0.0
      %vm2436 = vcmp.ge.f32.partialorder %v2322, 0.0
      %vm2437 = vcmp.ge.f32.partialorder %v2324, 0.0
      %vm2438 = vcmp.ge.f32.partialorder %v2363, 0.0
      %vm2439 = vcmp.ge.f32.partialorder %v2365, 0.0
      %vm2440 = vcmp.ge.f32.partialorder %v2404, 0.0
      %vm2441 = vcmp.ge.f32.partialorder %v2406, 0.0
      %v2442 = vmul.f32 %v1789, 0.2
      %v2443 = vmul.f32 %v1791, 0.2
      %v2444 = vmul.f32 %v1830, 0.2
      %v2445 = vmul.f32 %v1832, 0.2
      %v2446 = vmul.f32 %v1871, 0.2
      %v2447 = vmul.f32 %v1873, 0.2
      %v2448 = vmul.f32 %v1912, 0.2
      %v2449 = vmul.f32 %v1914, 0.2
      %v2450 = vmul.f32 %v1953, 0.2
      %v2451 = vmul.f32 %v1955, 0.2
      %v2452 = vmul.f32 %v1994, 0.2
      %v2453 = vmul.f32 %v1996, 0.2
      %v2454 = vmul.f32 %v2035, 0.2
      %v2455 = vmul.f32 %v2037, 0.2
      %v2456 = vmul.f32 %v2076, 0.2
      %v2457 = vmul.f32 %v2078, 0.2
      %v2458 = vmul.f32 %v2117, 0.2
      %v2459 = vmul.f32 %v2119, 0.2
      %v2460 = vmul.f32 %v2158, 0.2
      %v2461 = vmul.f32 %v2160, 0.2
      %v2462 = vmul.f32 %v2199, 0.2
      %v2463 = vmul.f32 %v2201, 0.2
      %v2464 = vmul.f32 %v2240, 0.2
      %v2465 = vmul.f32 %v2242, 0.2
      %v2466 = vmul.f32 %v2281, 0.2
      %v2467 = vmul.f32 %v2283, 0.2
      %v2468 = vmul.f32 %v2322, 0.2
      %v2469 = vmul.f32 %v2324, 0.2
      %v2470 = vmul.f32 %v2363, 0.2
      %v2471 = vmul.f32 %v2365, 0.2
      %v2472 = vmul.f32 %v2404, 0.2
      %v2473 = vmul.f32 %v2406, 0.2
      %v2474 = vsel %vm2410, %v1789, %v2442
      %v2475 = vsel %vm2411, %v1791, %v2443
      %v2476 = vsel %vm2412, %v1830, %v2444
      %v2477 = vsel %vm2413, %v1832, %v2445
      %v2478 = vsel %vm2414, %v1871, %v2446
      %v2479 = vsel %vm2415, %v1873, %v2447
      %v2480 = vsel %vm2416, %v1912, %v2448
      %v2481 = vsel %vm2417, %v1914, %v2449
      %v2482 = vsel %vm2418, %v1953, %v2450
      %v2483 = vsel %vm2419, %v1955, %v2451
      %v2484 = vsel %vm2420, %v1994, %v2452
      %v2485 = vsel %vm2421, %v1996, %v2453
      %v2486 = vsel %vm2422, %v2035, %v2454
      %v2487 = vsel %vm2423, %v2037, %v2455
      %v2488 = vsel %vm2424, %v2076, %v2456
      %v2489 = vsel %vm2425, %v2078, %v2457
      %v2490 = vsel %vm2426, %v2117, %v2458
      %v2491 = vsel %vm2427, %v2119, %v2459
      %v2492 = vsel %vm2428, %v2158, %v2460
      %v2493 = vsel %vm2429, %v2160, %v2461
      %v2494 = vsel %vm2430, %v2199, %v2462
      %v2495 = vsel %vm2431, %v2201, %v2463
      %v2496 = vsel %vm2432, %v2240, %v2464
      %v2497 = vsel %vm2433, %v2242, %v2465
      %v2498 = vsel %vm2434, %v2281, %v2466
      %v2499 = vsel %vm2435, %v2283, %v2467
      %v2500 = vsel %vm2436, %v2322, %v2468
      %v2501 = vsel %vm2437, %v2324, %v2469
      %v2502 = vsel %vm2438, %v2363, %v2470
      %v2503 = vsel %vm2439, %v2365, %v2471
      %v2504 = vsel %vm2440, %v2404, %v2472
      %v2505 = vsel %vm2441, %v2406, %v2473
      %v2506 = vpack.c.bf16 %v2474, %v2474
      %v2507 = vpack.c.bf16 %v2475, %v2475
      %v2508 = vpack.c.bf16 %v2476, %v2476
      %v2509 = vpack.c.bf16 %v2477, %v2477
      %v2510 = vpack.c.bf16 %v2478, %v2478
      %v2511 = vpack.c.bf16 %v2479, %v2479
      %v2512 = vpack.c.bf16 %v2480, %v2480
      %v2513 = vpack.c.bf16 %v2481, %v2481
      %v2514 = vpack.c.bf16 %v2482, %v2482
      %v2515 = vpack.c.bf16 %v2483, %v2483
      %v2516 = vpack.c.bf16 %v2484, %v2484
      %v2517 = vpack.c.bf16 %v2485, %v2485
      %v2518 = vpack.c.bf16 %v2486, %v2486
      %v2519 = vpack.c.bf16 %v2487, %v2487
      %v2520 = vpack.c.bf16 %v2488, %v2488
      %v2521 = vpack.c.bf16 %v2489, %v2489
      %v2522 = vpack.c.bf16 %v2490, %v2490
      %v2523 = vpack.c.bf16 %v2491, %v2491
      %v2524 = vpack.c.bf16 %v2492, %v2492
      %v2525 = vpack.c.bf16 %v2493, %v2493
      %v2526 = vpack.c.bf16 %v2494, %v2494
      %v2527 = vpack.c.bf16 %v2495, %v2495
      %v2528 = vpack.c.bf16 %v2496, %v2496
      %v2529 = vpack.c.bf16 %v2497, %v2497
      %v2530 = vpack.c.bf16 %v2498, %v2498
      %v2531 = vpack.c.bf16 %v2499, %v2499
      %v2532 = vpack.c.bf16 %v2500, %v2500
      %v2533 = vpack.c.bf16 %v2501, %v2501
      %v2534 = vpack.c.bf16 %v2502, %v2502
      %v2535 = vpack.c.bf16 %v2503, %v2503
      %v2536 = vpack.c.bf16 %v2504, %v2504
      %v2537 = vpack.c.bf16 %v2505, %v2505
      %v2570 = vcombine.low %v2506, %v2507
      %v2571 = vcombine.low %v2508, %v2509
      %v2573 = vunpack.c.l.s4 1983009808
      %v2574 = vunpack.c.0.s8 %v2573
      %v2575 = vlaneseq
      %v2576 = vshrl.u32 %v2575, 7
      %v2577 = vsub.s32 %v2574, %v2576
      %v2578 = vrot.slane %v2570, %v2577
      %v2580 = vunpack.c.l.s4 1983009808
      %v2581 = vunpack.c.0.s8 %v2580
      %v2582 = vlaneseq
      %v2583 = vshrl.u32 %v2582, 7
      %v2584 = vsub.s32 %v2581, %v2583
      %v2585 = vrot.slane %v2571, %v2584
      %v2586 = vcombine.low %v2578, %v2585
      %v2587 = vcombine.low %v2510, %v2511
      %v2588 = vcombine.low %v2512, %v2513
      %v2590 = vunpack.c.l.s4 1983009808
      %v2591 = vunpack.c.0.s8 %v2590
      %v2592 = vlaneseq
      %v2593 = vshrl.u32 %v2592, 7
      %v2594 = vsub.s32 %v2591, %v2593
      %v2595 = vrot.slane %v2587, %v2594
      %v2597 = vunpack.c.l.s4 1983009808
      %v2598 = vunpack.c.0.s8 %v2597
      %v2599 = vlaneseq
      %v2600 = vshrl.u32 %v2599, 7
      %v2601 = vsub.s32 %v2598, %v2600
      %v2602 = vrot.slane %v2588, %v2601
      %v2603 = vcombine.low %v2595, %v2602
      %v2604 = vcombine.low %v2514, %v2515
      %v2605 = vcombine.low %v2516, %v2517
      %v2607 = vunpack.c.l.s4 1983009808
      %v2608 = vunpack.c.0.s8 %v2607
      %v2609 = vlaneseq
      %v2610 = vshrl.u32 %v2609, 7
      %v2611 = vsub.s32 %v2608, %v2610
      %v2612 = vrot.slane %v2604, %v2611
      %v2614 = vunpack.c.l.s4 1983009808
      %v2615 = vunpack.c.0.s8 %v2614
      %v2616 = vlaneseq
      %v2617 = vshrl.u32 %v2616, 7
      %v2618 = vsub.s32 %v2615, %v2617
      %v2619 = vrot.slane %v2605, %v2618
      %v2620 = vcombine.low %v2612, %v2619
      %v2621 = vcombine.low %v2518, %v2519
      %v2622 = vcombine.low %v2520, %v2521
      %v2624 = vunpack.c.l.s4 1983009808
      %v2625 = vunpack.c.0.s8 %v2624
      %v2626 = vlaneseq
      %v2627 = vshrl.u32 %v2626, 7
      %v2628 = vsub.s32 %v2625, %v2627
      %v2629 = vrot.slane %v2621, %v2628
      %v2631 = vunpack.c.l.s4 1983009808
      %v2632 = vunpack.c.0.s8 %v2631
      %v2633 = vlaneseq
      %v2634 = vshrl.u32 %v2633, 7
      %v2635 = vsub.s32 %v2632, %v2634
      %v2636 = vrot.slane %v2622, %v2635
      %v2637 = vcombine.low %v2629, %v2636
      %v2638 = vcombine.low %v2522, %v2523
      %v2639 = vcombine.low %v2524, %v2525
      %v2641 = vunpack.c.l.s4 1983009808
      %v2642 = vunpack.c.0.s8 %v2641
      %v2643 = vlaneseq
      %v2644 = vshrl.u32 %v2643, 7
      %v2645 = vsub.s32 %v2642, %v2644
      %v2646 = vrot.slane %v2638, %v2645
      %v2648 = vunpack.c.l.s4 1983009808
      %v2649 = vunpack.c.0.s8 %v2648
      %v2650 = vlaneseq
      %v2651 = vshrl.u32 %v2650, 7
      %v2652 = vsub.s32 %v2649, %v2651
      %v2653 = vrot.slane %v2639, %v2652
      %v2654 = vcombine.low %v2646, %v2653
      %v2655 = vcombine.low %v2526, %v2527
      %v2656 = vcombine.low %v2528, %v2529
      %v2658 = vunpack.c.l.s4 1983009808
      %v2659 = vunpack.c.0.s8 %v2658
      %v2660 = vlaneseq
      %v2661 = vshrl.u32 %v2660, 7
      %v2662 = vsub.s32 %v2659, %v2661
      %v2663 = vrot.slane %v2655, %v2662
      %v2665 = vunpack.c.l.s4 1983009808
      %v2666 = vunpack.c.0.s8 %v2665
      %v2667 = vlaneseq
      %v2668 = vshrl.u32 %v2667, 7
      %v2669 = vsub.s32 %v2666, %v2668
      %v2670 = vrot.slane %v2656, %v2669
      %v2671 = vcombine.low %v2663, %v2670
      %v2672 = vcombine.low %v2530, %v2531
      %v2673 = vcombine.low %v2532, %v2533
      %v2675 = vunpack.c.l.s4 1983009808
      %v2676 = vunpack.c.0.s8 %v2675
      %v2677 = vlaneseq
      %v2678 = vshrl.u32 %v2677, 7
      %v2679 = vsub.s32 %v2676, %v2678
      %v2680 = vrot.slane %v2672, %v2679
      %v2682 = vunpack.c.l.s4 1983009808
      %v2683 = vunpack.c.0.s8 %v2682
      %v2684 = vlaneseq
      %v2685 = vshrl.u32 %v2684, 7
      %v2686 = vsub.s32 %v2683, %v2685
      %v2687 = vrot.slane %v2673, %v2686
      %v2688 = vcombine.low %v2680, %v2687
      %v2689 = vcombine.low %v2534, %v2535
      %v2690 = vcombine.low %v2536, %v2537
      %v2692 = vunpack.c.l.s4 1983009808
      %v2693 = vunpack.c.0.s8 %v2692
      %v2694 = vlaneseq
      %v2695 = vshrl.u32 %v2694, 7
      %v2696 = vsub.s32 %v2693, %v2695
      %v2697 = vrot.slane %v2689, %v2696
      %v2699 = vunpack.c.l.s4 1983009808
      %v2700 = vunpack.c.0.s8 %v2699
      %v2701 = vlaneseq
      %v2702 = vshrl.u32 %v2701, 7
      %v2703 = vsub.s32 %v2700, %v2702
      %v2704 = vrot.slane %v2690, %v2703
      %v2705 = vcombine.low %v2697, %v2704
      %2714 = vst [vmem:[%s208] sm:$0xff] %v2586
      %2715 = vst [vmem:[%s208 + $0x8] sm:$0xff] %v2603
      %2716 = vst [vmem:[%s208 + $0x10] sm:$0xff] %v2620
      %2717 = vst [vmem:[%s208 + $0x18] sm:$0xff] %v2637
      %2718 = vst [vmem:[%s208 + $0x20] sm:$0xff] %v2654
      %2719 = vst [vmem:[%s208 + $0x28] sm:$0xff] %v2671
      %2720 = vst [vmem:[%s208 + $0x30] sm:$0xff] %v2688
      %2721 = vst [vmem:[%s208 + $0x38] sm:$0xff] %v2705
      %s2722 = smul.u32 32, %s19
      %p2723 = scmp.lt.s32.totalorder %s18, 1
      %s2724 = scalar_select %p2723, %s18, 1
      %p2725 = scmp.lt.s32.totalorder %s2722, 31
      %s2726 = scalar_select %p2725, %s2722, 31
      %s2727 = smul.addr %s2724, 32
      %s2728 = sadd.s32 %s2726, %s2727
      %s2729 = smul.addr %s2728, 2
      %s2730 = scalar_lea.vmem %s3, %s2729
      // Predicated region
      $region33: #{discriminator_forward.5} parent=31 // pred_check
        %p2731 = pneg %p116
      $region34: #{discriminator_forward.5} parent=31 // pred_check_branch
        %2733 = sbr.rel (%p2731) target = $region36
      $region35: #{discriminator_forward.5} parent=31 // pred_region
        %s2734 = smul.u32 32, %s19
      $region36: #{discriminator_forward.5} parent=31 // pred_fallthru
        _
    $region32: #{discriminator_forward.5} parent=5 // pred_fallthru
      _
    %p2735 = scmp.le.s32.totalorder 2, %s9
    // Predicated region
    $region37: #{discriminator_forward.5} parent=5 // pred_check
      %p2736 = pneg %p2735
    $region38: #{discriminator_forward.5} parent=5 // pred_check_branch
      %2738 = sbr.rel (%p2736) target = $region40
    $region39: #{discriminator_forward.5} parent=5 // pred_region
      %s2739 = ssub.s32 %s9, 2
      // Predicated region
      $region41: #{discriminator_forward.5} parent=39 // pred_check
        %p2740 = pneg %p122
      $region42: #{discriminator_forward.5} parent=39 // pred_check_branch
        %2742 = sbr.rel (%p2740) target = $region44
      $region43: #{discriminator_forward.5} parent=39 // pred_region
        %s2743 = smul.u32 32, %s21
        %p2744 = scmp.lt.s32.totalorder %s20, 1
        %s2745 = scalar_select %p2744, %s20, 1
        %p2746 = scmp.lt.s32.totalorder %s2743, 31
        %s2747 = scalar_select %p2746, %s2743, 31
        %s2748 = smul.addr %s2745, 32
        %s2749 = sadd.s32 %s2747, %s2748
        %s2750 = smul.addr %s2749, 2
        %s2751 = scalar_lea.vmem %s3, %s2750
      $region44: #{discriminator_forward.5} parent=39 // pred_fallthru
        _
    $region40: #{discriminator_forward.5} parent=5 // pred_fallthru
      _
  $region6: #{discriminator_forward.5} parent=0 // loop_footer
    %s13 = sadd.s32 1, %s9
  $region7: #{discriminator_forward.5} parent=0 // loop_footer_branch
    %8 = sbr.rel target = $region3
  $region8: #{discriminator_forward.5} parent=0 // loop_exit
    _

// kernel: discriminator_forward.6
$region0: #{discriminator_forward.6}
  #allocation0 [shape = 'u32[]', space=smem, size = 0x4, offset = 0x4, fixed_abs, tag = 'smem constant byte address 0x4 - core index']
  #allocation1 [shape = 'u32[144,128]{1,0:T(1,128)}', space=vmem, size = 0x12000, scoped, tag = 'internal scratch']
  #allocation2 [shape = 'f32[8,1]{1,0:T(8,128)}', space=vmem, size = 0x1000, scoped, tag = 'scratch operand']
  #allocation3 [shape = 'f32[8,1]{1,0:T(8,128)}', space=vmem, size = 0x1000, scoped, tag = 'scratch operand']
  %s0 = inlined_call_operand.vmem [shape: bf16[2,256,512], index: 0, kind: input, shape index: {}]
  %s1 = inlined_call_operand.vmem [shape: bf16[8,256], index: 1, kind: input, shape index: {}]
  %s2 = inlined_call_operand.vmem [shape: f32[8,1], index: 2, kind: input, shape index: {}]
  %s3 = inlined_call_operand.vmem [shape: bf16[2,8,512], index: 3, kind: output, shape index: {}]
  %s4 = sld [smem:[#allocation0]]
  $region45: #{discriminator_forward.6} parent=0
    _
  %s6 = ssub.s32 1, %s4
  %s7 = scalar_select 0, %s6, %s4
  loop: start=0, step=1, limit=4
  $region2: #{discriminator_forward.6} parent=0 // loop_pre_header
    _
  $region3: #{discriminator_forward.6} parent=0 // loop_header
    %s9 = sphi 0, %s13
    %p10 = scmp.ge.s32.totalorder %s9, 4
    %s16 = sphi 0, %s28
    %s17 = sphi 0, %s24
    %s18 = sphi 0, %s16
    %s19 = sphi 0, %s17
    %s20 = sphi 0, %s18
    %s21 = sphi 0, %s19
    %s33 = sphi 0, %s35
    %s36 = sphi 0, %s33
    %s37 = sphi 0, %s36
    %s53 = sphi 0, %s37
    %s57 = sphi 0, %s57
    %s59 = sphi 0, %s57
    %s60 = sphi 0, %s59
    %s74 = sphi 0, %s60
    %s78 = sphi 0, %s78
    %s80 = sphi 0, %s78
    %s81 = sphi 0, %s80
    %s95 = sphi 0, %s81
    %s101 = sphi 0, %s103
    %s104 = sphi 0, %s101
    %s105 = sphi 0, %s104
    %s121 = sphi 0, %s105
  $region4: #{discriminator_forward.6} parent=0 // loop_header_branch
    %12 = sbr.rel (%p10) target = $region8
  $region5: #{discriminator_forward.6} parent=0 // loop_body
    %s14 = ssub.s32 %s9, 1
    %s15 = ssub.s32 %s9, 2
    %s22 = sadd.s32 1, %s17
    %p23 = scmp.ge.s32.totalorder %s22, 1
    %s24 = scalar_select %p23, 0, %s22
    %s25 = sadd.s32 1, %s16
    %s26 = scalar_select %p23, %s25, %s16
    %p27 = scmp.ge.s32.totalorder %s26, 2
    %s28 = scalar_select %p27, 0, %s26
    %s29 = ssub.s32 %s16, %s28
    %s30 = ssub.s32 %s17, %s24
    %s31 = sor.u32 %s29, %s30
    %p32 = scmp.eq.s32.totalorder %s31, 0
    %s34 = sadd.s32 %s33, 1
    %s35 = scalar_select %p32, %s33, %s34
    %p38 = pneg %p32
    %p39 = scmp.eq.s32.totalorder %s9, 1
    %p40 = por %p38, %p39
    %p41 = scmp.ne.s32.totalorder %s33, %s36
    %p42 = scmp.eq.s32.totalorder %s9, 0
    %p43 = por %p41, %p42
    %p44 = scmp.ne.s32.totalorder %s33, %s36
    %p45 = scmp.eq.s32.totalorder %s14, 1
    %p46 = por %p44, %p45
    %p47 = scmp.ne.s32.totalorder %s36, %s37
    %p48 = scmp.eq.s32.totalorder %s14, 0
    %p49 = por %p47, %p48
    %p50 = scmp.ne.s32.totalorder %s36, %s37
    %p51 = scmp.eq.s32.totalorder %s15, 1
    %p52 = por %p50, %p51
    %p54 = scmp.ne.s32.totalorder %s37, %s53
    %p55 = scmp.eq.s32.totalorder %s15, 0
    %p56 = por %p54, %p55
    %s58 = sadd.s32 %s57, 1
    %p61 = scmp.eq.s32.totalorder %s9, 1
    %p62 = scmp.ne.s32.totalorder %s57, %s59
    %p63 = scmp.eq.s32.totalorder %s9, 0
    %p64 = por %p62, %p63
    %p65 = scmp.ne.s32.totalorder %s57, %s59
    %p66 = scmp.eq.s32.totalorder %s14, 1
    %p67 = por %p65, %p66
    %p68 = scmp.ne.s32.totalorder %s59, %s60
    %p69 = scmp.eq.s32.totalorder %s14, 0
    %p70 = por %p68, %p69
    %p71 = scmp.ne.s32.totalorder %s59, %s60
    %p72 = scmp.eq.s32.totalorder %s15, 1
    %p73 = por %p71, %p72
    %p75 = scmp.ne.s32.totalorder %s60, %s74
    %p76 = scmp.eq.s32.totalorder %s15, 0
    %p77 = por %p75, %p76
    %s79 = sadd.s32 %s78, 1
    %p82 = scmp.eq.s32.totalorder %s9, 1
    %p83 = scmp.ne.s32.totalorder %s78, %s80
    %p84 = scmp.eq.s32.totalorder %s9, 0
    %p85 = por %p83, %p84
    %p86 = scmp.ne.s32.totalorder %s78, %s80
    %p87 = scmp.eq.s32.totalorder %s14, 1
    %p88 = por %p86, %p87
    %p89 = scmp.ne.s32.totalorder %s80, %s81
    %p90 = scmp.eq.s32.totalorder %s14, 0
    %p91 = por %p89, %p90
    %p92 = scmp.ne.s32.totalorder %s80, %s81
    %p93 = scmp.eq.s32.totalorder %s15, 1
    %p94 = por %p92, %p93
    %p96 = scmp.ne.s32.totalorder %s81, %s95
    %p97 = scmp.eq.s32.totalorder %s15, 0
    %p98 = por %p96, %p97
    %s99 = ssub.s32 %s16, %s28
    %p100 = scmp.eq.s32.totalorder %s99, 0
    %s102 = sadd.s32 %s101, 1
    %s103 = scalar_select %p100, %s101, %s102
    %p106 = pneg %p100
    %p107 = scmp.eq.s32.totalorder %s9, 1
    %p108 = por %p106, %p107
    %p109 = scmp.ne.s32.totalorder %s101, %s104
    %p110 = scmp.eq.s32.totalorder %s9, 0
    %p111 = por %p109, %p110
    %p112 = scmp.ne.s32.totalorder %s101, %s104
    %p113 = scmp.eq.s32.totalorder %s14, 1
    %p114 = por %p112, %p113
    %p115 = scmp.ne.s32.totalorder %s104, %s105
    %p116 = scmp.eq.s32.totalorder %s14, 0
    %p117 = por %p115, %p116
    %p118 = scmp.ne.s32.totalorder %s104, %s105
    %p119 = scmp.eq.s32.totalorder %s15, 1
    %p120 = por %p118, %p119
    %p122 = scmp.ne.s32.totalorder %s105, %s121
    %p123 = scmp.eq.s32.totalorder %s15, 0
    %p124 = por %p122, %p123
    %p125 = scmp.le.s32.totalorder 1, %s9
    %p126 = scmp.lt.s32.totalorder %s9, 3
    %p127 = pnand %p125, %p126
    %p128 = pneg %p127
    // Predicated region
    $region9: #{discriminator_forward.6} parent=5 // pred_check
      _
    $region10: #{discriminator_forward.6} parent=5 // pred_check_branch
      %130 = sbr.rel (%p127) target = $region12
    $region11: #{discriminator_forward.6} parent=5 // pred_region
      %s131 = ssub.s32 %s9, 1
      // Predicated region
      $region13: #{discriminator_forward.6} parent=11 // pred_check
        %p132 = pneg %p70
      $region14: #{discriminator_forward.6} parent=11 // pred_check_branch
        %134 = sbr.rel (%p132) target = $region16
      $region15: #{discriminator_forward.6} parent=11 // pred_region
        _
      $region16: #{discriminator_forward.6} parent=11 // pred_fallthru
        _
      // Predicated region
      $region17: #{discriminator_forward.6} parent=11 // pred_check
        %p135 = pneg %p91
      $region18: #{discriminator_forward.6} parent=11 // pred_check_branch
        %137 = sbr.rel (%p135) target = $region20
      $region19: #{discriminator_forward.6} parent=11 // pred_region
        _
      $region20: #{discriminator_forward.6} parent=11 // pred_fallthru
        _
    $region12: #{discriminator_forward.6} parent=5 // pred_fallthru
      _
    %p138 = scmp.lt.s32.totalorder %s9, 2
    // Predicated region
    $region21: #{discriminator_forward.6} parent=5 // pred_check
      %p139 = pneg %p138
    $region22: #{discriminator_forward.6} parent=5 // pred_check_branch
      %141 = sbr.rel (%p139) target = $region24
    $region23: #{discriminator_forward.6} parent=5 // pred_region
      // Predicated region
      $region25: #{discriminator_forward.6} parent=23 // pred_check
        %p142 = pneg %p43
      $region26: #{discriminator_forward.6} parent=23 // pred_check_branch
        %144 = sbr.rel (%p142) target = $region28
      $region27: #{discriminator_forward.6} parent=23 // pred_region
        %s145 = smul.u32 4, %s17
        %p146 = scmp.lt.s32.totalorder %s16, 1
        %s147 = scalar_select %p146, %s16, 1
        %p148 = scmp.lt.s32.totalorder %s145, 3
        %s149 = scalar_select %p148, %s145, 3
        %s150 = smul.addr %s147, 128
        %s151 = sadd.s32 %s149, %s150
        %s152 = smul.addr %s151, 4
        %s153 = scalar_lea.vmem %s0, %s152
        %s154 = smul.u32 4, %s17
      $region28: #{discriminator_forward.6} parent=23 // pred_fallthru
        _
    $region24: #{discriminator_forward.6} parent=5 // pred_fallthru
      _
    %p155 = scmp.le.s32.totalorder 1, %s9
    %p156 = scmp.lt.s32.totalorder %s9, 3
    %p157 = pnand %p155, %p156
    %p158 = pneg %p157
    // Predicated region
    $region29: #{discriminator_forward.6} parent=5 // pred_check
      _
    $region30: #{discriminator_forward.6} parent=5 // pred_check_branch
      %160 = sbr.rel (%p157) target = $region32
    $region31: #{discriminator_forward.6} parent=5 // pred_region
      %s161 = ssub.s32 %s9, 1
      %s162 = smul.u32 4, %s19
      %p163 = scmp.lt.s32.totalorder %s18, 1
      %s164 = scalar_select %p163, %s18, 1
      %p165 = scmp.lt.s32.totalorder %s162, 3
      %s166 = scalar_select %p165, %s162, 3
      %s167 = smul.addr %s164, 128
      %s168 = sadd.s32 %s166, %s167
      %s169 = smul.addr %s168, 4
      %s170 = scalar_lea.vmem %s0, %s169
      %p171 = pneg %p49
      %p172 = pneg %p46
      %p173 = pneg %p70
      %p174 = pneg %p67
      %p175 = pneg %p91
      %p176 = pneg %p88
      %p177 = pneg %p117
      %p178 = pneg %p114
      %p179 = scmp.lt.s32.totalorder %s18, 1
      %s180 = scalar_select %p179, %s18, 1
      %s181 = smul.addr %s180, 4
      %s182 = smul.addr %s181, 4
      %s183 = scalar_lea.vmem %s3, %s182
      %s184 = smul.u32 4, %s19
      %p185 = scmp.lt.s32.totalorder %s18, 1
      %s186 = scalar_select %p185, %s18, 1
      %p187 = scmp.lt.s32.totalorder %s184, 3
      %s188 = scalar_select %p187, %s184, 3
      %s189 = smul.addr %s186, 128
      %s190 = sadd.s32 %s188, %s189
      %s191 = smul.addr %s190, 4
      %s192 = scalar_lea.vmem %s0, %s191
      %s193 = smul.u32 4, %s19
      %p194 = scmp.lt.s32.totalorder %s18, 1
      %s195 = scalar_select %p194, %s18, 1
      %s196 = smul.addr %s195, 4
      %s197 = smul.addr %s196, 4
      %s198 = scalar_lea.vmem %s3, %s197
      %v199 = vld [vmem:[%s1] sm:$0xff]
      %v200 = vld [vmem:[%s192] sm:$0xff]
      %v201 = vld [vmem:[%s192 + $0x8] sm:$0xff]
      %v202 = vld [vmem:[%s192 + $0x10] sm:$0xff]
      %v203 = vld [vmem:[%s192 + $0x18] sm:$0xff]
      %v204 = vld [vmem:[%s192 + $0x20] sm:$0xff]
      %v205 = vld [vmem:[%s192 + $0x28] sm:$0xff]
      %v206 = vld [vmem:[%s192 + $0x30] sm:$0xff]
      %v207 = vld [vmem:[%s192 + $0x38] sm:$0xff]
      %v208 = vld [vmem:[%s192 + $0x40] sm:$0xff]
      %v209 = vld [vmem:[%s192 + $0x48] sm:$0xff]
      %v210 = vld [vmem:[%s192 + $0x50] sm:$0xff]
      %v211 = vld [vmem:[%s192 + $0x58] sm:$0xff]
      %v212 = vld [vmem:[%s192 + $0x60] sm:$0xff]
      %v213 = vld [vmem:[%s192 + $0x68] sm:$0xff]
      %v214 = vld [vmem:[%s192 + $0x70] sm:$0xff]
      %v215 = vld [vmem:[%s192 + $0x78] sm:$0xff]
      %v216 = vld [vmem:[%s192 + $0x80] sm:$0xff]
      %v217 = vld [vmem:[%s192 + $0x88] sm:$0xff]
      %v218 = vld [vmem:[%s192 + $0x90] sm:$0xff]
      %v219 = vld [vmem:[%s192 + $0x98] sm:$0xff]
      %v220 = vld [vmem:[%s192 + $0xa0] sm:$0xff]
      %v221 = vld [vmem:[%s192 + $0xa8] sm:$0xff]
      %v222 = vld [vmem:[%s192 + $0xb0] sm:$0xff]
      %v223 = vld [vmem:[%s192 + $0xb8] sm:$0xff]
      %v224 = vld [vmem:[%s192 + $0xc0] sm:$0xff]
      %v225 = vld [vmem:[%s192 + $0xc8] sm:$0xff]
      %v226 = vld [vmem:[%s192 + $0xd0] sm:$0xff]
      %v227 = vld [vmem:[%s192 + $0xd8] sm:$0xff]
      %v228 = vld [vmem:[%s192 + $0xe0] sm:$0xff]
      %v229 = vld [vmem:[%s192 + $0xe8] sm:$0xff]
      %v230 = vld [vmem:[%s192 + $0xf0] sm:$0xff]
      %v231 = vld [vmem:[%s192 + $0xf8] sm:$0xff]
      %v232 = vld [vmem:[%s192 + $0x100] sm:$0xff]
      %v233 = vld [vmem:[%s192 + $0x108] sm:$0xff]
      %v234 = vld [vmem:[%s192 + $0x110] sm:$0xff]
      %v235 = vld [vmem:[%s192 + $0x118] sm:$0xff]
      %v236 = vld [vmem:[%s192 + $0x120] sm:$0xff]
      %v237 = vld [vmem:[%s192 + $0x128] sm:$0xff]
      %v238 = vld [vmem:[%s192 + $0x130] sm:$0xff]
      %v239 = vld [vmem:[%s192 + $0x138] sm:$0xff]
      %v240 = vld [vmem:[%s192 + $0x140] sm:$0xff]
      %v241 = vld [vmem:[%s192 + $0x148] sm:$0xff]
      %v242 = vld [vmem:[%s192 + $0x150] sm:$0xff]
      %v243 = vld [vmem:[%s192 + $0x158] sm:$0xff]
      %v244 = vld [vmem:[%s192 + $0x160] sm:$0xff]
      %v245 = vld [vmem:[%s192 + $0x168] sm:$0xff]
      %v246 = vld [vmem:[%s192 + $0x170] sm:$0xff]
      %v247 = vld [vmem:[%s192 + $0x178] sm:$0xff]
      %v248 = vld [vmem:[%s192 + $0x180] sm:$0xff]
      %v249 = vld [vmem:[%s192 + $0x188] sm:$0xff]
      %v250 = vld [vmem:[%s192 + $0x190] sm:$0xff]
      %v251 = vld [vmem:[%s192 + $0x198] sm:$0xff]
      %v252 = vld [vmem:[%s192 + $0x1a0] sm:$0xff]
      %v253 = vld [vmem:[%s192 + $0x1a8] sm:$0xff]
      %v254 = vld [vmem:[%s192 + $0x1b0] sm:$0xff]
      %v255 = vld [vmem:[%s192 + $0x1b8] sm:$0xff]
      %v256 = vld [vmem:[%s192 + $0x1c0] sm:$0xff]
      %v257 = vld [vmem:[%s192 + $0x1c8] sm:$0xff]
      %v258 = vld [vmem:[%s192 + $0x1d0] sm:$0xff]
      %v259 = vld [vmem:[%s192 + $0x1d8] sm:$0xff]
      %v260 = vld [vmem:[%s192 + $0x1e0] sm:$0xff]
      %v261 = vld [vmem:[%s192 + $0x1e8] sm:$0xff]
      %v262 = vld [vmem:[%s192 + $0x1f0] sm:$0xff]
      %v263 = vld [vmem:[%s192 + $0x1f8] sm:$0xff]
      %v264 = vld [vmem:[%s2] sm:$0xff]
      %266 = vset.pattern.permute.xlu0 0
      %267 = vperm.xlu0 %266, %v264
      %v268 = vpop.permute.xlu0 %267
      %v271 = vunpack.c.l.b16 %v199
      %v272 = vunpack.c.h.b16 %v199
      %v273 = vpack.c.b16 %v271, %v271
      %v274 = vpack.c.b16 %v272, %v272
      %v341 = vunpack.c.l.b16 %v200
      %v342 = vunpack.c.h.b16 %v200
      %v343 = vunpack.c.l.b16 %v201
      %v344 = vunpack.c.h.b16 %v201
      %v345 = vunpack.c.l.b16 %v202
      %v346 = vunpack.c.h.b16 %v202
      %v347 = vunpack.c.l.b16 %v203
      %v348 = vunpack.c.h.b16 %v203
      %v349 = vunpack.c.l.b16 %v204
      %v350 = vunpack.c.h.b16 %v204
      %v351 = vunpack.c.l.b16 %v205
      %v352 = vunpack.c.h.b16 %v205
      %v353 = vunpack.c.l.b16 %v206
      %v354 = vunpack.c.h.b16 %v206
      %v355 = vunpack.c.l.b16 %v207
      %v356 = vunpack.c.h.b16 %v207
      %v357 = vunpack.c.l.b16 %v208
      %v358 = vunpack.c.h.b16 %v208
      %v359 = vunpack.c.l.b16 %v209
      %v360 = vunpack.c.h.b16 %v209
      %v361 = vunpack.c.l.b16 %v210
      %v362 = vunpack.c.h.b16 %v210
      %v363 = vunpack.c.l.b16 %v211
      %v364 = vunpack.c.h.b16 %v211
      %v365 = vunpack.c.l.b16 %v212
      %v366 = vunpack.c.h.b16 %v212
      %v367 = vunpack.c.l.b16 %v213
      %v368 = vunpack.c.h.b16 %v213
      %v369 = vunpack.c.l.b16 %v214
      %v370 = vunpack.c.h.b16 %v214
      %v371 = vunpack.c.l.b16 %v215
      %v372 = vunpack.c.h.b16 %v215
      %v373 = vunpack.c.l.b16 %v216
      %v374 = vunpack.c.h.b16 %v216
      %v375 = vunpack.c.l.b16 %v217
      %v376 = vunpack.c.h.b16 %v217
      %v377 = vunpack.c.l.b16 %v218
      %v378 = vunpack.c.h.b16 %v218
      %v379 = vunpack.c.l.b16 %v219
      %v380 = vunpack.c.h.b16 %v219
      %v381 = vunpack.c.l.b16 %v220
      %v382 = vunpack.c.h.b16 %v220
      %v383 = vunpack.c.l.b16 %v221
      %v384 = vunpack.c.h.b16 %v221
      %v385 = vunpack.c.l.b16 %v222
      %v386 = vunpack.c.h.b16 %v222
      %v387 = vunpack.c.l.b16 %v223
      %v388 = vunpack.c.h.b16 %v223
      %v389 = vunpack.c.l.b16 %v224
      %v390 = vunpack.c.h.b16 %v224
      %v391 = vunpack.c.l.b16 %v225
      %v392 = vunpack.c.h.b16 %v225
      %v393 = vunpack.c.l.b16 %v226
      %v394 = vunpack.c.h.b16 %v226
      %v395 = vunpack.c.l.b16 %v227
      %v396 = vunpack.c.h.b16 %v227
      %v397 = vunpack.c.l.b16 %v228
      %v398 = vunpack.c.h.b16 %v228
      %v399 = vunpack.c.l.b16 %v229
      %v400 = vunpack.c.h.b16 %v229
      %v401 = vunpack.c.l.b16 %v230
      %v402 = vunpack.c.h.b16 %v230
      %v403 = vunpack.c.l.b16 %v231
      %v404 = vunpack.c.h.b16 %v231
      %v405 = vunpack.c.l.b16 %v232
      %v406 = vunpack.c.h.b16 %v232
      %v407 = vunpack.c.l.b16 %v233
      %v408 = vunpack.c.h.b16 %v233
      %v409 = vunpack.c.l.b16 %v234
      %v410 = vunpack.c.h.b16 %v234
      %v411 = vunpack.c.l.b16 %v235
      %v412 = vunpack.c.h.b16 %v235
      %v413 = vunpack.c.l.b16 %v236
      %v414 = vunpack.c.h.b16 %v236
      %v415 = vunpack.c.l.b16 %v237
      %v416 = vunpack.c.h.b16 %v237
      %v417 = vunpack.c.l.b16 %v238
      %v418 = vunpack.c.h.b16 %v238
      %v419 = vunpack.c.l.b16 %v239
      %v420 = vunpack.c.h.b16 %v239
      %v421 = vunpack.c.l.b16 %v240
      %v422 = vunpack.c.h.b16 %v240
      %v423 = vunpack.c.l.b16 %v241
      %v424 = vunpack.c.h.b16 %v241
      %v425 = vunpack.c.l.b16 %v242
      %v426 = vunpack.c.h.b16 %v242
      %v427 = vunpack.c.l.b16 %v243
      %v428 = vunpack.c.h.b16 %v243
      %v429 = vunpack.c.l.b16 %v244
      %v430 = vunpack.c.h.b16 %v244
      %v431 = vunpack.c.l.b16 %v245
      %v432 = vunpack.c.h.b16 %v245
      %v433 = vunpack.c.l.b16 %v246
      %v434 = vunpack.c.h.b16 %v246
      %v435 = vunpack.c.l.b16 %v247
      %v436 = vunpack.c.h.b16 %v247
      %v437 = vunpack.c.l.b16 %v248
      %v438 = vunpack.c.h.b16 %v248
      %v439 = vunpack.c.l.b16 %v249
      %v440 = vunpack.c.h.b16 %v249
      %v441 = vunpack.c.l.b16 %v250
      %v442 = vunpack.c.h.b16 %v250
      %v443 = vunpack.c.l.b16 %v251
      %v444 = vunpack.c.h.b16 %v251
      %v445 = vunpack.c.l.b16 %v252
      %v446 = vunpack.c.h.b16 %v252
      %v447 = vunpack.c.l.b16 %v253
      %v448 = vunpack.c.h.b16 %v253
      %v449 = vunpack.c.l.b16 %v254
      %v450 = vunpack.c.h.b16 %v254
      %v451 = vunpack.c.l.b16 %v255
      %v452 = vunpack.c.h.b16 %v255
      %v453 = vunpack.c.l.b16 %v256
      %v454 = vunpack.c.h.b16 %v256
      %v455 = vunpack.c.l.b16 %v257
      %v456 = vunpack.c.h.b16 %v257
      %v457 = vunpack.c.l.b16 %v258
      %v458 = vunpack.c.h.b16 %v258
      %v459 = vunpack.c.l.b16 %v259
      %v460 = vunpack.c.h.b16 %v259
      %v461 = vunpack.c.l.b16 %v260
      %v462 = vunpack.c.h.b16 %v260
      %v463 = vunpack.c.l.b16 %v261
      %v464 = vunpack.c.h.b16 %v261
      %v465 = vunpack.c.l.b16 %v262
      %v466 = vunpack.c.h.b16 %v262
      %v467 = vunpack.c.l.b16 %v263
      %v468 = vunpack.c.h.b16 %v263
      %v469 = vpack.c.b16 %v345, %v341
      %v470 = vpack.c.b16 %v346, %v342
      %v471 = vpack.c.b16 %v347, %v343
      %v472 = vpack.c.b16 %v348, %v344
      %v473 = vpack.c.b16 %v353, %v349
      %v474 = vpack.c.b16 %v354, %v350
      %v475 = vpack.c.b16 %v355, %v351
      %v476 = vpack.c.b16 %v356, %v352
      %v477 = vpack.c.b16 %v361, %v357
      %v478 = vpack.c.b16 %v362, %v358
      %v479 = vpack.c.b16 %v363, %v359
      %v480 = vpack.c.b16 %v364, %v360
      %v481 = vpack.c.b16 %v369, %v365
      %v482 = vpack.c.b16 %v370, %v366
      %v483 = vpack.c.b16 %v371, %v367
      %v484 = vpack.c.b16 %v372, %v368
      %v485 = vpack.c.b16 %v377, %v373
      %v486 = vpack.c.b16 %v378, %v374
      %v487 = vpack.c.b16 %v379, %v375
      %v488 = vpack.c.b16 %v380, %v376
      %v489 = vpack.c.b16 %v385, %v381
      %v490 = vpack.c.b16 %v386, %v382
      %v491 = vpack.c.b16 %v387, %v383
      %v492 = vpack.c.b16 %v388, %v384
      %v493 = vpack.c.b16 %v393, %v389
      %v494 = vpack.c.b16 %v394, %v390
      %v495 = vpack.c.b16 %v395, %v391
      %v496 = vpack.c.b16 %v396, %v392
      %v497 = vpack.c.b16 %v401, %v397
      %v498 = vpack.c.b16 %v402, %v398
      %v499 = vpack.c.b16 %v403, %v399
      %v500 = vpack.c.b16 %v404, %v400
      %v501 = vpack.c.b16 %v409, %v405
      %v502 = vpack.c.b16 %v410, %v406
      %v503 = vpack.c.b16 %v411, %v407
      %v504 = vpack.c.b16 %v412, %v408
      %v505 = vpack.c.b16 %v417, %v413
      %v506 = vpack.c.b16 %v418, %v414
      %v507 = vpack.c.b16 %v419, %v415
      %v508 = vpack.c.b16 %v420, %v416
      %v509 = vpack.c.b16 %v425, %v421
      %v510 = vpack.c.b16 %v426, %v422
      %v511 = vpack.c.b16 %v427, %v423
      %v512 = vpack.c.b16 %v428, %v424
      %v513 = vpack.c.b16 %v433, %v429
      %v514 = vpack.c.b16 %v434, %v430
      %v515 = vpack.c.b16 %v435, %v431
      %v516 = vpack.c.b16 %v436, %v432
      %v517 = vpack.c.b16 %v441, %v437
      %v518 = vpack.c.b16 %v442, %v438
      %v519 = vpack.c.b16 %v443, %v439
      %v520 = vpack.c.b16 %v444, %v440
      %v521 = vpack.c.b16 %v449, %v445
      %v522 = vpack.c.b16 %v450, %v446
      %v523 = vpack.c.b16 %v451, %v447
      %v524 = vpack.c.b16 %v452, %v448
      %v525 = vpack.c.b16 %v457, %v453
      %v526 = vpack.c.b16 %v458, %v454
      %v527 = vpack.c.b16 %v459, %v455
      %v528 = vpack.c.b16 %v460, %v456
      %v529 = vpack.c.b16 %v465, %v461
      %v530 = vpack.c.b16 %v466, %v462
      %v531 = vpack.c.b16 %v467, %v463
      %v532 = vpack.c.b16 %v468, %v464
      %597 = vmatprep.subr.bf16.mxu0 %v498
      %598 = vmatpush1.bf16.msra.mxu0 %v497
      %599 = vmatprep.subr.bf16.mxu0 %v494
      %600 = vmatpush1.bf16.msra.mxu0 %v493
      %601 = vmatprep.subr.bf16.mxu0 %v490
      %602 = vmatpush1.bf16.msra.mxu0 %v489
      %603 = vmatprep.subr.bf16.mxu0 %v486
      %604 = vmatpush1.bf16.msra.mxu0 %v485
      %605 = vmatprep.subr.bf16.mxu0 %v482
      %606 = vmatpush1.bf16.msra.mxu0 %v481
      %607 = vmatprep.subr.bf16.mxu0 %v478
      %608 = vmatpush1.bf16.msra.mxu0 %v477
      %609 = vmatprep.subr.bf16.mxu0 %v474
      %610 = vmatpush1.bf16.msra.mxu0 %v473
      %611 = vmatprep.subr.bf16.mxu0 %v470
      %612 = vmatpush1.bf16.msra.mxu0 %v469
      %613 = vmatprep.subr.bf16.mxu0 %v530
      %614 = vmatpush2.bf16.msra.mxu0 %v529
      %615 = vmatprep.subr.bf16.mxu0 %v526
      %616 = vmatpush2.bf16.msra.mxu0 %v525
      %617 = vmatprep.subr.bf16.mxu0 %v522
      %618 = vmatpush2.bf16.msra.mxu0 %v521
      %619 = vmatprep.subr.bf16.mxu0 %v518
      %620 = vmatpush2.bf16.msra.mxu0 %v517
      %621 = vmatprep.subr.bf16.mxu0 %v514
      %622 = vmatpush2.bf16.msra.mxu0 %v513
      %623 = vmatprep.subr.bf16.mxu0 %v510
      %624 = vmatpush2.bf16.msra.mxu0 %v509
      %625 = vmatprep.subr.bf16.mxu0 %v506
      %626 = vmatpush2.bf16.msra.mxu0 %v505
      %627 = vmatprep.subr.bf16.mxu0 %v502
      %628 = vmatpush2.bf16.msra.mxu0 %v501
      %629 = vmatprep.mubr.bf16.mxu0 %v274
      %630 = vmatmul.mubr.bf16.gmra.mxu0 %v273
      %v631 = vpop.f32.mrf.mxu0
      %v632 = vadd.f32 %v268, %v631
      %v633 = vpop.f32.mrf.mxu0
      %v634 = vadd.f32 %v268, %v633
      %v635 = vpop.f32.mrf.mxu0
      %v636 = vpop.f32.mrf.mxu0
      %637 = vdwg.mxu0
      %638 = vmatprep.subr.bf16.mxu0 %v500
      %639 = vmatpush1.bf16.msra.mxu0 %v499
      %640 = vmatprep.subr.bf16.mxu0 %v496
      %641 = vmatpush1.bf16.msra.mxu0 %v495
      %642 = vmatprep.subr.bf16.mxu0 %v492
      %643 = vmatpush1.bf16.msra.mxu0 %v491
      %644 = vmatprep.subr.bf16.mxu0 %v488
      %645 = vmatpush1.bf16.msra.mxu0 %v487
      %646 = vmatprep.subr.bf16.mxu0 %v484
      %647 = vmatpush1.bf16.msra.mxu0 %v483
      %648 = vmatprep.subr.bf16.mxu0 %v480
      %649 = vmatpush1.bf16.msra.mxu0 %v479
      %650 = vmatprep.subr.bf16.mxu0 %v476
      %651 = vmatpush1.bf16.msra.mxu0 %v475
      %652 = vmatprep.subr.bf16.mxu0 %v472
      %653 = vmatpush1.bf16.msra.mxu0 %v471
      %654 = vmatprep.subr.bf16.mxu0 %v532
      %655 = vmatpush2.bf16.msra.mxu0 %v531
      %656 = vmatprep.subr.bf16.mxu0 %v528
      %657 = vmatpush2.bf16.msra.mxu0 %v527
      %658 = vmatprep.subr.bf16.mxu0 %v524
      %659 = vmatpush2.bf16.msra.mxu0 %v523
      %660 = vmatprep.subr.bf16.mxu0 %v520
      %661 = vmatpush2.bf16.msra.mxu0 %v519
      %662 = vmatprep.subr.bf16.mxu0 %v516
      %663 = vmatpush2.bf16.msra.mxu0 %v515
      %664 = vmatprep.subr.bf16.mxu0 %v512
      %665 = vmatpush2.bf16.msra.mxu0 %v511
      %666 = vmatprep.subr.bf16.mxu0 %v508
      %667 = vmatpush2.bf16.msra.mxu0 %v507
      %668 = vmatprep.subr.bf16.mxu0 %v504
      %669 = vmatpush2.bf16.msra.mxu0 %v503
      %670 = vmatprep.mubr.bf16.mxu0 %v274
      %671 = vmatmul.mubr.bf16.gmra.mxu0 %v273
      %v672 = vpop.f32.mrf.mxu0
      %v673 = vadd.f32 %v268, %v672
      %v674 = vpop.f32.mrf.mxu0
      %v675 = vadd.f32 %v268, %v674
      %v676 = vpop.f32.mrf.mxu0
      %v677 = vpop.f32.mrf.mxu0
      %678 = vdwg.mxu0
      %v679 = vadd.f32 %v632, %v634
      %v680 = vadd.f32 %v679, %v673
      %v681 = vadd.f32 %v680, %v675
      %682 = vadd.xlane.f32.xlu0 %v681
      %v683 = vpop.xlane.xlu0 %682
      %v684 = vrcp.pop 512.0
      %v685 = vmul.f32 %v683, %v684
      %v686 = vmul.f32 %v632, %v632
      %v687 = vmul.f32 %v634, %v634
      %v688 = vmul.f32 %v673, %v673
      %v689 = vmul.f32 %v675, %v675
      %v690 = vadd.f32 %v686, %v687
      %v691 = vadd.f32 %v690, %v688
      %v692 = vadd.f32 %v691, %v689
      %693 = vadd.xlane.f32.xlu0 %v692
      %v694 = vpop.xlane.xlu0 %693
      %v695 = vmul.f32 %v694, %v684
      %v696 = vmul.f32 %v685, %v685
      %v697 = vsub.f32 %v695, %v696
      %v698 = vmax.f32 %v697, 0.0
      %v699 = vsub.f32 %v632, %v685
      %v700 = vsub.f32 %v634, %v685
      %v701 = vsub.f32 %v673, %v685
      %v702 = vsub.f32 %v675, %v685
      %v703 = vadd.f32 %v698, 1e-05
      %v704 = vrsqrt.pop %v703
      %v705 = vmul.f32 %v699, %v704
      %v706 = vmul.f32 %v700, %v704
      %v707 = vmul.f32 %v701, %v704
      %v708 = vmul.f32 %v702, %v704
      %vm709 = vcmp.ge.f32.partialorder %v705, 0.0
      %vm710 = vcmp.ge.f32.partialorder %v706, 0.0
      %vm711 = vcmp.ge.f32.partialorder %v707, 0.0
      %vm712 = vcmp.ge.f32.partialorder %v708, 0.0
      %v713 = vmul.f32 %v705, 0.2
      %v714 = vmul.f32 %v706, 0.2
      %v715 = vmul.f32 %v707, 0.2
      %v716 = vmul.f32 %v708, 0.2
      %v717 = vsel %vm709, %v705, %v713
      %v718 = vsel %vm710, %v706, %v714
      %v719 = vsel %vm711, %v707, %v715
      %v720 = vsel %vm712, %v708, %v716
      %v721 = vpack.c.bf16 %v717, %v717
      %v722 = vpack.c.bf16 %v718, %v718
      %v723 = vpack.c.bf16 %v719, %v719
      %v724 = vpack.c.bf16 %v720, %v720
      %v729 = vunpack.c.l.b16 %v721
      %v730 = vunpack.c.l.b16 %v722
      %v731 = vunpack.c.l.b16 %v723
      %v732 = vunpack.c.l.b16 %v724
      %v733 = vpack.c.b16 %v730, %v729
      %v734 = vpack.c.b16 %v732, %v731
      %737 = vst [vmem:[%s198] sm:$0xff] %v733
      %738 = vst [vmem:[%s198 + $0x8] sm:$0xff] %v734
      %p739 = scmp.lt.s32.totalorder %s18, 1
      %s740 = scalar_select %p739, %s18, 1
      %s741 = smul.addr %s740, 4
      %s742 = smul.addr %s741, 4
      %s743 = scalar_lea.vmem %s3, %s742
      // Predicated region
      $region33: #{discriminator_forward.6} parent=31 // pred_check
        %p744 = pneg %p114
      $region34: #{discriminator_forward.6} parent=31 // pred_check_branch
        %746 = sbr.rel (%p744) target = $region36
      $region35: #{discriminator_forward.6} parent=31 // pred_region
        _
      $region36: #{discriminator_forward.6} parent=31 // pred_fallthru
        _
    $region32: #{discriminator_forward.6} parent=5 // pred_fallthru
      _
    %p747 = scmp.le.s32.totalorder 2, %s9
    // Predicated region
    $region37: #{discriminator_forward.6} parent=5 // pred_check
      %p748 = pneg %p747
    $region38: #{discriminator_forward.6} parent=5 // pred_check_branch
      %750 = sbr.rel (%p748) target = $region40
    $region39: #{discriminator_forward.6} parent=5 // pred_region
      %s751 = ssub.s32 %s9, 2
      // Predicated region
      $region41: #{discriminator_forward.6} parent=39 // pred_check
        %p752 = pneg %p120
      $region42: #{discriminator_forward.6} parent=39 // pred_check_branch
        %754 = sbr.rel (%p752) target = $region44
      $region43: #{discriminator_forward.6} parent=39 // pred_region
        %p755 = scmp.lt.s32.totalorder %s20, 1
        %s756 = scalar_select %p755, %s20, 1
        %s757 = smul.addr %s756, 4
        %s758 = smul.addr %s757, 4
        %s759 = scalar_lea.vmem %s3, %s758
      $region44: #{discriminator_forward.6} parent=39 // pred_fallthru
        _
    $region40: #{discriminator_forward.6} parent=5 // pred_fallthru
      _
  $region6: #{discriminator_forward.6} parent=0 // loop_footer
    %s13 = sadd.s32 1, %s9
  $region7: #{discriminator_forward.6} parent=0 // loop_footer_branch
    %8 = sbr.rel target = $region3
  $region8: #{discriminator_forward.6} parent=0 // loop_exit
    _

// kernel: discriminator_forward.7
$region0: #{discriminator_forward.7}
  #allocation0 [shape = 'u32[]', space=smem, size = 0x4, offset = 0x4, fixed_abs, tag = 'smem constant byte address 0x4 - core index']
  #allocation1 [shape = 'u32[144,128]{1,0:T(1,128)}', space=vmem, size = 0x12000, scoped, tag = 'internal scratch']
  %s0 = inlined_call_operand.vmem [shape: bf16[512,128], index: 0, kind: input, shape index: {}]
  %s1 = inlined_call_operand.vmem [shape: bf16[16,512], index: 1, kind: input, shape index: {}]
  %s2 = inlined_call_operand.vmem [shape: f32[16,1], index: 2, kind: input, shape index: {}]
  %s3 = inlined_call_operand.vmem [shape: bf16[16,128], index: 3, kind: output, shape index: {}]
  %s4 = sld [smem:[#allocation0]]
  $region22: #{discriminator_forward.7} parent=0
    _
  %s6 = ssub.s32 1, %s4
  %s7 = scalar_select 0, %s6, %s4
  // Predicated region
  $region2: #{discriminator_forward.7} parent=0 // pred_check
    _
  $region3: #{discriminator_forward.7} parent=0 // pred_check_branch
    %9 = sbr.rel (0) target = $region5
  $region4: #{discriminator_forward.7} parent=0 // pred_region
    _
  $region5: #{discriminator_forward.7} parent=0 // pred_fallthru
    _
  // Predicated region
  $region6: #{discriminator_forward.7} parent=0 // pred_check
    _
  $region7: #{discriminator_forward.7} parent=0 // pred_check_branch
    %11 = sbr.rel (0) target = $region9
  $region8: #{discriminator_forward.7} parent=0 // pred_region
    _
  $region9: #{discriminator_forward.7} parent=0 // pred_fallthru
    _
  // Predicated region
  $region10: #{discriminator_forward.7} parent=0 // pred_check
    _
  $region11: #{discriminator_forward.7} parent=0 // pred_check_branch
    %13 = sbr.rel (0) target = $region13
  $region12: #{discriminator_forward.7} parent=0 // pred_region
    _
  $region13: #{discriminator_forward.7} parent=0 // pred_fallthru
    _
  %v15 = vld [vmem:[%s1] sm:$0xff]
  %v16 = vld [vmem:[%s1 + $0x8] sm:$0xff]
  %v17 = vld [vmem:[%s1 + $0x10] sm:$0xff]
  %v18 = vld [vmem:[%s1 + $0x18] sm:$0xff]
  %v19 = vld [vmem:[%s0] sm:$0xf]
  %v20 = vld [vmem:[%s0 + $0x4] sm:$0xf]
  %v21 = vld [vmem:[%s0 + $0x8] sm:$0xf]
  %v22 = vld [vmem:[%s0 + $0xc] sm:$0xf]
  %v23 = vld [vmem:[%s0 + $0x10] sm:$0xf]
  %v24 = vld [vmem:[%s0 + $0x14] sm:$0xf]
  %v25 = vld [vmem:[%s0 + $0x18] sm:$0xf]
  %v26 = vld [vmem:[%s0 + $0x1c] sm:$0xf]
  %v27 = vld [vmem:[%s0 + $0x20] sm:$0xf]
  %v28 = vld [vmem:[%s0 + $0x24] sm:$0xf]
  %v29 = vld [vmem:[%s0 + $0x28] sm:$0xf]
  %v30 = vld [vmem:[%s0 + $0x2c] sm:$0xf]
  %v31 = vld [vmem:[%s0 + $0x30] sm:$0xf]
  %v32 = vld [vmem:[%s0 + $0x34] sm:$0xf]
  %v33 = vld [vmem:[%s0 + $0x38] sm:$0xf]
  %v34 = vld [vmem:[%s0 + $0x3c] sm:$0xf]
  %v35 = vld [vmem:[%s0 + $0x40] sm:$0xf]
  %v36 = vld [vmem:[%s0 + $0x44] sm:$0xf]
  %v37 = vld [vmem:[%s0 + $0x48] sm:$0xf]
  %v38 = vld [vmem:[%s0 + $0x4c] sm:$0xf]
  %v39 = vld [vmem:[%s0 + $0x50] sm:$0xf]
  %v40 = vld [vmem:[%s0 + $0x54] sm:$0xf]
  %v41 = vld [vmem:[%s0 + $0x58] sm:$0xf]
  %v42 = vld [vmem:[%s0 + $0x5c] sm:$0xf]
  %v43 = vld [vmem:[%s0 + $0x60] sm:$0xf]
  %v44 = vld [vmem:[%s0 + $0x64] sm:$0xf]
  %v45 = vld [vmem:[%s0 + $0x68] sm:$0xf]
  %v46 = vld [vmem:[%s0 + $0x6c] sm:$0xf]
  %v47 = vld [vmem:[%s0 + $0x70] sm:$0xf]
  %v48 = vld [vmem:[%s0 + $0x74] sm:$0xf]
  %v49 = vld [vmem:[%s0 + $0x78] sm:$0xf]
  %v50 = vld [vmem:[%s0 + $0x7c] sm:$0xf]
  %v51 = vld [vmem:[%s0 + $0x80] sm:$0xf]
  %v52 = vld [vmem:[%s0 + $0x84] sm:$0xf]
  %v53 = vld [vmem:[%s0 + $0x88] sm:$0xf]
  %v54 = vld [vmem:[%s0 + $0x8c] sm:$0xf]
  %v55 = vld [vmem:[%s0 + $0x90] sm:$0xf]
  %v56 = vld [vmem:[%s0 + $0x94] sm:$0xf]
  %v57 = vld [vmem:[%s0 + $0x98] sm:$0xf]
  %v58 = vld [vmem:[%s0 + $0x9c] sm:$0xf]
  %v59 = vld [vmem:[%s0 + $0xa0] sm:$0xf]
  %v60 = vld [vmem:[%s0 + $0xa4] sm:$0xf]
  %v61 = vld [vmem:[%s0 + $0xa8] sm:$0xf]
  %v62 = vld [vmem:[%s0 + $0xac] sm:$0xf]
  %v63 = vld [vmem:[%s0 + $0xb0] sm:$0xf]
  %v64 = vld [vmem:[%s0 + $0xb4] sm:$0xf]
  %v65 = vld [vmem:[%s0 + $0xb8] sm:$0xf]
  %v66 = vld [vmem:[%s0 + $0xbc] sm:$0xf]
  %v67 = vld [vmem:[%s0 + $0xc0] sm:$0xf]
  %v68 = vld [vmem:[%s0 + $0xc4] sm:$0xf]
  %v69 = vld [vmem:[%s0 + $0xc8] sm:$0xf]
  %v70 = vld [vmem:[%s0 + $0xcc] sm:$0xf]
  %v71 = vld [vmem:[%s0 + $0xd0] sm:$0xf]
  %v72 = vld [vmem:[%s0 + $0xd4] sm:$0xf]
  %v73 = vld [vmem:[%s0 + $0xd8] sm:$0xf]
  %v74 = vld [vmem:[%s0 + $0xdc] sm:$0xf]
  %v75 = vld [vmem:[%s0 + $0xe0] sm:$0xf]
  %v76 = vld [vmem:[%s0 + $0xe4] sm:$0xf]
  %v77 = vld [vmem:[%s0 + $0xe8] sm:$0xf]
  %v78 = vld [vmem:[%s0 + $0xec] sm:$0xf]
  %v79 = vld [vmem:[%s0 + $0xf0] sm:$0xf]
  %v80 = vld [vmem:[%s0 + $0xf4] sm:$0xf]
  %v81 = vld [vmem:[%s0 + $0xf8] sm:$0xf]
  %v82 = vld [vmem:[%s0 + $0xfc] sm:$0xf]
  %v83 = vld [vmem:[%s2] sm:$0xff]
  %v84 = vld [vmem:[%s2 + $0x8] sm:$0xff]
  %86 = vset.pattern.permute.xlu0 0
  %87 = vperm.xlu0 %86, %v83
  %v88 = vpop.permute.xlu0 %87
  %91 = vset.pattern.permute.xlu0 0
  %92 = vperm.xlu0 %91, %v84
  %v93 = vpop.permute.xlu0 %92
  %v99 = vunpack.c.l.b16 %v15
  %v100 = vunpack.c.h.b16 %v15
  %v101 = vunpack.c.l.b16 %v16
  %v102 = vunpack.c.h.b16 %v16
  %v103 = vunpack.c.l.b16 %v17
  %v104 = vunpack.c.h.b16 %v17
  %v105 = vunpack.c.l.b16 %v18
  %v106 = vunpack.c.h.b16 %v18
  %v107 = vpack.c.b16 %v103, %v99
  %v108 = vpack.c.b16 %v104, %v100
  %v109 = vpack.c.b16 %v105, %v101
  %v110 = vpack.c.b16 %v106, %v102
  %v179 = vunpack.c.l.b16 %v19
  %v180 = vunpack.c.l.b16 %v20
  %v181 = vunpack.c.l.b16 %v21
  %v182 = vunpack.c.l.b16 %v22
  %v183 = vunpack.c.l.b16 %v23
  %v184 = vunpack.c.l.b16 %v24
  %v185 = vunpack.c.l.b16 %v25
  %v186 = vunpack.c.l.b16 %v26
  %v187 = vunpack.c.l.b16 %v27
  %v188 = vunpack.c.l.b16 %v28
  %v189 = vunpack.c.l.b16 %v29
  %v190 = vunpack.c.l.b16 %v30
  %v191 = vunpack.c.l.b16 %v31
  %v192 = vunpack.c.l.b16 %v32
  %v193 = vunpack.c.l.b16 %v33
  %v194 = vunpack.c.l.b16 %v34
  %v195 = vunpack.c.l.b16 %v35
  %v196 = vunpack.c.l.b16 %v36
  %v197 = vunpack.c.l.b16 %v37
  %v198 = vunpack.c.l.b16 %v38
  %v199 = vunpack.c.l.b16 %v39
  %v200 = vunpack.c.l.b16 %v40
  %v201 = vunpack.c.l.b16 %v41
  %v202 = vunpack.c.l.b16 %v42
  %v203 = vunpack.c.l.b16 %v43
  %v204 = vunpack.c.l.b16 %v44
  %v205 = vunpack.c.l.b16 %v45
  %v206 = vunpack.c.l.b16 %v46
  %v207 = vunpack.c.l.b16 %v47
  %v208 = vunpack.c.l.b16 %v48
  %v209 = vunpack.c.l.b16 %v49
  %v210 = vunpack.c.l.b16 %v50
  %v211 = vunpack.c.l.b16 %v51
  %v212 = vunpack.c.l.b16 %v52
  %v213 = vunpack.c.l.b16 %v53
  %v214 = vunpack.c.l.b16 %v54
  %v215 = vunpack.c.l.b16 %v55
  %v216 = vunpack.c.l.b16 %v56
  %v217 = vunpack.c.l.b16 %v57
  %v218 = vunpack.c.l.b16 %v58
  %v219 = vunpack.c.l.b16 %v59
  %v220 = vunpack.c.l.b16 %v60
  %v221 = vunpack.c.l.b16 %v61
  %v222 = vunpack.c.l.b16 %v62
  %v223 = vunpack.c.l.b16 %v63
  %v224 = vunpack.c.l.b16 %v64
  %v225 = vunpack.c.l.b16 %v65
  %v226 = vunpack.c.l.b16 %v66
  %v227 = vunpack.c.l.b16 %v67
  %v228 = vunpack.c.l.b16 %v68
  %v229 = vunpack.c.l.b16 %v69
  %v230 = vunpack.c.l.b16 %v70
  %v231 = vunpack.c.l.b16 %v71
  %v232 = vunpack.c.l.b16 %v72
  %v233 = vunpack.c.l.b16 %v73
  %v234 = vunpack.c.l.b16 %v74
  %v235 = vunpack.c.l.b16 %v75
  %v236 = vunpack.c.l.b16 %v76
  %v237 = vunpack.c.l.b16 %v77
  %v238 = vunpack.c.l.b16 %v78
  %v239 = vunpack.c.l.b16 %v79
  %v240 = vunpack.c.l.b16 %v80
  %v241 = vunpack.c.l.b16 %v81
  %v242 = vunpack.c.l.b16 %v82
  %v243 = vpack.c.b16 %v180, %v179
  %v244 = vpack.c.b16 %v182, %v181
  %v245 = vpack.c.b16 %v184, %v183
  %v246 = vpack.c.b16 %v186, %v185
  %v247 = vpack.c.b16 %v188, %v187
  %v248 = vpack.c.b16 %v190, %v189
  %v249 = vpack.c.b16 %v192, %v191
  %v250 = vpack.c.b16 %v194, %v193
  %v251 = vpack.c.b16 %v196, %v195
  %v252 = vpack.c.b16 %v198, %v197
  %v253 = vpack.c.b16 %v200, %v199
  %v254 = vpack.c.b16 %v202, %v201
  %v255 = vpack.c.b16 %v204, %v203
  %v256 = vpack.c.b16 %v206, %v205
  %v257 = vpack.c.b16 %v208, %v207
  %v258 = vpack.c.b16 %v210, %v209
  %v259 = vpack.c.b16 %v212, %v211
  %v260 = vpack.c.b16 %v214, %v213
  %v261 = vpack.c.b16 %v216, %v215
  %v262 = vpack.c.b16 %v218, %v217
  %v263 = vpack.c.b16 %v220, %v219
  %v264 = vpack.c.b16 %v222, %v221
  %v265 = vpack.c.b16 %v224, %v223
  %v266 = vpack.c.b16 %v226, %v225
  %v267 = vpack.c.b16 %v228, %v227
  %v268 = vpack.c.b16 %v230, %v229
  %v269 = vpack.c.b16 %v232, %v231
  %v270 = vpack.c.b16 %v234, %v233
  %v271 = vpack.c.b16 %v236, %v235
  %v272 = vpack.c.b16 %v238, %v237
  %v273 = vpack.c.b16 %v240, %v239
  %v274 = vpack.c.b16 %v242, %v241
  %307 = vmatprep.subr.bf16.mxu0 0
  %308 = vmatpush1.bf16.msra.mxu0 %v250
  %309 = vmatprep.subr.bf16.mxu0 0
  %310 = vmatpush1.bf16.msra.mxu0 %v249
  %311 = vmatprep.subr.bf16.mxu0 0
  %312 = vmatpush1.bf16.msra.mxu0 %v248
  %313 = vmatprep.subr.bf16.mxu0 0
  %314 = vmatpush1.bf16.msra.mxu0 %v247
  %315 = vmatprep.subr.bf16.mxu0 0
  %316 = vmatpush1.bf16.msra.mxu0 %v246
  %317 = vmatprep.subr.bf16.mxu0 0
  %318 = vmatpush1.bf16.msra.mxu0 %v245
  %319 = vmatprep.subr.bf16.mxu0 0
  %320 = vmatpush1.bf16.msra.mxu0 %v244
  %321 = vmatprep.subr.bf16.mxu0 0
  %322 = vmatpush1.bf16.msra.mxu0 %v243
  %323 = vmatprep.subr.bf16.mxu0 0
  %324 = vmatpush2.bf16.msra.mxu0 %v258
  %325 = vmatprep.subr.bf16.mxu0 0
  %326 = vmatpush2.bf16.msra.mxu0 %v257
  %327 = vmatprep.subr.bf16.mxu0 0
  %328 = vmatpush2.bf16.msra.mxu0 %v256
  %329 = vmatprep.subr.bf16.mxu0 0
  %330 = vmatpush2.bf16.msra.mxu0 %v255
  %331 = vmatprep.subr.bf16.mxu0 0
  %332 = vmatpush2.bf16.msra.mxu0 %v254
  %333 = vmatprep.subr.bf16.mxu0 0
  %334 = vmatpush2.bf16.msra.mxu0 %v253
  %335 = vmatprep.subr.bf16.mxu0 0
  %336 = vmatpush2.bf16.msra.mxu0 %v252
  %337 = vmatprep.subr.bf16.mxu0 0
  %338 = vmatpush2.bf16.msra.mxu0 %v251
  %339 = vmatprep.mubr.bf16.mxu0 %v108
  %340 = vmatmul.mubr.bf16.gmra.mxu0 %v107
  %v341 = vpop.f32.mrf.mxu0
  %v342 = vadd.f32 %v88, %v341
  %v343 = vpop.f32.mrf.mxu0
  %v344 = vpop.f32.mrf.mxu0
  %v345 = vadd.f32 %v93, %v344
  %v346 = vpop.f32.mrf.mxu0
  %347 = vdwg.mxu0
  %348 = vmatprep.subr.bf16.mxu0 0
  %349 = vmatpush1.bf16.msra.mxu0 %v266
  %350 = vmatprep.subr.bf16.mxu0 0
  %351 = vmatpush1.bf16.msra.mxu0 %v265
  %352 = vmatprep.subr.bf16.mxu0 0
  %353 = vmatpush1.bf16.msra.mxu0 %v264
  %354 = vmatprep.subr.bf16.mxu0 0
  %355 = vmatpush1.bf16.msra.mxu0 %v263
  %356 = vmatprep.subr.bf16.mxu0 0
  %357 = vmatpush1.bf16.msra.mxu0 %v262
  %358 = vmatprep.subr.bf16.mxu0 0
  %359 = vmatpush1.bf16.msra.mxu0 %v261
  %360 = vmatprep.subr.bf16.mxu0 0
  %361 = vmatpush1.bf16.msra.mxu0 %v260
  %362 = vmatprep.subr.bf16.mxu0 0
  %363 = vmatpush1.bf16.msra.mxu0 %v259
  %364 = vmatprep.subr.bf16.mxu0 0
  %365 = vmatpush2.bf16.msra.mxu0 %v274
  %366 = vmatprep.subr.bf16.mxu0 0
  %367 = vmatpush2.bf16.msra.mxu0 %v273
  %368 = vmatprep.subr.bf16.mxu0 0
  %369 = vmatpush2.bf16.msra.mxu0 %v272
  %370 = vmatprep.subr.bf16.mxu0 0
  %371 = vmatpush2.bf16.msra.mxu0 %v271
  %372 = vmatprep.subr.bf16.mxu0 0
  %373 = vmatpush2.bf16.msra.mxu0 %v270
  %374 = vmatprep.subr.bf16.mxu0 0
  %375 = vmatpush2.bf16.msra.mxu0 %v269
  %376 = vmatprep.subr.bf16.mxu0 0
  %377 = vmatpush2.bf16.msra.mxu0 %v268
  %378 = vmatprep.subr.bf16.mxu0 0
  %379 = vmatpush2.bf16.msra.mxu0 %v267
  %380 = vmatprep.mubr.bf16.mxu0 %v110
  %381 = vmatmul.mubr.bf16.gmra.mxu0 %v109
  %v382 = vpop.f32.mrf.mxu0
  %v383 = vadd.f32 %v342, %v382
  %v384 = vpop.f32.mrf.mxu0
  %v385 = vpop.f32.mrf.mxu0
  %v386 = vadd.f32 %v345, %v385
  %v387 = vpop.f32.mrf.mxu0
  %388 = vdwg.mxu0
  %v389 = vlaneseq
  %v390 = vand.u32 %v389, 127
  %vm391 = vcmp.ge.s32.totalorder %v390, 0
  %vm392 = vcmp.lt.s32.totalorder %v390, 64
  %vm393 = vmand %vm391, %vm392
  %v394 = vsel %vm393, %v383, 0.0
  %v395 = vsel %vm393, %v386, 0.0
  %396 = vadd.xlane.f32.xlu0 %v394
  %v397 = vpop.xlane.xlu0 %396
  %398 = vadd.xlane.f32.xlu0 %v395
  %v399 = vpop.xlane.xlu0 %398
  %v400 = vrcp.pop 64.0
  %v401 = vmul.f32 %v397, %v400
  %v402 = vmul.f32 %v399, %v400
  %v403 = vmul.f32 %v394, %v394
  %v404 = vmul.f32 %v395, %v395
  %405 = vadd.xlane.f32.xlu0 %v403
  %v406 = vpop.xlane.xlu0 %405
  %407 = vadd.xlane.f32.xlu0 %v404
  %v408 = vpop.xlane.xlu0 %407
  %v409 = vmul.f32 %v406, %v400
  %v410 = vmul.f32 %v408, %v400
  %v411 = vmul.f32 %v401, %v401
  %v412 = vmul.f32 %v402, %v402
  %v413 = vsub.f32 %v409, %v411
  %v414 = vsub.f32 %v410, %v412
  %v415 = vmax.f32 %v413, 0.0
  %v416 = vmax.f32 %v414, 0.0
  %v417 = vsub.f32 %v383, %v401
  %v418 = vsub.f32 %v386, %v402
  %v419 = vadd.f32 %v415, 1e-05
  %v420 = vadd.f32 %v416, 1e-05
  %v421 = vrsqrt.pop %v419
  %v422 = vrsqrt.pop %v420
  %v423 = vmul.f32 %v417, %v421
  %v424 = vmul.f32 %v418, %v422
  %v425 = vsel %vm393, %v423, %v383
  %v426 = vsel %vm393, %v424, %v386
  %vm427 = vcmp.ge.s32.totalorder %v390, 64
  %vm428 = vcmp.lt.s32.totalorder %v390, 128
  %vm429 = vmand %vm427, %vm428
  %v430 = vsel %vm429, %v383, 0.0
  %v431 = vsel %vm429, %v386, 0.0
  %432 = vadd.xlane.f32.xlu0 %v430
  %v433 = vpop.xlane.xlu0 %432
  %434 = vadd.xlane.f32.xlu0 %v431
  %v435 = vpop.xlane.xlu0 %434
  %v436 = vmul.f32 %v433, %v400
  %v437 = vmul.f32 %v435, %v400
  %v438 = vmul.f32 %v430, %v430
  %v439 = vmul.f32 %v431, %v431
  %440 = vadd.xlane.f32.xlu0 %v438
  %v441 = vpop.xlane.xlu0 %440
  %442 = vadd.xlane.f32.xlu0 %v439
  %v443 = vpop.xlane.xlu0 %442
  %v444 = vmul.f32 %v441, %v400
  %v445 = vmul.f32 %v443, %v400
  %v446 = vmul.f32 %v436, %v436
  %v447 = vmul.f32 %v437, %v437
  %v448 = vsub.f32 %v444, %v446
  %v449 = vsub.f32 %v445, %v447
  %v450 = vmax.f32 %v448, 0.0
  %v451 = vmax.f32 %v449, 0.0
  %v452 = vsub.f32 %v383, %v436
  %v453 = vsub.f32 %v386, %v437
  %v454 = vadd.f32 %v450, 1e-05
  %v455 = vadd.f32 %v451, 1e-05
  %v456 = vrsqrt.pop %v454
  %v457 = vrsqrt.pop %v455
  %v458 = vmul.f32 %v452, %v456
  %v459 = vmul.f32 %v453, %v457
  %v460 = vsel %vm429, %v458, %v425
  %v461 = vsel %vm429, %v459, %v426
  %vm462 = vcmp.ge.f32.partialorder %v460, 0.0
  %vm463 = vcmp.ge.f32.partialorder %v461, 0.0
  %v464 = vmul.f32 %v460, 0.2
  %v465 = vmul.f32 %v461, 0.2
  %v466 = vsel %vm462, %v460, %v464
  %v467 = vsel %vm463, %v461, %v465
  %v468 = vpack.c.bf16 %v467, %v466
  %v470 = vunpack.c.l.b16 %v468
  %v471 = vunpack.c.h.b16 %v468
  %v472 = vpack.c.b16 %v470, %v470
  %v473 = vpack.c.b16 %v471, %v471
  %476 = vst [vmem:[%s3] sm:$0xf] %v472
  %477 = vst [vmem:[%s3 + $0x4] sm:$0xf] %v473
  // Predicated region
  $region14: #{discriminator_forward.7} parent=0 // pred_check
    _
  $region15: #{discriminator_forward.7} parent=0 // pred_check_branch
    %479 = sbr.rel (0) target = $region17
  $region16: #{discriminator_forward.7} parent=0 // pred_region
    _
  $region17: #{discriminator_forward.7} parent=0 // pred_fallthru
    _
  // Predicated region
  $region18: #{discriminator_forward.7} parent=0 // pred_check
    _
  $region19: #{discriminator_forward.7} parent=0 // pred_check_branch
    %481 = sbr.rel (0) target = $region21
  $region20: #{discriminator_forward.7} parent=0 // pred_region
    _
  $region21: #{discriminator_forward.7} parent=0 // pred_fallthru
    _

// kernel: discriminator_forward.8
$region0: #{discriminator_forward.8}
  #allocation0 [shape = 'u32[]', space=smem, size = 0x4, offset = 0x4, fixed_abs, tag = 'smem constant byte address 0x4 - core index']
  #allocation1 [shape = 'u32[144,128]{1,0:T(1,128)}', space=vmem, size = 0x12000, scoped, tag = 'internal scratch']
  %s0 = inlined_call_operand.vmem [shape: bf16[1024,128], index: 0, kind: input, shape index: {}]
  %s1 = inlined_call_operand.vmem [shape: bf16[32,1024], index: 1, kind: input, shape index: {}]
  %s2 = inlined_call_operand.vmem [shape: f32[32,1], index: 2, kind: input, shape index: {}]
  %s3 = inlined_call_operand.vmem [shape: bf16[32,128], index: 3, kind: output, shape index: {}]
  %s4 = sld [smem:[#allocation0]]
  $region22: #{discriminator_forward.8} parent=0
    _
  %s6 = ssub.s32 1, %s4
  %s7 = scalar_select 0, %s6, %s4
  // Predicated region
  $region2: #{discriminator_forward.8} parent=0 // pred_check
    _
  $region3: #{discriminator_forward.8} parent=0 // pred_check_branch
    %9 = sbr.rel (0) target = $region5
  $region4: #{discriminator_forward.8} parent=0 // pred_region
    _
  $region5: #{discriminator_forward.8} parent=0 // pred_fallthru
    _
  // Predicated region
  $region6: #{discriminator_forward.8} parent=0 // pred_check
    _
  $region7: #{discriminator_forward.8} parent=0 // pred_check_branch
    %11 = sbr.rel (0) target = $region9
  $region8: #{discriminator_forward.8} parent=0 // pred_region
    _
  $region9: #{discriminator_forward.8} parent=0 // pred_fallthru
    _
  // Predicated region
  $region10: #{discriminator_forward.8} parent=0 // pred_check
    _
  $region11: #{discriminator_forward.8} parent=0 // pred_check_branch
    %13 = sbr.rel (0) target = $region13
  $region12: #{discriminator_forward.8} parent=0 // pred_region
    _
  $region13: #{discriminator_forward.8} parent=0 // pred_fallthru
    _
  %v15 = vld [vmem:[%s1] sm:$0xff]
  %v16 = vld [vmem:[%s1 + $0x8] sm:$0xff]
  %v17 = vld [vmem:[%s1 + $0x10] sm:$0xff]
  %v18 = vld [vmem:[%s1 + $0x18] sm:$0xff]
  %v19 = vld [vmem:[%s1 + $0x20] sm:$0xff]
  %v20 = vld [vmem:[%s1 + $0x28] sm:$0xff]
  %v21 = vld [vmem:[%s1 + $0x30] sm:$0xff]
  %v22 = vld [vmem:[%s1 + $0x38] sm:$0xff]
  %v23 = vld [vmem:[%s1 + $0x40] sm:$0xff]
  %v24 = vld [vmem:[%s1 + $0x48] sm:$0xff]
  %v25 = vld [vmem:[%s1 + $0x50] sm:$0xff]
  %v26 = vld [vmem:[%s1 + $0x58] sm:$0xff]
  %v27 = vld [vmem:[%s1 + $0x60] sm:$0xff]
  %v28 = vld [vmem:[%s1 + $0x68] sm:$0xff]
  %v29 = vld [vmem:[%s1 + $0x70] sm:$0xff]
  %v30 = vld [vmem:[%s1 + $0x78] sm:$0xff]
  %v31 = vld [vmem:[%s0] sm:$0xf]
  %v32 = vld [vmem:[%s0 + $0x4] sm:$0xf]
  %v33 = vld [vmem:[%s0 + $0x8] sm:$0xf]
  %v34 = vld [vmem:[%s0 + $0xc] sm:$0xf]
  %v35 = vld [vmem:[%s0 + $0x10] sm:$0xf]
  %v36 = vld [vmem:[%s0 + $0x14] sm:$0xf]
  %v37 = vld [vmem:[%s0 + $0x18] sm:$0xf]
  %v38 = vld [vmem:[%s0 + $0x1c] sm:$0xf]
  %v39 = vld [vmem:[%s0 + $0x20] sm:$0xf]
  %v40 = vld [vmem:[%s0 + $0x24] sm:$0xf]
  %v41 = vld [vmem:[%s0 + $0x28] sm:$0xf]
  %v42 = vld [vmem:[%s0 + $0x2c] sm:$0xf]
  %v43 = vld [vmem:[%s0 + $0x30] sm:$0xf]
  %v44 = vld [vmem:[%s0 + $0x34] sm:$0xf]
  %v45 = vld [vmem:[%s0 + $0x38] sm:$0xf]
  %v46 = vld [vmem:[%s0 + $0x3c] sm:$0xf]
  %v47 = vld [vmem:[%s0 + $0x40] sm:$0xf]
  %v48 = vld [vmem:[%s0 + $0x44] sm:$0xf]
  %v49 = vld [vmem:[%s0 + $0x48] sm:$0xf]
  %v50 = vld [vmem:[%s0 + $0x4c] sm:$0xf]
  %v51 = vld [vmem:[%s0 + $0x50] sm:$0xf]
  %v52 = vld [vmem:[%s0 + $0x54] sm:$0xf]
  %v53 = vld [vmem:[%s0 + $0x58] sm:$0xf]
  %v54 = vld [vmem:[%s0 + $0x5c] sm:$0xf]
  %v55 = vld [vmem:[%s0 + $0x60] sm:$0xf]
  %v56 = vld [vmem:[%s0 + $0x64] sm:$0xf]
  %v57 = vld [vmem:[%s0 + $0x68] sm:$0xf]
  %v58 = vld [vmem:[%s0 + $0x6c] sm:$0xf]
  %v59 = vld [vmem:[%s0 + $0x70] sm:$0xf]
  %v60 = vld [vmem:[%s0 + $0x74] sm:$0xf]
  %v61 = vld [vmem:[%s0 + $0x78] sm:$0xf]
  %v62 = vld [vmem:[%s0 + $0x7c] sm:$0xf]
  %v63 = vld [vmem:[%s0 + $0x80] sm:$0xf]
  %v64 = vld [vmem:[%s0 + $0x84] sm:$0xf]
  %v65 = vld [vmem:[%s0 + $0x88] sm:$0xf]
  %v66 = vld [vmem:[%s0 + $0x8c] sm:$0xf]
  %v67 = vld [vmem:[%s0 + $0x90] sm:$0xf]
  %v68 = vld [vmem:[%s0 + $0x94] sm:$0xf]
  %v69 = vld [vmem:[%s0 + $0x98] sm:$0xf]
  %v70 = vld [vmem:[%s0 + $0x9c] sm:$0xf]
  %v71 = vld [vmem:[%s0 + $0xa0] sm:$0xf]
  %v72 = vld [vmem:[%s0 + $0xa4] sm:$0xf]
  %v73 = vld [vmem:[%s0 + $0xa8] sm:$0xf]
  %v74 = vld [vmem:[%s0 + $0xac] sm:$0xf]
  %v75 = vld [vmem:[%s0 + $0xb0] sm:$0xf]
  %v76 = vld [vmem:[%s0 + $0xb4] sm:$0xf]
  %v77 = vld [vmem:[%s0 + $0xb8] sm:$0xf]
  %v78 = vld [vmem:[%s0 + $0xbc] sm:$0xf]
  %v79 = vld [vmem:[%s0 + $0xc0] sm:$0xf]
  %v80 = vld [vmem:[%s0 + $0xc4] sm:$0xf]
  %v81 = vld [vmem:[%s0 + $0xc8] sm:$0xf]
  %v82 = vld [vmem:[%s0 + $0xcc] sm:$0xf]
  %v83 = vld [vmem:[%s0 + $0xd0] sm:$0xf]
  %v84 = vld [vmem:[%s0 + $0xd4] sm:$0xf]
  %v85 = vld [vmem:[%s0 + $0xd8] sm:$0xf]
  %v86 = vld [vmem:[%s0 + $0xdc] sm:$0xf]
  %v87 = vld [vmem:[%s0 + $0xe0] sm:$0xf]
  %v88 = vld [vmem:[%s0 + $0xe4] sm:$0xf]
  %v89 = vld [vmem:[%s0 + $0xe8] sm:$0xf]
  %v90 = vld [vmem:[%s0 + $0xec] sm:$0xf]
  %v91 = vld [vmem:[%s0 + $0xf0] sm:$0xf]
  %v92 = vld [vmem:[%s0 + $0xf4] sm:$0xf]
  %v93 = vld [vmem:[%s0 + $0xf8] sm:$0xf]
  %v94 = vld [vmem:[%s0 + $0xfc] sm:$0xf]
  %v95 = vld [vmem:[%s0 + $0x100] sm:$0xf]
  %v96 = vld [vmem:[%s0 + $0x104] sm:$0xf]
  %v97 = vld [vmem:[%s0 + $0x108] sm:$0xf]
  %v98 = vld [vmem:[%s0 + $0x10c] sm:$0xf]
  %v99 = vld [vmem:[%s0 + $0x110] sm:$0xf]
  %v100 = vld [vmem:[%s0 + $0x114] sm:$0xf]
  %v101 = vld [vmem:[%s0 + $0x118] sm:$0xf]
  %v102 = vld [vmem:[%s0 + $0x11c] sm:$0xf]
  %v103 = vld [vmem:[%s0 + $0x120] sm:$0xf]
  %v104 = vld [vmem:[%s0 + $0x124] sm:$0xf]
  %v105 = vld [vmem:[%s0 + $0x128] sm:$0xf]
  %v106 = vld [vmem:[%s0 + $0x12c] sm:$0xf]
  %v107 = vld [vmem:[%s0 + $0x130] sm:$0xf]
  %v108 = vld [vmem:[%s0 + $0x134] sm:$0xf]
  %v109 = vld [vmem:[%s0 + $0x138] sm:$0xf]
  %v110 = vld [vmem:[%s0 + $0x13c] sm:$0xf]
  %v111 = vld [vmem:[%s0 + $0x140] sm:$0xf]
  %v112 = vld [vmem:[%s0 + $0x144] sm:$0xf]
  %v113 = vld [vmem:[%s0 + $0x148] sm:$0xf]
  %v114 = vld [vmem:[%s0 + $0x14c] sm:$0xf]
  %v115 = vld [vmem:[%s0 + $0x150] sm:$0xf]
  %v116 = vld [vmem:[%s0 + $0x154] sm:$0xf]
  %v117 = vld [vmem:[%s0 + $0x158] sm:$0xf]
  %v118 = vld [vmem:[%s0 + $0x15c] sm:$0xf]
  %v119 = vld [vmem:[%s0 + $0x160] sm:$0xf]
  %v120 = vld [vmem:[%s0 + $0x164] sm:$0xf]
  %v121 = vld [vmem:[%s0 + $0x168] sm:$0xf]
  %v122 = vld [vmem:[%s0 + $0x16c] sm:$0xf]
  %v123 = vld [vmem:[%s0 + $0x170] sm:$0xf]
  %v124 = vld [vmem:[%s0 + $0x174] sm:$0xf]
  %v125 = vld [vmem:[%s0 + $0x178] sm:$0xf]
  %v126 = vld [vmem:[%s0 + $0x17c] sm:$0xf]
  %v127 = vld [vmem:[%s0 + $0x180] sm:$0xf]
  %v128 = vld [vmem:[%s0 + $0x184] sm:$0xf]
  %v129 = vld [vmem:[%s0 + $0x188] sm:$0xf]
  %v130 = vld [vmem:[%s0 + $0x18c] sm:$0xf]
  %v131 = vld [vmem:[%s0 + $0x190] sm:$0xf]
  %v132 = vld [vmem:[%s0 + $0x194] sm:$0xf]
  %v133 = vld [vmem:[%s0 + $0x198] sm:$0xf]
  %v134 = vld [vmem:[%s0 + $0x19c] sm:$0xf]
  %v135 = vld [vmem:[%s0 + $0x1a0] sm:$0xf]
  %v136 = vld [vmem:[%s0 + $0x1a4] sm:$0xf]
  %v137 = vld [vmem:[%s0 + $0x1a8] sm:$0xf]
  %v138 = vld [vmem:[%s0 + $0x1ac] sm:$0xf]
  %v139 = vld [vmem:[%s0 + $0x1b0] sm:$0xf]
  %v140 = vld [vmem:[%s0 + $0x1b4] sm:$0xf]
  %v141 = vld [vmem:[%s0 + $0x1b8] sm:$0xf]
  %v142 = vld [vmem:[%s0 + $0x1bc] sm:$0xf]
  %v143 = vld [vmem:[%s0 + $0x1c0] sm:$0xf]
  %v144 = vld [vmem:[%s0 + $0x1c4] sm:$0xf]
  %v145 = vld [vmem:[%s0 + $0x1c8] sm:$0xf]
  %v146 = vld [vmem:[%s0 + $0x1cc] sm:$0xf]
  %v147 = vld [vmem:[%s0 + $0x1d0] sm:$0xf]
  %v148 = vld [vmem:[%s0 + $0x1d4] sm:$0xf]
  %v149 = vld [vmem:[%s0 + $0x1d8] sm:$0xf]
  %v150 = vld [vmem:[%s0 + $0x1dc] sm:$0xf]
  %v151 = vld [vmem:[%s0 + $0x1e0] sm:$0xf]
  %v152 = vld [vmem:[%s0 + $0x1e4] sm:$0xf]
  %v153 = vld [vmem:[%s0 + $0x1e8] sm:$0xf]
  %v154 = vld [vmem:[%s0 + $0x1ec] sm:$0xf]
  %v155 = vld [vmem:[%s0 + $0x1f0] sm:$0xf]
  %v156 = vld [vmem:[%s0 + $0x1f4] sm:$0xf]
  %v157 = vld [vmem:[%s0 + $0x1f8] sm:$0xf]
  %v158 = vld [vmem:[%s0 + $0x1fc] sm:$0xf]
  %v159 = vld [vmem:[%s2] sm:$0xff]
  %v160 = vld [vmem:[%s2 + $0x8] sm:$0xff]
  %v161 = vld [vmem:[%s2 + $0x10] sm:$0xff]
  %v162 = vld [vmem:[%s2 + $0x18] sm:$0xff]
  %164 = vset.pattern.permute.xlu0 0
  %165 = vperm.xlu0 %164, %v159
  %v166 = vpop.permute.xlu0 %165
  %169 = vset.pattern.permute.xlu0 0
  %170 = vperm.xlu0 %169, %v160
  %v171 = vpop.permute.xlu0 %170
  %174 = vset.pattern.permute.xlu0 0
  %175 = vperm.xlu0 %174, %v161
  %v176 = vpop.permute.xlu0 %175
  %179 = vset.pattern.permute.xlu0 0
  %180 = vperm.xlu0 %179, %v162
  %v181 = vpop.permute.xlu0 %180
  %v199 = vunpack.c.l.b16 %v15
  %v200 = vunpack.c.h.b16 %v15
  %v201 = vunpack.c.l.b16 %v16
  %v202 = vunpack.c.h.b16 %v16
  %v203 = vunpack.c.l.b16 %v17
  %v204 = vunpack.c.h.b16 %v17
  %v205 = vunpack.c.l.b16 %v18
  %v206 = vunpack.c.h.b16 %v18
  %v207 = vunpack.c.l.b16 %v19
  %v208 = vunpack.c.h.b16 %v19
  %v209 = vunpack.c.l.b16 %v20
  %v210 = vunpack.c.h.b16 %v20
  %v211 = vunpack.c.l.b16 %v21
  %v212 = vunpack.c.h.b16 %v21
  %v213 = vunpack.c.l.b16 %v22
  %v214 = vunpack.c.h.b16 %v22
  %v215 = vunpack.c.l.b16 %v23
  %v216 = vunpack.c.h.b16 %v23
  %v217 = vunpack.c.l.b16 %v24
  %v218 = vunpack.c.h.b16 %v24
  %v219 = vunpack.c.l.b16 %v25
  %v220 = vunpack.c.h.b16 %v25
  %v221 = vunpack.c.l.b16 %v26
  %v222 = vunpack.c.h.b16 %v26
  %v223 = vunpack.c.l.b16 %v27
  %v224 = vunpack.c.h.b16 %v27
  %v225 = vunpack.c.l.b16 %v28
  %v226 = vunpack.c.h.b16 %v28
  %v227 = vunpack.c.l.b16 %v29
  %v228 = vunpack.c.h.b16 %v29
  %v229 = vunpack.c.l.b16 %v30
  %v230 = vunpack.c.h.b16 %v30
  %v231 = vpack.c.b16 %v207, %v199
  %v232 = vpack.c.b16 %v208, %v200
  %v233 = vpack.c.b16 %v209, %v201
  %v234 = vpack.c.b16 %v210, %v202
  %v235 = vpack.c.b16 %v211, %v203
  %v236 = vpack.c.b16 %v212, %v204
  %v237 = vpack.c.b16 %v213, %v205
  %v238 = vpack.c.b16 %v214, %v206
  %v239 = vpack.c.b16 %v223, %v215
  %v240 = vpack.c.b16 %v224, %v216
  %v241 = vpack.c.b16 %v225, %v217
  %v242 = vpack.c.b16 %v226, %v218
  %v243 = vpack.c.b16 %v227, %v219
  %v244 = vpack.c.b16 %v228, %v220
  %v245 = vpack.c.b16 %v229, %v221
  %v246 = vpack.c.b16 %v230, %v222
  %v391 = vunpack.c.l.b16 %v31
  %v392 = vunpack.c.l.b16 %v32
  %v393 = vunpack.c.l.b16 %v33
  %v394 = vunpack.c.l.b16 %v34
  %v395 = vunpack.c.l.b16 %v35
  %v396 = vunpack.c.l.b16 %v36
  %v397 = vunpack.c.l.b16 %v37
  %v398 = vunpack.c.l.b16 %v38
  %v399 = vunpack.c.l.b16 %v39
  %v400 = vunpack.c.l.b16 %v40
  %v401 = vunpack.c.l.b16 %v41
  %v402 = vunpack.c.l.b16 %v42
  %v403 = vunpack.c.l.b16 %v43
  %v404 = vunpack.c.l.b16 %v44
  %v405 = vunpack.c.l.b16 %v45
  %v406 = vunpack.c.l.b16 %v46
  %v407 = vunpack.c.l.b16 %v47
  %v408 = vunpack.c.l.b16 %v48
  %v409 = vunpack.c.l.b16 %v49
  %v410 = vunpack.c.l.b16 %v50
  %v411 = vunpack.c.l.b16 %v51
  %v412 = vunpack.c.l.b16 %v52
  %v413 = vunpack.c.l.b16 %v53
  %v414 = vunpack.c.l.b16 %v54
  %v415 = vunpack.c.l.b16 %v55
  %v416 = vunpack.c.l.b16 %v56
  %v417 = vunpack.c.l.b16 %v57
  %v418 = vunpack.c.l.b16 %v58
  %v419 = vunpack.c.l.b16 %v59
  %v420 = vunpack.c.l.b16 %v60
  %v421 = vunpack.c.l.b16 %v61
  %v422 = vunpack.c.l.b16 %v62
  %v423 = vunpack.c.l.b16 %v63
  %v424 = vunpack.c.l.b16 %v64
  %v425 = vunpack.c.l.b16 %v65
  %v426 = vunpack.c.l.b16 %v66
  %v427 = vunpack.c.l.b16 %v67
  %v428 = vunpack.c.l.b16 %v68
  %v429 = vunpack.c.l.b16 %v69
  %v430 = vunpack.c.l.b16 %v70
  %v431 = vunpack.c.l.b16 %v71
  %v432 = vunpack.c.l.b16 %v72
  %v433 = vunpack.c.l.b16 %v73
  %v434 = vunpack.c.l.b16 %v74
  %v435 = vunpack.c.l.b16 %v75
  %v436 = vunpack.c.l.b16 %v76
  %v437 = vunpack.c.l.b16 %v77
  %v438 = vunpack.c.l.b16 %v78
  %v439 = vunpack.c.l.b16 %v79
  %v440 = vunpack.c.l.b16 %v80
  %v441 = vunpack.c.l.b16 %v81
  %v442 = vunpack.c.l.b16 %v82
  %v443 = vunpack.c.l.b16 %v83
  %v444 = vunpack.c.l.b16 %v84
  %v445 = vunpack.c.l.b16 %v85
  %v446 = vunpack.c.l.b16 %v86
  %v447 = vunpack.c.l.b16 %v87
  %v448 = vunpack.c.l.b16 %v88
  %v449 = vunpack.c.l.b16 %v89
  %v450 = vunpack.c.l.b16 %v90
  %v451 = vunpack.c.l.b16 %v91
  %v452 = vunpack.c.l.b16 %v92
  %v453 = vunpack.c.l.b16 %v93
  %v454 = vunpack.c.l.b16 %v94
  %v455 = vunpack.c.l.b16 %v95
  %v456 = vunpack.c.l.b16 %v96
  %v457 = vunpack.c.l.b16 %v97
  %v458 = vunpack.c.l.b16 %v98
  %v459 = vunpack.c.l.b16 %v99
  %v460 = vunpack.c.l.b16 %v100
  %v461 = vunpack.c.l.b16 %v101
  %v462 = vunpack.c.l.b16 %v102
  %v463 = vunpack.c.l.b16 %v103
  %v464 = vunpack.c.l.b16 %v104
  %v465 = vunpack.c.l.b16 %v105
  %v466 = vunpack.c.l.b16 %v106
  %v467 = vunpack.c.l.b16 %v107
  %v468 = vunpack.c.l.b16 %v108
  %v469 = vunpack.c.l.b16 %v109
  %v470 = vunpack.c.l.b16 %v110
  %v471 = vunpack.c.l.b16 %v111
  %v472 = vunpack.c.l.b16 %v112
  %v473 = vunpack.c.l.b16 %v113
  %v474 = vunpack.c.l.b16 %v114
  %v475 = vunpack.c.l.b16 %v115
  %v476 = vunpack.c.l.b16 %v116
  %v477 = vunpack.c.l.b16 %v117
  %v478 = vunpack.c.l.b16 %v118
  %v479 = vunpack.c.l.b16 %v119
  %v480 = vunpack.c.l.b16 %v120
  %v481 = vunpack.c.l.b16 %v121
  %v482 = vunpack.c.l.b16 %v122
  %v483 = vunpack.c.l.b16 %v123
  %v484 = vunpack.c.l.b16 %v124
  %v485 = vunpack.c.l.b16 %v125
  %v486 = vunpack.c.l.b16 %v126
  %v487 = vunpack.c.l.b16 %v127
  %v488 = vunpack.c.l.b16 %v128
  %v489 = vunpack.c.l.b16 %v129
  %v490 = vunpack.c.l.b16 %v130
  %v491 = vunpack.c.l.b16 %v131
  %v492 = vunpack.c.l.b16 %v132
  %v493 = vunpack.c.l.b16 %v133
  %v494 = vunpack.c.l.b16 %v134
  %v495 = vunpack.c.l.b16 %v135
  %v496 = vunpack.c.l.b16 %v136
  %v497 = vunpack.c.l.b16 %v137
  %v498 = vunpack.c.l.b16 %v138
  %v499 = vunpack.c.l.b16 %v139
  %v500 = vunpack.c.l.b16 %v140
  %v501 = vunpack.c.l.b16 %v141
  %v502 = vunpack.c.l.b16 %v142
  %v503 = vunpack.c.l.b16 %v143
  %v504 = vunpack.c.l.b16 %v144
  %v505 = vunpack.c.l.b16 %v145
  %v506 = vunpack.c.l.b16 %v146
  %v507 = vunpack.c.l.b16 %v147
  %v508 = vunpack.c.l.b16 %v148
  %v509 = vunpack.c.l.b16 %v149
  %v510 = vunpack.c.l.b16 %v150
  %v511 = vunpack.c.l.b16 %v151
  %v512 = vunpack.c.l.b16 %v152
  %v513 = vunpack.c.l.b16 %v153
  %v514 = vunpack.c.l.b16 %v154
  %v515 = vunpack.c.l.b16 %v155
  %v516 = vunpack.c.l.b16 %v156
  %v517 = vunpack.c.l.b16 %v157
  %v518 = vunpack.c.l.b16 %v158
  %v519 = vpack.c.b16 %v392, %v391
  %v520 = vpack.c.b16 %v394, %v393
  %v521 = vpack.c.b16 %v396, %v395
  %v522 = vpack.c.b16 %v398, %v397
  %v523 = vpack.c.b16 %v400, %v399
  %v524 = vpack.c.b16 %v402, %v401
  %v525 = vpack.c.b16 %v404, %v403
  %v526 = vpack.c.b16 %v406, %v405
  %v527 = vpack.c.b16 %v408, %v407
  %v528 = vpack.c.b16 %v410, %v409
  %v529 = vpack.c.b16 %v412, %v411
  %v530 = vpack.c.b16 %v414, %v413
  %v531 = vpack.c.b16 %v416, %v415
  %v532 = vpack.c.b16 %v418, %v417
  %v533 = vpack.c.b16 %v420, %v419
  %v534 = vpack.c.b16 %v422, %v421
  %v535 = vpack.c.b16 %v424, %v423
  %v536 = vpack.c.b16 %v426, %v425
  %v537 = vpack.c.b16 %v428, %v427
  %v538 = vpack.c.b16 %v430, %v429
  %v539 = vpack.c.b16 %v432, %v431
  %v540 = vpack.c.b16 %v434, %v433
  %v541 = vpack.c.b16 %v436, %v435
  %v542 = vpack.c.b16 %v438, %v437
  %v543 = vpack.c.b16 %v440, %v439
  %v544 = vpack.c.b16 %v442, %v441
  %v545 = vpack.c.b16 %v444, %v443
  %v546 = vpack.c.b16 %v446, %v445
  %v547 = vpack.c.b16 %v448, %v447
  %v548 = vpack.c.b16 %v450, %v449
  %v549 = vpack.c.b16 %v452, %v451
  %v550 = vpack.c.b16 %v454, %v453
  %v551 = vpack.c.b16 %v456, %v455
  %v552 = vpack.c.b16 %v458, %v457
  %v553 = vpack.c.b16 %v460, %v459
  %v554 = vpack.c.b16 %v462, %v461
  %v555 = vpack.c.b16 %v464, %v463
  %v556 = vpack.c.b16 %v466, %v465
  %v557 = vpack.c.b16 %v468, %v467
  %v558 = vpack.c.b16 %v470, %v469
  %v559 = vpack.c.b16 %v472, %v471
  %v560 = vpack.c.b16 %v474, %v473
  %v561 = vpack.c.b16 %v476, %v475
  %v562 = vpack.c.b16 %v478, %v477
  %v563 = vpack.c.b16 %v480, %v479
  %v564 = vpack.c.b16 %v482, %v481
  %v565 = vpack.c.b16 %v484, %v483
  %v566 = vpack.c.b16 %v486, %v485
  %v567 = vpack.c.b16 %v488, %v487
  %v568 = vpack.c.b16 %v490, %v489
  %v569 = vpack.c.b16 %v492, %v491
  %v570 = vpack.c.b16 %v494, %v493
  %v571 = vpack.c.b16 %v496, %v495
  %v572 = vpack.c.b16 %v498, %v497
  %v573 = vpack.c.b16 %v500, %v499
  %v574 = vpack.c.b16 %v502, %v501
  %v575 = vpack.c.b16 %v504, %v503
  %v576 = vpack.c.b16 %v506, %v505
  %v577 = vpack.c.b16 %v508, %v507
  %v578 = vpack.c.b16 %v510, %v509
  %v579 = vpack.c.b16 %v512, %v511
  %v580 = vpack.c.b16 %v514, %v513
  %v581 = vpack.c.b16 %v516, %v515
  %v582 = vpack.c.b16 %v518, %v517
  %647 = vmatprep.subr.bf16.mxu0 0
  %648 = vmatpush1.bf16.msra.mxu0 %v526
  %649 = vmatprep.subr.bf16.mxu0 0
  %650 = vmatpush1.bf16.msra.mxu0 %v525
  %651 = vmatprep.subr.bf16.mxu0 0
  %652 = vmatpush1.bf16.msra.mxu0 %v524
  %653 = vmatprep.subr.bf16.mxu0 0
  %654 = vmatpush1.bf16.msra.mxu0 %v523
  %655 = vmatprep.subr.bf16.mxu0 0
  %656 = vmatpush1.bf16.msra.mxu0 %v522
  %657 = vmatprep.subr.bf16.mxu0 0
  %658 = vmatpush1.bf16.msra.mxu0 %v521
  %659 = vmatprep.subr.bf16.mxu0 0
  %660 = vmatpush1.bf16.msra.mxu0 %v520
  %661 = vmatprep.subr.bf16.mxu0 0
  %662 = vmatpush1.bf16.msra.mxu0 %v519
  %663 = vmatprep.subr.bf16.mxu0 0
  %664 = vmatpush2.bf16.msra.mxu0 %v534
  %665 = vmatprep.subr.bf16.mxu0 0
  %666 = vmatpush2.bf16.msra.mxu0 %v533
  %667 = vmatprep.subr.bf16.mxu0 0
  %668 = vmatpush2.bf16.msra.mxu0 %v532
  %669 = vmatprep.subr.bf16.mxu0 0
  %670 = vmatpush2.bf16.msra.mxu0 %v531
  %671 = vmatprep.subr.bf16.mxu0 0
  %672 = vmatpush2.bf16.msra.mxu0 %v530
  %673 = vmatprep.subr.bf16.mxu0 0
  %674 = vmatpush2.bf16.msra.mxu0 %v529
  %675 = vmatprep.subr.bf16.mxu0 0
  %676 = vmatpush2.bf16.msra.mxu0 %v528
  %677 = vmatprep.subr.bf16.mxu0 0
  %678 = vmatpush2.bf16.msra.mxu0 %v527
  %679 = vmatprep.mubr.bf16.mxu0 %v232
  %680 = vmatmul.mubr.bf16.gmra.mxu0 %v231
  %v681 = vpop.f32.mrf.mxu0
  %v682 = vadd.f32 %v166, %v681
  %v683 = vpop.f32.mrf.mxu0
  %v684 = vpop.f32.mrf.mxu0
  %v685 = vadd.f32 %v171, %v684
  %v686 = vpop.f32.mrf.mxu0
  %687 = vmatprep.mubr.bf16.mxu0 %v240
  %688 = vmatmul.mubr.bf16.gmra.mxu0 %v239
  %v689 = vpop.f32.mrf.mxu0
  %v690 = vadd.f32 %v176, %v689
  %v691 = vpop.f32.mrf.mxu0
  %v692 = vpop.f32.mrf.mxu0
  %v693 = vadd.f32 %v181, %v692
  %v694 = vpop.f32.mrf.mxu0
  %695 = vdwg.mxu0
  %696 = vmatprep.subr.bf16.mxu0 0
  %697 = vmatpush1.bf16.msra.mxu0 %v542
  %698 = vmatprep.subr.bf16.mxu0 0
  %699 = vmatpush1.bf16.msra.mxu0 %v541
  %700 = vmatprep.subr.bf16.mxu0 0
  %701 = vmatpush1.bf16.msra.mxu0 %v540
  %702 = vmatprep.subr.bf16.mxu0 0
  %703 = vmatpush1.bf16.msra.mxu0 %v539
  %704 = vmatprep.subr.bf16.mxu0 0
  %705 = vmatpush1.bf16.msra.mxu0 %v538
  %706 = vmatprep.subr.bf16.mxu0 0
  %707 = vmatpush1.bf16.msra.mxu0 %v537
  %708 = vmatprep.subr.bf16.mxu0 0
  %709 = vmatpush1.bf16.msra.mxu0 %v536
  %710 = vmatprep.subr.bf16.mxu0 0
  %711 = vmatpush1.bf16.msra.mxu0 %v535
  %712 = vmatprep.subr.bf16.mxu0 0
  %713 = vmatpush2.bf16.msra.mxu0 %v550
  %714 = vmatprep.subr.bf16.mxu0 0
  %715 = vmatpush2.bf16.msra.mxu0 %v549
  %716 = vmatprep.subr.bf16.mxu0 0
  %717 = vmatpush2.bf16.msra.mxu0 %v548
  %718 = vmatprep.subr.bf16.mxu0 0
  %719 = vmatpush2.bf16.msra.mxu0 %v547
  %720 = vmatprep.subr.bf16.mxu0 0
  %721 = vmatpush2.bf16.msra.mxu0 %v546
  %722 = vmatprep.subr.bf16.mxu0 0
  %723 = vmatpush2.bf16.msra.mxu0 %v545
  %724 = vmatprep.subr.bf16.mxu0 0
  %725 = vmatpush2.bf16.msra.mxu0 %v544
  %726 = vmatprep.subr.bf16.mxu0 0
  %727 = vmatpush2.bf16.msra.mxu0 %v543
  %728 = vmatprep.mubr.bf16.mxu0 %v234
  %729 = vmatmul.mubr.bf16.gmra.mxu0 %v233
  %v730 = vpop.f32.mrf.mxu0
  %v731 = vadd.f32 %v682, %v730
  %v732 = vpop.f32.mrf.mxu0
  %v733 = vpop.f32.mrf.mxu0
  %v734 = vadd.f32 %v685, %v733
  %v735 = vpop.f32.mrf.mxu0
  %736 = vmatprep.mubr.bf16.mxu0 %v242
  %737 = vmatmul.mubr.bf16.gmra.mxu0 %v241
  %v738 = vpop.f32.mrf.mxu0
  %v739 = vadd.f32 %v690, %v738
  %v740 = vpop.f32.mrf.mxu0
  %v741 = vpop.f32.mrf.mxu0
  %v742 = vadd.f32 %v693, %v741
  %v743 = vpop.f32.mrf.mxu0
  %744 = vdwg.mxu0
  %745 = vmatprep.subr.bf16.mxu0 0
  %746 = vmatpush1.bf16.msra.mxu0 %v558
  %747 = vmatprep.subr.bf16.mxu0 0
  %748 = vmatpush1.bf16.msra.mxu0 %v557
  %749 = vmatprep.subr.bf16.mxu0 0
  %750 = vmatpush1.bf16.msra.mxu0 %v556
  %751 = vmatprep.subr.bf16.mxu0 0
  %752 = vmatpush1.bf16.msra.mxu0 %v555
  %753 = vmatprep.subr.bf16.mxu0 0
  %754 = vmatpush1.bf16.msra.mxu0 %v554
  %755 = vmatprep.subr.bf16.mxu0 0
  %756 = vmatpush1.bf16.msra.mxu0 %v553
  %757 = vmatprep.subr.bf16.mxu0 0
  %758 = vmatpush1.bf16.msra.mxu0 %v552
  %759 = vmatprep.subr.bf16.mxu0 0
  %760 = vmatpush1.bf16.msra.mxu0 %v551
  %761 = vmatprep.subr.bf16.mxu0 0
  %762 = vmatpush2.bf16.msra.mxu0 %v566
  %763 = vmatprep.subr.bf16.mxu0 0
  %764 = vmatpush2.bf16.msra.mxu0 %v565
  %765 = vmatprep.subr.bf16.mxu0 0
  %766 = vmatpush2.bf16.msra.mxu0 %v564
  %767 = vmatprep.subr.bf16.mxu0 0
  %768 = vmatpush2.bf16.msra.mxu0 %v563
  %769 = vmatprep.subr.bf16.mxu0 0
  %770 = vmatpush2.bf16.msra.mxu0 %v562
  %771 = vmatprep.subr.bf16.mxu0 0
  %772 = vmatpush2.bf16.msra.mxu0 %v561
  %773 = vmatprep.subr.bf16.mxu0 0
  %774 = vmatpush2.bf16.msra.mxu0 %v560
  %775 = vmatprep.subr.bf16.mxu0 0
  %776 = vmatpush2.bf16.msra.mxu0 %v559
  %777 = vmatprep.mubr.bf16.mxu0 %v236
  %778 = vmatmul.mubr.bf16.gmra.mxu0 %v235
  %v779 = vpop.f32.mrf.mxu0
  %v780 = vadd.f32 %v731, %v779
  %v781 = vpop.f32.mrf.mxu0
  %v782 = vpop.f32.mrf.mxu0
  %v783 = vadd.f32 %v734, %v782
  %v784 = vpop.f32.mrf.mxu0
  %785 = vmatprep.mubr.bf16.mxu0 %v244
  %786 = vmatmul.mubr.bf16.gmra.mxu0 %v243
  %v787 = vpop.f32.mrf.mxu0
  %v788 = vadd.f32 %v739, %v787
  %v789 = vpop.f32.mrf.mxu0
  %v790 = vpop.f32.mrf.mxu0
  %v791 = vadd.f32 %v742, %v790
  %v792 = vpop.f32.mrf.mxu0
  %793 = vdwg.mxu0
  %794 = vmatprep.subr.bf16.mxu0 0
  %795 = vmatpush1.bf16.msra.mxu0 %v574
  %796 = vmatprep.subr.bf16.mxu0 0
  %797 = vmatpush1.bf16.msra.mxu0 %v573
  %798 = vmatprep.subr.bf16.mxu0 0
  %799 = vmatpush1.bf16.msra.mxu0 %v572
  %800 = vmatprep.subr.bf16.mxu0 0
  %801 = vmatpush1.bf16.msra.mxu0 %v571
  %802 = vmatprep.subr.bf16.mxu0 0
  %803 = vmatpush1.bf16.msra.mxu0 %v570
  %804 = vmatprep.subr.bf16.mxu0 0
  %805 = vmatpush1.bf16.msra.mxu0 %v569
  %806 = vmatprep.subr.bf16.mxu0 0
  %807 = vmatpush1.bf16.msra.mxu0 %v568
  %808 = vmatprep.subr.bf16.mxu0 0
  %809 = vmatpush1.bf16.msra.mxu0 %v567
  %810 = vmatprep.subr.bf16.mxu0 0
  %811 = vmatpush2.bf16.msra.mxu0 %v582
  %812 = vmatprep.subr.bf16.mxu0 0
  %813 = vmatpush2.bf16.msra.mxu0 %v581
  %814 = vmatprep.subr.bf16.mxu0 0
  %815 = vmatpush2.bf16.msra.mxu0 %v580
  %816 = vmatprep.subr.bf16.mxu0 0
  %817 = vmatpush2.bf16.msra.mxu0 %v579
  %818 = vmatprep.subr.bf16.mxu0 0
  %819 = vmatpush2.bf16.msra.mxu0 %v578
  %820 = vmatprep.subr.bf16.mxu0 0
  %821 = vmatpush2.bf16.msra.mxu0 %v577
  %822 = vmatprep.subr.bf16.mxu0 0
  %823 = vmatpush2.bf16.msra.mxu0 %v576
  %824 = vmatprep.subr.bf16.mxu0 0
  %825 = vmatpush2.bf16.msra.mxu0 %v575
  %826 = vmatprep.mubr.bf16.mxu0 %v238
  %827 = vmatmul.mubr.bf16.gmra.mxu0 %v237
  %v828 = vpop.f32.mrf.mxu0
  %v829 = vadd.f32 %v780, %v828
  %v830 = vpop.f32.mrf.mxu0
  %v831 = vpop.f32.mrf.mxu0
  %v832 = vadd.f32 %v783, %v831
  %v833 = vpop.f32.mrf.mxu0
  %834 = vmatprep.mubr.bf16.mxu0 %v246
  %835 = vmatmul.mubr.bf16.gmra.mxu0 %v245
  %v836 = vpop.f32.mrf.mxu0
  %v837 = vadd.f32 %v788, %v836
  %v838 = vpop.f32.mrf.mxu0
  %v839 = vpop.f32.mrf.mxu0
  %v840 = vadd.f32 %v791, %v839
  %v841 = vpop.f32.mrf.mxu0
  %842 = vdwg.mxu0
  %v843 = vlaneseq
  %v844 = vand.u32 %v843, 127
  %vm845 = vcmp.ge.s32.totalorder %v844, 0
  %vm846 = vcmp.lt.s32.totalorder %v844, 8
  %vm847 = vmand %vm845, %vm846
  %v848 = vsel %vm847, %v829, 0.0
  %v849 = vsel %vm847, %v832, 0.0
  %v850 = vsel %vm847, %v837, 0.0
  %v851 = vsel %vm847, %v840, 0.0
  %852 = vadd.xlane.f32.xlu0 %v848
  %v853 = vpop.xlane.xlu0 %852
  %854 = vadd.xlane.f32.xlu0 %v849
  %v855 = vpop.xlane.xlu0 %854
  %856 = vadd.xlane.f32.xlu0 %v850
  %v857 = vpop.xlane.xlu0 %856
  %858 = vadd.xlane.f32.xlu0 %v851
  %v859 = vpop.xlane.xlu0 %858
  %v860 = vrcp.pop 8.0
  %v861 = vmul.f32 %v853, %v860
  %v862 = vmul.f32 %v855, %v860
  %v863 = vmul.f32 %v857, %v860
  %v864 = vmul.f32 %v859, %v860
  %v865 = vmul.f32 %v848, %v848
  %v866 = vmul.f32 %v849, %v849
  %v867 = vmul.f32 %v850, %v850
  %v868 = vmul.f32 %v851, %v851
  %869 = vadd.xlane.f32.xlu0 %v865
  %v870 = vpop.xlane.xlu0 %869
  %871 = vadd.xlane.f32.xlu0 %v866
  %v872 = vpop.xlane.xlu0 %871
  %873 = vadd.xlane.f32.xlu0 %v867
  %v874 = vpop.xlane.xlu0 %873
  %875 = vadd.xlane.f32.xlu0 %v868
  %v876 = vpop.xlane.xlu0 %875
  %v877 = vmul.f32 %v870, %v860
  %v878 = vmul.f32 %v872, %v860
  %v879 = vmul.f32 %v874, %v860
  %v880 = vmul.f32 %v876, %v860
  %v881 = vmul.f32 %v861, %v861
  %v882 = vmul.f32 %v862, %v862
  %v883 = vmul.f32 %v863, %v863
  %v884 = vmul.f32 %v864, %v864
  %v885 = vsub.f32 %v877, %v881
  %v886 = vsub.f32 %v878, %v882
  %v887 = vsub.f32 %v879, %v883
  %v888 = vsub.f32 %v880, %v884
  %v889 = vmax.f32 %v885, 0.0
  %v890 = vmax.f32 %v886, 0.0
  %v891 = vmax.f32 %v887, 0.0
  %v892 = vmax.f32 %v888, 0.0
  %v893 = vsub.f32 %v829, %v861
  %v894 = vsub.f32 %v832, %v862
  %v895 = vsub.f32 %v837, %v863
  %v896 = vsub.f32 %v840, %v864
  %v897 = vadd.f32 %v889, 1e-05
  %v898 = vadd.f32 %v890, 1e-05
  %v899 = vadd.f32 %v891, 1e-05
  %v900 = vadd.f32 %v892, 1e-05
  %v901 = vrsqrt.pop %v897
  %v902 = vrsqrt.pop %v898
  %v903 = vrsqrt.pop %v899
  %v904 = vrsqrt.pop %v900
  %v905 = vmul.f32 %v893, %v901
  %v906 = vmul.f32 %v894, %v902
  %v907 = vmul.f32 %v895, %v903
  %v908 = vmul.f32 %v896, %v904
  %v909 = vsel %vm847, %v905, %v829
  %v910 = vsel %vm847, %v906, %v832
  %v911 = vsel %vm847, %v907, %v837
  %v912 = vsel %vm847, %v908, %v840
  %vm913 = vcmp.ge.s32.totalorder %v844, 8
  %vm914 = vcmp.lt.s32.totalorder %v844, 16
  %vm915 = vmand %vm913, %vm914
  %v916 = vsel %vm915, %v829, 0.0
  %v917 = vsel %vm915, %v832, 0.0
  %v918 = vsel %vm915, %v837, 0.0
  %v919 = vsel %vm915, %v840, 0.0
  %920 = vadd.xlane.f32.xlu0 %v916
  %v921 = vpop.xlane.xlu0 %920
  %922 = vadd.xlane.f32.xlu0 %v917
  %v923 = vpop.xlane.xlu0 %922
  %924 = vadd.xlane.f32.xlu0 %v918
  %v925 = vpop.xlane.xlu0 %924
  %926 = vadd.xlane.f32.xlu0 %v919
  %v927 = vpop.xlane.xlu0 %926
  %v928 = vmul.f32 %v921, %v860
  %v929 = vmul.f32 %v923, %v860
  %v930 = vmul.f32 %v925, %v860
  %v931 = vmul.f32 %v927, %v860
  %v932 = vmul.f32 %v916, %v916
  %v933 = vmul.f32 %v917, %v917
  %v934 = vmul.f32 %v918, %v918
  %v935 = vmul.f32 %v919, %v919
  %936 = vadd.xlane.f32.xlu0 %v932
  %v937 = vpop.xlane.xlu0 %936
  %938 = vadd.xlane.f32.xlu0 %v933
  %v939 = vpop.xlane.xlu0 %938
  %940 = vadd.xlane.f32.xlu0 %v934
  %v941 = vpop.xlane.xlu0 %940
  %942 = vadd.xlane.f32.xlu0 %v935
  %v943 = vpop.xlane.xlu0 %942
  %v944 = vmul.f32 %v937, %v860
  %v945 = vmul.f32 %v939, %v860
  %v946 = vmul.f32 %v941, %v860
  %v947 = vmul.f32 %v943, %v860
  %v948 = vmul.f32 %v928, %v928
  %v949 = vmul.f32 %v929, %v929
  %v950 = vmul.f32 %v930, %v930
  %v951 = vmul.f32 %v931, %v931
  %v952 = vsub.f32 %v944, %v948
  %v953 = vsub.f32 %v945, %v949
  %v954 = vsub.f32 %v946, %v950
  %v955 = vsub.f32 %v947, %v951
  %v956 = vmax.f32 %v952, 0.0
  %v957 = vmax.f32 %v953, 0.0
  %v958 = vmax.f32 %v954, 0.0
  %v959 = vmax.f32 %v955, 0.0
  %v960 = vsub.f32 %v829, %v928
  %v961 = vsub.f32 %v832, %v929
  %v962 = vsub.f32 %v837, %v930
  %v963 = vsub.f32 %v840, %v931
  %v964 = vadd.f32 %v956, 1e-05
  %v965 = vadd.f32 %v957, 1e-05
  %v966 = vadd.f32 %v958, 1e-05
  %v967 = vadd.f32 %v959, 1e-05
  %v968 = vrsqrt.pop %v964
  %v969 = vrsqrt.pop %v965
  %v970 = vrsqrt.pop %v966
  %v971 = vrsqrt.pop %v967
  %v972 = vmul.f32 %v960, %v968
  %v973 = vmul.f32 %v961, %v969
  %v974 = vmul.f32 %v962, %v970
  %v975 = vmul.f32 %v963, %v971
  %v976 = vsel %vm915, %v972, %v909
  %v977 = vsel %vm915, %v973, %v910
  %v978 = vsel %vm915, %v974, %v911
  %v979 = vsel %vm915, %v975, %v912
  %vm980 = vcmp.ge.f32.partialorder %v976, 0.0
  %vm981 = vcmp.ge.f32.partialorder %v977, 0.0
  %vm982 = vcmp.ge.f32.partialorder %v978, 0.0
  %vm983 = vcmp.ge.f32.partialorder %v979, 0.0
  %v984 = vmul.f32 %v976, 0.2
  %v985 = vmul.f32 %v977, 0.2
  %v986 = vmul.f32 %v978, 0.2
  %v987 = vmul.f32 %v979, 0.2
  %v988 = vsel %vm980, %v976, %v984
  %v989 = vsel %vm981, %v977, %v985
  %v990 = vsel %vm982, %v978, %v986
  %v991 = vsel %vm983, %v979, %v987
  %v992 = vpack.c.bf16 %v989, %v988
  %v993 = vpack.c.bf16 %v991, %v990
  %v996 = vunpack.c.l.b16 %v992
  %v997 = vunpack.c.h.b16 %v992
  %v998 = vunpack.c.l.b16 %v993
  %v999 = vunpack.c.h.b16 %v993
  %v1000 = vpack.c.b16 %v996, %v996
  %v1001 = vpack.c.b16 %v997, %v997
  %v1002 = vpack.c.b16 %v998, %v998
  %v1003 = vpack.c.b16 %v999, %v999
  %1008 = vst [vmem:[%s3] sm:$0xf] %v1000
  %1009 = vst [vmem:[%s3 + $0x4] sm:$0xf] %v1001
  %1010 = vst [vmem:[%s3 + $0x8] sm:$0xf] %v1002
  %1011 = vst [vmem:[%s3 + $0xc] sm:$0xf] %v1003
  // Predicated region
  $region14: #{discriminator_forward.8} parent=0 // pred_check
    _
  $region15: #{discriminator_forward.8} parent=0 // pred_check_branch
    %1013 = sbr.rel (0) target = $region17
  $region16: #{discriminator_forward.8} parent=0 // pred_region
    _
  $region17: #{discriminator_forward.8} parent=0 // pred_fallthru
    _
  // Predicated region
  $region18: #{discriminator_forward.8} parent=0 // pred_check
    _
  $region19: #{discriminator_forward.8} parent=0 // pred_check_branch
    %1015 = sbr.rel (0) target = $region21
  $region20: #{discriminator_forward.8} parent=0 // pred_region
    _
  $region21: #{discriminator_forward.8} parent=0 // pred_fallthru
    _

// kernel: discriminator_forward.9
$region0: #{discriminator_forward.9}
  #allocation0 [shape = 'u32[]', space=smem, size = 0x4, offset = 0x4, fixed_abs, tag = 'smem constant byte address 0x4 - core index']
  #allocation1 [shape = 'u32[144,128]{1,0:T(1,128)}', space=vmem, size = 0x12000, scoped, tag = 'internal scratch']
  #allocation2 [shape = 'f32[1,1]{1,0:T(1,128)S(1)}', space=vmem, size = 0x200, scoped, tag = 'scoped memory for discriminator_forward.9']
  %s0 = inlined_call_operand.vmem [shape: bf16[864,128], index: 0, kind: input, shape index: {}]
  %s1 = inlined_call_operand.vmem [shape: bf16[1,864], index: 1, kind: input, shape index: {}]
  %s2 = inlined_call_operand.<no memory space> [shape: f32[1,1], index: 2, kind: input, shape index: {}]
  %s3 = inlined_call_operand.vmem [shape: f32[1,128], index: 3, kind: output, shape index: {}]
  %s4 = sld [smem:[#allocation0]]
  $region22: #{discriminator_forward.9} parent=0
    _
  %s6 = ssub.s32 1, %s4
  %s7 = scalar_select 0, %s6, %s4
  %v8 = vstv %s2
  %9 = vst [vmem:[#allocation2] sm:$0x1] %v8
  // Predicated region
  $region2: #{discriminator_forward.9} parent=0 // pred_check
    _
  $region3: #{discriminator_forward.9} parent=0 // pred_check_branch
    %11 = sbr.rel (0) target = $region5
  $region4: #{discriminator_forward.9} parent=0 // pred_region
    _
  $region5: #{discriminator_forward.9} parent=0 // pred_fallthru
    _
  // Predicated region
  $region6: #{discriminator_forward.9} parent=0 // pred_check
    _
  $region7: #{discriminator_forward.9} parent=0 // pred_check_branch
    %13 = sbr.rel (0) target = $region9
  $region8: #{discriminator_forward.9} parent=0 // pred_region
    _
  $region9: #{discriminator_forward.9} parent=0 // pred_fallthru
    _
  // Predicated region
  $region10: #{discriminator_forward.9} parent=0 // pred_check
    _
  $region11: #{discriminator_forward.9} parent=0 // pred_check_branch
    %15 = sbr.rel (0) target = $region13
  $region12: #{discriminator_forward.9} parent=0 // pred_region
    _
  $region13: #{discriminator_forward.9} parent=0 // pred_fallthru
    _
  %v17 = vld [vmem:[%s1] sm:$0x7f]
  %v18 = vld [vmem:[%s0] sm:$0xf]
  %v19 = vld [vmem:[%s0 + $0x4] sm:$0xf]
  %v20 = vld [vmem:[%s0 + $0x8] sm:$0xf]
  %v21 = vld [vmem:[%s0 + $0xc] sm:$0xf]
  %v22 = vld [vmem:[%s0 + $0x10] sm:$0xf]
  %v23 = vld [vmem:[%s0 + $0x14] sm:$0xf]
  %v24 = vld [vmem:[%s0 + $0x18] sm:$0xf]
  %v25 = vld [vmem:[%s0 + $0x1c] sm:$0xf]
  %v26 = vld [vmem:[%s0 + $0x20] sm:$0xf]
  %v27 = vld [vmem:[%s0 + $0x24] sm:$0xf]
  %v28 = vld [vmem:[%s0 + $0x28] sm:$0xf]
  %v29 = vld [vmem:[%s0 + $0x2c] sm:$0xf]
  %v30 = vld [vmem:[%s0 + $0x30] sm:$0xf]
  %v31 = vld [vmem:[%s0 + $0x34] sm:$0xf]
  %v32 = vld [vmem:[%s0 + $0x38] sm:$0xf]
  %v33 = vld [vmem:[%s0 + $0x3c] sm:$0xf]
  %v34 = vld [vmem:[%s0 + $0x40] sm:$0xf]
  %v35 = vld [vmem:[%s0 + $0x44] sm:$0xf]
  %v36 = vld [vmem:[%s0 + $0x48] sm:$0xf]
  %v37 = vld [vmem:[%s0 + $0x4c] sm:$0xf]
  %v38 = vld [vmem:[%s0 + $0x50] sm:$0xf]
  %v39 = vld [vmem:[%s0 + $0x54] sm:$0xf]
  %v40 = vld [vmem:[%s0 + $0x58] sm:$0xf]
  %v41 = vld [vmem:[%s0 + $0x5c] sm:$0xf]
  %v42 = vld [vmem:[%s0 + $0x60] sm:$0xf]
  %v43 = vld [vmem:[%s0 + $0x64] sm:$0xf]
  %v44 = vld [vmem:[%s0 + $0x68] sm:$0xf]
  %v45 = vld [vmem:[%s0 + $0x6c] sm:$0xf]
  %v46 = vld [vmem:[%s0 + $0x70] sm:$0xf]
  %v47 = vld [vmem:[%s0 + $0x74] sm:$0xf]
  %v48 = vld [vmem:[%s0 + $0x78] sm:$0xf]
  %v49 = vld [vmem:[%s0 + $0x7c] sm:$0xf]
  %v50 = vld [vmem:[%s0 + $0x80] sm:$0xf]
  %v51 = vld [vmem:[%s0 + $0x84] sm:$0xf]
  %v52 = vld [vmem:[%s0 + $0x88] sm:$0xf]
  %v53 = vld [vmem:[%s0 + $0x8c] sm:$0xf]
  %v54 = vld [vmem:[%s0 + $0x90] sm:$0xf]
  %v55 = vld [vmem:[%s0 + $0x94] sm:$0xf]
  %v56 = vld [vmem:[%s0 + $0x98] sm:$0xf]
  %v57 = vld [vmem:[%s0 + $0x9c] sm:$0xf]
  %v58 = vld [vmem:[%s0 + $0xa0] sm:$0xf]
  %v59 = vld [vmem:[%s0 + $0xa4] sm:$0xf]
  %v60 = vld [vmem:[%s0 + $0xa8] sm:$0xf]
  %v61 = vld [vmem:[%s0 + $0xac] sm:$0xf]
  %v62 = vld [vmem:[%s0 + $0xb0] sm:$0xf]
  %v63 = vld [vmem:[%s0 + $0xb4] sm:$0xf]
  %v64 = vld [vmem:[%s0 + $0xb8] sm:$0xf]
  %v65 = vld [vmem:[%s0 + $0xbc] sm:$0xf]
  %v66 = vld [vmem:[%s0 + $0xc0] sm:$0xf]
  %v67 = vld [vmem:[%s0 + $0xc4] sm:$0xf]
  %v68 = vld [vmem:[%s0 + $0xc8] sm:$0xf]
  %v69 = vld [vmem:[%s0 + $0xcc] sm:$0xf]
  %v70 = vld [vmem:[%s0 + $0xd0] sm:$0xf]
  %v71 = vld [vmem:[%s0 + $0xd4] sm:$0xf]
  %v72 = vld [vmem:[%s0 + $0xd8] sm:$0xf]
  %v73 = vld [vmem:[%s0 + $0xdc] sm:$0xf]
  %v74 = vld [vmem:[%s0 + $0xe0] sm:$0xf]
  %v75 = vld [vmem:[%s0 + $0xe4] sm:$0xf]
  %v76 = vld [vmem:[%s0 + $0xe8] sm:$0xf]
  %v77 = vld [vmem:[%s0 + $0xec] sm:$0xf]
  %v78 = vld [vmem:[%s0 + $0xf0] sm:$0xf]
  %v79 = vld [vmem:[%s0 + $0xf4] sm:$0xf]
  %v80 = vld [vmem:[%s0 + $0xf8] sm:$0xf]
  %v81 = vld [vmem:[%s0 + $0xfc] sm:$0xf]
  %v82 = vld [vmem:[%s0 + $0x100] sm:$0xf]
  %v83 = vld [vmem:[%s0 + $0x104] sm:$0xf]
  %v84 = vld [vmem:[%s0 + $0x108] sm:$0xf]
  %v85 = vld [vmem:[%s0 + $0x10c] sm:$0xf]
  %v86 = vld [vmem:[%s0 + $0x110] sm:$0xf]
  %v87 = vld [vmem:[%s0 + $0x114] sm:$0xf]
  %v88 = vld [vmem:[%s0 + $0x118] sm:$0xf]
  %v89 = vld [vmem:[%s0 + $0x11c] sm:$0xf]
  %v90 = vld [vmem:[%s0 + $0x120] sm:$0xf]
  %v91 = vld [vmem:[%s0 + $0x124] sm:$0xf]
  %v92 = vld [vmem:[%s0 + $0x128] sm:$0xf]
  %v93 = vld [vmem:[%s0 + $0x12c] sm:$0xf]
  %v94 = vld [vmem:[%s0 + $0x130] sm:$0xf]
  %v95 = vld [vmem:[%s0 + $0x134] sm:$0xf]
  %v96 = vld [vmem:[%s0 + $0x138] sm:$0xf]
  %v97 = vld [vmem:[%s0 + $0x13c] sm:$0xf]
  %v98 = vld [vmem:[%s0 + $0x140] sm:$0xf]
  %v99 = vld [vmem:[%s0 + $0x144] sm:$0xf]
  %v100 = vld [vmem:[%s0 + $0x148] sm:$0xf]
  %v101 = vld [vmem:[%s0 + $0x14c] sm:$0xf]
  %v102 = vld [vmem:[%s0 + $0x150] sm:$0xf]
  %v103 = vld [vmem:[%s0 + $0x154] sm:$0xf]
  %v104 = vld [vmem:[%s0 + $0x158] sm:$0xf]
  %v105 = vld [vmem:[%s0 + $0x15c] sm:$0xf]
  %v106 = vld [vmem:[%s0 + $0x160] sm:$0xf]
  %v107 = vld [vmem:[%s0 + $0x164] sm:$0xf]
  %v108 = vld [vmem:[%s0 + $0x168] sm:$0xf]
  %v109 = vld [vmem:[%s0 + $0x16c] sm:$0xf]
  %v110 = vld [vmem:[%s0 + $0x170] sm:$0xf]
  %v111 = vld [vmem:[%s0 + $0x174] sm:$0xf]
  %v112 = vld [vmem:[%s0 + $0x178] sm:$0xf]
  %v113 = vld [vmem:[%s0 + $0x17c] sm:$0xf]
  %v114 = vld [vmem:[%s0 + $0x180] sm:$0xf]
  %v115 = vld [vmem:[%s0 + $0x184] sm:$0xf]
  %v116 = vld [vmem:[%s0 + $0x188] sm:$0xf]
  %v117 = vld [vmem:[%s0 + $0x18c] sm:$0xf]
  %v118 = vld [vmem:[%s0 + $0x190] sm:$0xf]
  %v119 = vld [vmem:[%s0 + $0x194] sm:$0xf]
  %v120 = vld [vmem:[%s0 + $0x198] sm:$0xf]
  %v121 = vld [vmem:[%s0 + $0x19c] sm:$0xf]
  %v122 = vld [vmem:[%s0 + $0x1a0] sm:$0xf]
  %v123 = vld [vmem:[%s0 + $0x1a4] sm:$0xf]
  %v124 = vld [vmem:[%s0 + $0x1a8] sm:$0xf]
  %v125 = vld [vmem:[%s0 + $0x1ac] sm:$0xf]
  %v126 = vld [vmem:[#allocation2] sm:$0x1]
  %128 = vset.pattern.permute.xlu0 0
  %129 = vperm.xlu0 %128, %v126
  %v130 = vpop.permute.xlu0 %129
  %v132 = vlaneseq
  %v133 = vshrl.u32 %v132, 7
  %v134 = vsub.s32 0, %v133
  %v135 = vrot.slane %v130, %v134
  %v137 = vcombine.high %v17, %v17
  %v139 = vunpack.c.l.s4 1966171168
  %v140 = vunpack.c.0.s8 %v139
  %v141 = vlaneseq
  %v142 = vshrl.u32 %v141, 7
  %v143 = vsub.s32 %v140, %v142
  %v144 = vrot.slane %v17, %v143
  %v146 = vunpack.c.l.s4 1966171168
  %v147 = vunpack.c.0.s8 %v146
  %v148 = vlaneseq
  %v149 = vshrl.u32 %v148, 7
  %v150 = vsub.s32 %v147, %v149
  %v151 = vrot.slane %v137, %v150
  %v152 = vcombine.high %v144, %v144
  %v153 = vcombine.high %v151, %v151
  %v155 = vunpack.c.l.s4 1966171168
  %v156 = vunpack.c.0.s8 %v155
  %v157 = vlaneseq
  %v158 = vshrl.u32 %v157, 7
  %v159 = vsub.s32 %v156, %v158
  %v160 = vrot.slane %v144, %v159
  %v162 = vunpack.c.l.s4 1966171168
  %v163 = vunpack.c.0.s8 %v162
  %v164 = vlaneseq
  %v165 = vshrl.u32 %v164, 7
  %v166 = vsub.s32 %v163, %v165
  %v167 = vrot.slane %v151, %v166
  %v169 = vunpack.c.l.s4 1966171168
  %v170 = vunpack.c.0.s8 %v169
  %v171 = vlaneseq
  %v172 = vshrl.u32 %v171, 7
  %v173 = vsub.s32 %v170, %v172
  %v174 = vrot.slane %v152, %v173
  %v176 = vunpack.c.l.s4 1966171168
  %v177 = vunpack.c.0.s8 %v176
  %v178 = vlaneseq
  %v179 = vshrl.u32 %v178, 7
  %v180 = vsub.s32 %v177, %v179
  %v181 = vrot.slane %v153, %v180
  %v182 = vcombine.high %v160, %v160
  %v183 = vcombine.high %v167, %v167
  %v184 = vcombine.high %v174, %v174
  %v299 = vunpack.c.l.b16 %v18
  %v300 = vunpack.c.l.b16 %v19
  %v301 = vunpack.c.l.b16 %v20
  %v302 = vunpack.c.l.b16 %v21
  %v303 = vunpack.c.l.b16 %v22
  %v304 = vunpack.c.l.b16 %v23
  %v305 = vunpack.c.l.b16 %v24
  %v306 = vunpack.c.l.b16 %v25
  %v307 = vunpack.c.l.b16 %v26
  %v308 = vunpack.c.l.b16 %v27
  %v309 = vunpack.c.l.b16 %v28
  %v310 = vunpack.c.l.b16 %v29
  %v311 = vunpack.c.l.b16 %v30
  %v312 = vunpack.c.l.b16 %v31
  %v313 = vunpack.c.l.b16 %v32
  %v314 = vunpack.c.l.b16 %v33
  %v315 = vunpack.c.l.b16 %v34
  %v316 = vunpack.c.l.b16 %v35
  %v317 = vunpack.c.l.b16 %v36
  %v318 = vunpack.c.l.b16 %v37
  %v319 = vunpack.c.l.b16 %v38
  %v320 = vunpack.c.l.b16 %v39
  %v321 = vunpack.c.l.b16 %v40
  %v322 = vunpack.c.l.b16 %v41
  %v323 = vunpack.c.l.b16 %v42
  %v324 = vunpack.c.l.b16 %v43
  %v325 = vunpack.c.l.b16 %v44
  %v326 = vunpack.c.l.b16 %v45
  %v327 = vunpack.c.l.b16 %v46
  %v328 = vunpack.c.l.b16 %v47
  %v329 = vunpack.c.l.b16 %v48
  %v330 = vunpack.c.l.b16 %v49
  %v331 = vunpack.c.l.b16 %v50
  %v332 = vunpack.c.l.b16 %v51
  %v333 = vunpack.c.l.b16 %v52
  %v334 = vunpack.c.l.b16 %v53
  %v335 = vunpack.c.l.b16 %v54
  %v336 = vunpack.c.l.b16 %v55
  %v337 = vunpack.c.l.b16 %v56
  %v338 = vunpack.c.l.b16 %v57
  %v339 = vunpack.c.l.b16 %v58
  %v340 = vunpack.c.l.b16 %v59
  %v341 = vunpack.c.l.b16 %v60
  %v342 = vunpack.c.l.b16 %v61
  %v343 = vunpack.c.l.b16 %v62
  %v344 = vunpack.c.l.b16 %v63
  %v345 = vunpack.c.l.b16 %v64
  %v346 = vunpack.c.l.b16 %v65
  %v347 = vunpack.c.l.b16 %v66
  %v348 = vunpack.c.l.b16 %v67
  %v349 = vunpack.c.l.b16 %v68
  %v350 = vunpack.c.l.b16 %v69
  %v351 = vunpack.c.l.b16 %v70
  %v352 = vunpack.c.l.b16 %v71
  %v353 = vunpack.c.l.b16 %v72
  %v354 = vunpack.c.l.b16 %v73
  %v355 = vunpack.c.l.b16 %v74
  %v356 = vunpack.c.l.b16 %v75
  %v357 = vunpack.c.l.b16 %v76
  %v358 = vunpack.c.l.b16 %v77
  %v359 = vunpack.c.l.b16 %v78
  %v360 = vunpack.c.l.b16 %v79
  %v361 = vunpack.c.l.b16 %v80
  %v362 = vunpack.c.l.b16 %v81
  %v363 = vunpack.c.l.b16 %v82
  %v364 = vunpack.c.l.b16 %v83
  %v365 = vunpack.c.l.b16 %v84
  %v366 = vunpack.c.l.b16 %v85
  %v367 = vunpack.c.l.b16 %v86
  %v368 = vunpack.c.l.b16 %v87
  %v369 = vunpack.c.l.b16 %v88
  %v370 = vunpack.c.l.b16 %v89
  %v371 = vunpack.c.l.b16 %v90
  %v372 = vunpack.c.l.b16 %v91
  %v373 = vunpack.c.l.b16 %v92
  %v374 = vunpack.c.l.b16 %v93
  %v375 = vunpack.c.l.b16 %v94
  %v376 = vunpack.c.l.b16 %v95
  %v377 = vunpack.c.l.b16 %v96
  %v378 = vunpack.c.l.b16 %v97
  %v379 = vunpack.c.l.b16 %v98
  %v380 = vunpack.c.l.b16 %v99
  %v381 = vunpack.c.l.b16 %v100
  %v382 = vunpack.c.l.b16 %v101
  %v383 = vunpack.c.l.b16 %v102
  %v384 = vunpack.c.l.b16 %v103
  %v385 = vunpack.c.l.b16 %v104
  %v386 = vunpack.c.l.b16 %v105
  %v387 = vunpack.c.l.b16 %v106
  %v388 = vunpack.c.l.b16 %v107
  %v389 = vunpack.c.l.b16 %v108
  %v390 = vunpack.c.l.b16 %v109
  %v391 = vunpack.c.l.b16 %v110
  %v392 = vunpack.c.l.b16 %v111
  %v393 = vunpack.c.l.b16 %v112
  %v394 = vunpack.c.l.b16 %v113
  %v395 = vunpack.c.l.b16 %v114
  %v396 = vunpack.c.l.b16 %v115
  %v397 = vunpack.c.l.b16 %v116
  %v398 = vunpack.c.l.b16 %v117
  %v399 = vunpack.c.l.b16 %v118
  %v400 = vunpack.c.l.b16 %v119
  %v401 = vunpack.c.l.b16 %v120
  %v402 = vunpack.c.l.b16 %v121
  %v403 = vunpack.c.l.b16 %v122
  %v404 = vunpack.c.l.b16 %v123
  %v405 = vunpack.c.l.b16 %v124
  %v406 = vunpack.c.l.b16 %v125
  %v407 = vpack.c.b16 %v300, %v299
  %v408 = vpack.c.b16 %v302, %v301
  %v409 = vpack.c.b16 %v304, %v303
  %v410 = vpack.c.b16 %v306, %v305
  %v411 = vpack.c.b16 %v308, %v307
  %v412 = vpack.c.b16 %v310, %v309
  %v413 = vpack.c.b16 %v312, %v311
  %v414 = vpack.c.b16 %v314, %v313
  %v415 = vpack.c.b16 %v316, %v315
  %v416 = vpack.c.b16 %v318, %v317
  %v417 = vpack.c.b16 %v320, %v319
  %v418 = vpack.c.b16 %v322, %v321
  %v419 = vpack.c.b16 %v324, %v323
  %v420 = vpack.c.b16 %v326, %v325
  %v421 = vpack.c.b16 %v328, %v327
  %v422 = vpack.c.b16 %v330, %v329
  %v423 = vpack.c.b16 %v332, %v331
  %v424 = vpack.c.b16 %v334, %v333
  %v425 = vpack.c.b16 %v336, %v335
  %v426 = vpack.c.b16 %v338, %v337
  %v427 = vpack.c.b16 %v340, %v339
  %v428 = vpack.c.b16 %v342, %v341
  %v429 = vpack.c.b16 %v344, %v343
  %v430 = vpack.c.b16 %v346, %v345
  %v431 = vpack.c.b16 %v348, %v347
  %v432 = vpack.c.b16 %v350, %v349
  %v433 = vpack.c.b16 %v352, %v351
  %v434 = vpack.c.b16 %v354, %v353
  %v435 = vpack.c.b16 %v356, %v355
  %v436 = vpack.c.b16 %v358, %v357
  %v437 = vpack.c.b16 %v360, %v359
  %v438 = vpack.c.b16 %v362, %v361
  %v439 = vpack.c.b16 %v364, %v363
  %v440 = vpack.c.b16 %v366, %v365
  %v441 = vpack.c.b16 %v368, %v367
  %v442 = vpack.c.b16 %v370, %v369
  %v443 = vpack.c.b16 %v372, %v371
  %v444 = vpack.c.b16 %v374, %v373
  %v445 = vpack.c.b16 %v376, %v375
  %v446 = vpack.c.b16 %v378, %v377
  %v447 = vpack.c.b16 %v380, %v379
  %v448 = vpack.c.b16 %v382, %v381
  %v449 = vpack.c.b16 %v384, %v383
  %v450 = vpack.c.b16 %v386, %v385
  %v451 = vpack.c.b16 %v388, %v387
  %v452 = vpack.c.b16 %v390, %v389
  %v453 = vpack.c.b16 %v392, %v391
  %v454 = vpack.c.b16 %v394, %v393
  %v455 = vpack.c.b16 %v396, %v395
  %v456 = vpack.c.b16 %v398, %v397
  %v457 = vpack.c.b16 %v400, %v399
  %v458 = vpack.c.b16 %v402, %v401
  %v459 = vpack.c.b16 %v404, %v403
  %v460 = vpack.c.b16 %v406, %v405
  %vm515 = vcmask 785408
  %v517 = vsel %vm515, %v183, 0
  %519 = vmatprep.subr.bf16.mxu0 0
  %520 = vmatpush1.bf16.msra.mxu0 %v414
  %521 = vmatprep.subr.bf16.mxu0 0
  %522 = vmatpush1.bf16.msra.mxu0 %v413
  %523 = vmatprep.subr.bf16.mxu0 0
  %524 = vmatpush1.bf16.msra.mxu0 %v412
  %525 = vmatprep.subr.bf16.mxu0 0
  %526 = vmatpush1.bf16.msra.mxu0 %v411
  %527 = vmatprep.subr.bf16.mxu0 0
  %528 = vmatpush1.bf16.msra.mxu0 %v410
  %529 = vmatprep.subr.bf16.mxu0 0
  %530 = vmatpush1.bf16.msra.mxu0 %v409
  %531 = vmatprep.subr.bf16.mxu0 0
  %532 = vmatpush1.bf16.msra.mxu0 %v408
  %533 = vmatprep.subr.bf16.mxu0 0
  %534 = vmatpush1.bf16.msra.mxu0 %v407
  %535 = vmatprep.subr.bf16.mxu0 0
  %536 = vmatpush2.bf16.msra.mxu0 %v422
  %537 = vmatprep.subr.bf16.mxu0 0
  %538 = vmatpush2.bf16.msra.mxu0 %v421
  %539 = vmatprep.subr.bf16.mxu0 0
  %540 = vmatpush2.bf16.msra.mxu0 %v420
  %541 = vmatprep.subr.bf16.mxu0 0
  %542 = vmatpush2.bf16.msra.mxu0 %v419
  %543 = vmatprep.subr.bf16.mxu0 0
  %544 = vmatpush2.bf16.msra.mxu0 %v418
  %545 = vmatprep.subr.bf16.mxu0 0
  %546 = vmatpush2.bf16.msra.mxu0 %v417
  %547 = vmatprep.subr.bf16.mxu0 0
  %548 = vmatpush2.bf16.msra.mxu0 %v416
  %549 = vmatprep.subr.bf16.mxu0 0
  %550 = vmatpush2.bf16.msra.mxu0 %v415
  %551 = vmatprep.mubr.bf16.mxu0 %v174
  %552 = vmatmul.mubr.bf16.gmra.mxu0 %v160
  %v553 = vpop.f32.mrf.mxu0
  %v554 = vadd.f32 %v135, %v553
  %v555 = vpop.f32.mrf.mxu0
  %v556 = vpop.f32.mrf.mxu0
  %v557 = vpop.f32.mrf.mxu0
  %558 = vdwg.mxu0
  %559 = vmatprep.subr.bf16.mxu0 0
  %560 = vmatpush1.bf16.msra.mxu0 %v430
  %561 = vmatprep.subr.bf16.mxu0 0
  %562 = vmatpush1.bf16.msra.mxu0 %v429
  %563 = vmatprep.subr.bf16.mxu0 0
  %564 = vmatpush1.bf16.msra.mxu0 %v428
  %565 = vmatprep.subr.bf16.mxu0 0
  %566 = vmatpush1.bf16.msra.mxu0 %v427
  %567 = vmatprep.subr.bf16.mxu0 0
  %568 = vmatpush1.bf16.msra.mxu0 %v426
  %569 = vmatprep.subr.bf16.mxu0 0
  %570 = vmatpush1.bf16.msra.mxu0 %v425
  %571 = vmatprep.subr.bf16.mxu0 0
  %572 = vmatpush1.bf16.msra.mxu0 %v424
  %573 = vmatprep.subr.bf16.mxu0 0
  %574 = vmatpush1.bf16.msra.mxu0 %v423
  %575 = vmatprep.subr.bf16.mxu0 0
  %576 = vmatpush2.bf16.msra.mxu0 %v438
  %577 = vmatprep.subr.bf16.mxu0 0
  %578 = vmatpush2.bf16.msra.mxu0 %v437
  %579 = vmatprep.subr.bf16.mxu0 0
  %580 = vmatpush2.bf16.msra.mxu0 %v436
  %581 = vmatprep.subr.bf16.mxu0 0
  %582 = vmatpush2.bf16.msra.mxu0 %v435
  %583 = vmatprep.subr.bf16.mxu0 0
  %584 = vmatpush2.bf16.msra.mxu0 %v434
  %585 = vmatprep.subr.bf16.mxu0 0
  %586 = vmatpush2.bf16.msra.mxu0 %v433
  %587 = vmatprep.subr.bf16.mxu0 0
  %588 = vmatpush2.bf16.msra.mxu0 %v432
  %589 = vmatprep.subr.bf16.mxu0 0
  %590 = vmatpush2.bf16.msra.mxu0 %v431
  %591 = vmatprep.mubr.bf16.mxu0 %v184
  %592 = vmatmul.mubr.bf16.gmra.mxu0 %v182
  %v593 = vpop.f32.mrf.mxu0
  %v594 = vadd.f32 %v554, %v593
  %v595 = vpop.f32.mrf.mxu0
  %v596 = vpop.f32.mrf.mxu0
  %v597 = vpop.f32.mrf.mxu0
  %598 = vdwg.mxu0
  %599 = vmatprep.subr.bf16.mxu0 0
  %600 = vmatpush1.bf16.msra.mxu0 %v446
  %601 = vmatprep.subr.bf16.mxu0 0
  %602 = vmatpush1.bf16.msra.mxu0 %v445
  %603 = vmatprep.subr.bf16.mxu0 0
  %604 = vmatpush1.bf16.msra.mxu0 %v444
  %605 = vmatprep.subr.bf16.mxu0 0
  %606 = vmatpush1.bf16.msra.mxu0 %v443
  %607 = vmatprep.subr.bf16.mxu0 0
  %608 = vmatpush1.bf16.msra.mxu0 %v442
  %609 = vmatprep.subr.bf16.mxu0 0
  %610 = vmatpush1.bf16.msra.mxu0 %v441
  %611 = vmatprep.subr.bf16.mxu0 0
  %612 = vmatpush1.bf16.msra.mxu0 %v440
  %613 = vmatprep.subr.bf16.mxu0 0
  %614 = vmatpush1.bf16.msra.mxu0 %v439
  %615 = vmatprep.subr.bf16.mxu0 0
  %616 = vmatpush2.bf16.msra.mxu0 %v454
  %617 = vmatprep.subr.bf16.mxu0 0
  %618 = vmatpush2.bf16.msra.mxu0 %v453
  %619 = vmatprep.subr.bf16.mxu0 0
  %620 = vmatpush2.bf16.msra.mxu0 %v452
  %621 = vmatprep.subr.bf16.mxu0 0
  %622 = vmatpush2.bf16.msra.mxu0 %v451
  %623 = vmatprep.subr.bf16.mxu0 0
  %624 = vmatpush2.bf16.msra.mxu0 %v450
  %625 = vmatprep.subr.bf16.mxu0 0
  %626 = vmatpush2.bf16.msra.mxu0 %v449
  %627 = vmatprep.subr.bf16.mxu0 0
  %628 = vmatpush2.bf16.msra.mxu0 %v448
  %629 = vmatprep.subr.bf16.mxu0 0
  %630 = vmatpush2.bf16.msra.mxu0 %v447
  %631 = vmatprep.mubr.bf16.mxu0 %v181
  %632 = vmatmul.mubr.bf16.gmra.mxu0 %v167
  %v633 = vpop.f32.mrf.mxu0
  %v634 = vadd.f32 %v594, %v633
  %v635 = vpop.f32.mrf.mxu0
  %v636 = vpop.f32.mrf.mxu0
  %v637 = vpop.f32.mrf.mxu0
  %638 = vdwg.mxu0
  %639 = vmatprep.subr.bf16.mxu0 0
  %640 = vmatpush1.bf16.msra.mxu0 0
  %641 = vmatprep.subr.bf16.mxu0 0
  %642 = vmatpush1.bf16.msra.mxu0 0
  %643 = vmatprep.subr.bf16.mxu0 0
  %644 = vmatpush1.bf16.msra.mxu0 %v460
  %645 = vmatprep.subr.bf16.mxu0 0
  %646 = vmatpush1.bf16.msra.mxu0 %v459
  %647 = vmatprep.subr.bf16.mxu0 0
  %648 = vmatpush1.bf16.msra.mxu0 %v458
  %649 = vmatprep.subr.bf16.mxu0 0
  %650 = vmatpush1.bf16.msra.mxu0 %v457
  %651 = vmatprep.subr.bf16.mxu0 0
  %652 = vmatpush1.bf16.msra.mxu0 %v456
  %653 = vmatprep.subr.bf16.mxu0 0
  %654 = vmatpush1.bf16.msra.mxu0 %v455
  %655 = vmatprep.subr.bf16.mxu0 0
  %656 = vmatpush2.bf16.msra.mxu0 0
  %657 = vmatprep.subr.bf16.mxu0 0
  %658 = vmatpush2.bf16.msra.mxu0 0
  %659 = vmatprep.subr.bf16.mxu0 0
  %660 = vmatpush2.bf16.msra.mxu0 0
  %661 = vmatprep.subr.bf16.mxu0 0
  %662 = vmatpush2.bf16.msra.mxu0 0
  %663 = vmatprep.subr.bf16.mxu0 0
  %664 = vmatpush2.bf16.msra.mxu0 0
  %665 = vmatprep.subr.bf16.mxu0 0
  %666 = vmatpush2.bf16.msra.mxu0 0
  %667 = vmatprep.subr.bf16.mxu0 0
  %668 = vmatpush2.bf16.msra.mxu0 0
  %669 = vmatprep.subr.bf16.mxu0 0
  %670 = vmatpush2.bf16.msra.mxu0 0
  %671 = vmatprep.mubr.bf16.mxu0 0
  %672 = vmatmul.mubr.bf16.gmra.mxu0 %v517
  %v673 = vpop.f32.mrf.mxu0
  %v674 = vadd.f32 %v634, %v673
  %v675 = vpop.f32.mrf.mxu0
  %v676 = vpop.f32.mrf.mxu0
  %v677 = vpop.f32.mrf.mxu0
  %678 = vdwg.mxu0
  %679 = vst [vmem:[%s3] sm:$0x1] %v674
  // Predicated region
  $region14: #{discriminator_forward.9} parent=0 // pred_check
    _
  $region15: #{discriminator_forward.9} parent=0 // pred_check_branch
    %681 = sbr.rel (0) target = $region17
  $region16: #{discriminator_forward.9} parent=0 // pred_region
    _
  $region17: #{discriminator_forward.9} parent=0 // pred_fallthru
    _
  // Predicated region
  $region18: #{discriminator_forward.9} parent=0 // pred_check
    _
  $region19: #{discriminator_forward.9} parent=0 // pred_check_branch
    %683 = sbr.rel (0) target = $region21
  $region20: #{discriminator_forward.9} parent=0 // pred_region
    _
  $region21: #{discriminator_forward.9} parent=0 // pred_fallthru
    _

</llo_original>
